<compile_context>
chip_gen: v7x
topology: tpu7x:2x2x1
jax: 0.10.0
libtpu: 0.0.40
codegen_flags: <defaults>
</compile_context>

<pallas_src>
import jax
import jax.numpy as jnp
import numpy as np
from jax import lax
from jax.experimental import pallas as pl
from jax.experimental.pallas import tpu as pltpu

# ---- small synthetic sizes consistent with the module's forward -------------
T = 8        # sequence length
B = 4        # batch size
D = 32       # opt.fgd_dim  (LSTM input size)
H = 32       # opt.lstm_hidden_dim
TAG = 16     # opt.num_train (tagset_size)
EPS = 1e-5   # BatchNorm1d eps (PyTorch default)
NEG_SLOPE = 0.2
OUT_W = 128  # lane-dense output slab width: [test (D+H) | train (TAG) | pad]


def _bn_train(x, gamma, beta):
    # BatchNorm1d, training mode: per-feature batch stats, biased variance.
    mu = jnp.mean(x, axis=0, keepdims=True)
    var = jnp.mean((x - mu) ** 2, axis=0, keepdims=True)
    return (x - mu) * lax.rsqrt(var + EPS) * gamma + beta


def _leaky(x):
    return jnp.where(x >= 0, x, NEG_SLOPE * x)


def _forward_kernel(hgs_ref, hgd_ref, wih_ref, whh_ref, bias_ref,
                    bn1_ref, lin_w_ref, misc_ref, out_ref):
    T_, B_, D_ = hgs_ref.shape
    H_ = whh_ref.shape[1]
    TAG_ = lin_w_ref.shape[1]
    n_layers = wih_ref.shape[0]

    # ---- 3-layer LSTM, processed layer-by-layer over time, fully unrolled ----
    x_steps = [hgs_ref[t] for t in range(T_)]           # list of (B, in) f32
    for l in range(n_layers):
        w_ih = wih_ref[l]                                # (in, 4H)
        w_hh = whh_ref[l]                                # (H, 4H)
        b = bias_ref[l]                                  # (1, 4H)

        # Hoisted input projection: one batched matmul for all T steps.
        x_all = jnp.concatenate(x_steps, axis=0)         # (T*B, in)
        gx_all = jnp.dot(x_all, w_ih,
                         preferred_element_type=jnp.float32) + b  # (T*B, 4H)

        h = jnp.zeros((B_, H_), jnp.float32)
        c = jnp.zeros((B_, H_), jnp.float32)
        outs = []
        for t in range(T_):                              # serial recurrence
            gx = gx_all[t * B_:(t + 1) * B_]             # (B, 4H) static slice
            gates = gx + jnp.dot(h, w_hh,
                                 preferred_element_type=jnp.float32)
            # two full-tile transcendentals instead of four sliced ones
            sig = jax.nn.sigmoid(gates)
            tg = jnp.tanh(gates)
            i = sig[:, 0 * H_:1 * H_]
            f = sig[:, 1 * H_:2 * H_]
            o = sig[:, 3 * H_:4 * H_]
            g = tg[:, 2 * H_:3 * H_]
            c = f * c + i * g
            h = o * jnp.tanh(c)
            outs.append(h)
        x_steps = outs                                   # feed next layer

    # mean over time: top-layer LSTM outputs and the raw hgd stream
    acc = x_steps[0]
    for y in x_steps[1:]:
        acc = acc + y
    pool2 = acc * (1.0 / T_)                             # (B, H)
    pool1 = jnp.mean(hgd_ref[...], axis=0)               # (B, D)
    pool = jnp.concatenate([pool1, pool2], axis=1)       # (B, D+H)

    # fc1: BatchNorm1d(batch stats) + LeakyReLU(0.2)
    test = _leaky(_bn_train(pool, bn1_ref[0:1, :], bn1_ref[1:2, :]))

    # main: Linear + BatchNorm1d(batch stats)
    z = (jnp.dot(test, lin_w_ref[...], preferred_element_type=jnp.float32)
         + misc_ref[0:1, :])                             # lin_b
    train = _bn_train(z, misc_ref[1:2, :], misc_ref[2:3, :])

    # single lane-dense output slab: [test | train | zero-pad]
    pieces = [test, train]
    pad_w = out_ref.shape[1] - (D_ + H_ + TAG_)
    if pad_w > 0:
        pieces.append(jnp.zeros((B_, pad_w), jnp.float32))
    out_ref[...] = jnp.concatenate(pieces, axis=1)


def lstm_forward(hgs, hgd, params):
    """hgs, hgd: (T, B, D) float32.  Returns (train, test, test)."""
    T_, B_, D_ = hgs.shape
    H_ = params["weight_hh_l0"].shape[1]
    TAG_ = params["lin_w"].shape[0]
    assert D_ == H_, "stacking layer-0 W_ih with layers 1-2 assumes fgd_dim == lstm_hidden_dim"
    assert D_ + H_ + TAG_ <= OUT_W

    # ---- pack the 20 tiny operands into 8 lane-dense arrays ------------------
    wih_all = jnp.stack([params[f"weight_ih_l{l}"].T for l in range(3)])      # (3, in, 4H)
    whh_all = jnp.stack([params[f"weight_hh_l{l}"].T for l in range(3)])      # (3, H, 4H)
    bias_all = jnp.stack([
        (params[f"bias_ih_l{l}"] + params[f"bias_hh_l{l}"]).reshape(1, -1)
        for l in range(3)])                                                   # (3, 1, 4H)
    bn1 = jnp.stack([params["bn1_g"], params["bn1_b"]])                       # (2, D+H)
    lin_w = params["lin_w"].T                                                 # (D+H, TAG)
    misc = jnp.stack([params["lin_b"], params["bn2_g"], params["bn2_b"]])     # (3, TAG)

    vmem = pltpu.MemorySpace.VMEM
    out = pl.pallas_call(
        _forward_kernel,
        out_shape=jax.ShapeDtypeStruct((B_, OUT_W), jnp.float32),
        in_specs=[pl.BlockSpec(memory_space=vmem)] * 8,
        out_specs=pl.BlockSpec(memory_space=vmem),
    )(hgs, hgd, wih_all, whh_all, bias_all, bn1, lin_w, misc)

    test = out[:, :D_ + H_]
    train = out[:, D_ + H_:D_ + H_ + TAG_]
    return train, test, test


def init_params(key):
    ks = jax.random.split(key, 20)
    k = iter(ks)
    scale = 1.0 / np.sqrt(H)
    p = {}
    for l in range(3):
        in_dim = D if l == 0 else H
        p[f"weight_ih_l{l}"] = scale * jax.random.normal(next(k), (4 * H, in_dim), jnp.float32)
        p[f"weight_hh_l{l}"] = scale * jax.random.normal(next(k), (4 * H, H), jnp.float32)
        p[f"bias_ih_l{l}"] = scale * jax.random.normal(next(k), (4 * H,), jnp.float32)
        p[f"bias_hh_l{l}"] = scale * jax.random.normal(next(k), (4 * H,), jnp.float32)
    p["bn1_g"] = 1.0 + 0.1 * jax.random.normal(next(k), (D + H,), jnp.float32)
    p["bn1_b"] = 0.1 * jax.random.normal(next(k), (D + H,), jnp.float32)
    p["lin_w"] = (1.0 / np.sqrt(D + H)) * jax.random.normal(next(k), (TAG, D + H), jnp.float32)
    p["lin_b"] = 0.1 * jax.random.normal(next(k), (TAG,), jnp.float32)
    p["bn2_g"] = 1.0 + 0.1 * jax.random.normal(next(k), (TAG,), jnp.float32)
    p["bn2_b"] = 0.1 * jax.random.normal(next(k), (TAG,), jnp.float32)
    return p


def ref_forward(hgs, hgd, p):
    """Pure-JAX reference mirroring the PyTorch module (training mode)."""
    x = hgs
    T_, B_, _ = hgs.shape
    for l in range(3):
        wih = p[f"weight_ih_l{l}"]
        whh = p[f"weight_hh_l{l}"]
        b = p[f"bias_ih_l{l}"] + p[f"bias_hh_l{l}"]
        h = jnp.zeros((B_, H), jnp.float32)
        c = jnp.zeros((B_, H), jnp.float32)
        outs = []
        for t in range(T_):
            gates = x[t] @ wih.T + h @ whh.T + b
            i = jax.nn.sigmoid(gates[:, :H])
            f = jax.nn.sigmoid(gates[:, H:2 * H])
            g = jnp.tanh(gates[:, 2 * H:3 * H])
            o = jax.nn.sigmoid(gates[:, 3 * H:])
            c = f * c + i * g
            h = o * jnp.tanh(c)
            outs.append(h)
        x = jnp.stack(outs)
    pool1 = jnp.mean(hgd, axis=0)
    pool2 = jnp.mean(x, axis=0)
    pool = jnp.concatenate([pool1, pool2], axis=1)
    test = _leaky(_bn_train(pool, p["bn1_g"][None, :], p["bn1_b"][None, :]))
    z = test @ p["lin_w"].T + p["lin_b"][None, :]
    train = _bn_train(z, p["bn2_g"][None, :], p["bn2_b"][None, :])
    return train, test, test


if __name__ == "__main__":
    key = jax.random.PRNGKey(0)
    kp, kx, kd = jax.random.split(key, 3)
    params = init_params(kp)

    # `batch` in the module is a length-T list of (hgs_t, hgd_t) tuples; the
    # torch.stack over the list is represented here as already-stacked arrays.
    hgs = jax.random.normal(kx, (T, B, D), jnp.float32)
    hgd = jax.random.normal(kd, (T, B, D), jnp.float32)

    train, test, _ = lstm_forward(hgs, hgd, params)
    jax.block_until_ready((train, test))

    r_train, r_test, _ = ref_forward(hgs, hgd, params)
    np.testing.assert_allclose(np.asarray(train), np.asarray(r_train), rtol=5e-2, atol=5e-2)
    np.testing.assert_allclose(np.asarray(test), np.asarray(r_test), rtol=5e-2, atol=5e-2)

    print("KERNEL_OK")
</pallas_src>

<mosaic_0001>
module attributes {stable_mosaic.version = 11 : i64} {
  func.func @_forward_kernel(%arg0: memref<8x4x32xf32, #tpu.memory_space<vmem>>, %arg1: memref<8x4x32xf32, #tpu.memory_space<vmem>>, %arg2: memref<3x32x128xf32, #tpu.memory_space<vmem>>, %arg3: memref<3x32x128xf32, #tpu.memory_space<vmem>>, %arg4: memref<3x1x128xf32, #tpu.memory_space<vmem>>, %arg5: memref<2x64xf32, #tpu.memory_space<vmem>>, %arg6: memref<64x16xf32, #tpu.memory_space<vmem>>, %arg7: memref<3x16xf32, #tpu.memory_space<vmem>>, %arg8: memref<4x128xf32, #tpu.memory_space<vmem>>) attributes {dimension_semantics = [], scalar_prefetch = 0 : i64, scratch_operands = 0 : i64, tpu.core_type = #tpu.core_type<tc>} {
    %c0 = arith.constant 0 : index
    %c0_0 = arith.constant 0 : index
    %c0_1 = arith.constant 0 : index
    %0 = vector.load %arg0[%c0, %c0_0, %c0_1] : memref<8x4x32xf32, #tpu.memory_space<vmem>>, vector<1x4x32xf32>
    %1 = vector.shape_cast %0 : vector<1x4x32xf32> to vector<4x32xf32>
    %c1 = arith.constant 1 : index
    %c0_2 = arith.constant 0 : index
    %c0_3 = arith.constant 0 : index
    %2 = vector.load %arg0[%c1, %c0_2, %c0_3] : memref<8x4x32xf32, #tpu.memory_space<vmem>>, vector<1x4x32xf32>
    %3 = vector.shape_cast %2 : vector<1x4x32xf32> to vector<4x32xf32>
    %c2 = arith.constant 2 : index
    %c0_4 = arith.constant 0 : index
    %c0_5 = arith.constant 0 : index
    %4 = vector.load %arg0[%c2, %c0_4, %c0_5] : memref<8x4x32xf32, #tpu.memory_space<vmem>>, vector<1x4x32xf32>
    %5 = vector.shape_cast %4 : vector<1x4x32xf32> to vector<4x32xf32>
    %c3 = arith.constant 3 : index
    %c0_6 = arith.constant 0 : index
    %c0_7 = arith.constant 0 : index
    %6 = vector.load %arg0[%c3, %c0_6, %c0_7] : memref<8x4x32xf32, #tpu.memory_space<vmem>>, vector<1x4x32xf32>
    %7 = vector.shape_cast %6 : vector<1x4x32xf32> to vector<4x32xf32>
    %c4 = arith.constant 4 : index
    %c0_8 = arith.constant 0 : index
    %c0_9 = arith.constant 0 : index
    %8 = vector.load %arg0[%c4, %c0_8, %c0_9] : memref<8x4x32xf32, #tpu.memory_space<vmem>>, vector<1x4x32xf32>
    %9 = vector.shape_cast %8 : vector<1x4x32xf32> to vector<4x32xf32>
    %c5 = arith.constant 5 : index
    %c0_10 = arith.constant 0 : index
    %c0_11 = arith.constant 0 : index
    %10 = vector.load %arg0[%c5, %c0_10, %c0_11] : memref<8x4x32xf32, #tpu.memory_space<vmem>>, vector<1x4x32xf32>
    %11 = vector.shape_cast %10 : vector<1x4x32xf32> to vector<4x32xf32>
    %c6 = arith.constant 6 : index
    %c0_12 = arith.constant 0 : index
    %c0_13 = arith.constant 0 : index
    %12 = vector.load %arg0[%c6, %c0_12, %c0_13] : memref<8x4x32xf32, #tpu.memory_space<vmem>>, vector<1x4x32xf32>
    %13 = vector.shape_cast %12 : vector<1x4x32xf32> to vector<4x32xf32>
    %c7 = arith.constant 7 : index
    %c0_14 = arith.constant 0 : index
    %c0_15 = arith.constant 0 : index
    %14 = vector.load %arg0[%c7, %c0_14, %c0_15] : memref<8x4x32xf32, #tpu.memory_space<vmem>>, vector<1x4x32xf32>
    %15 = vector.shape_cast %14 : vector<1x4x32xf32> to vector<4x32xf32>
    %c0_16 = arith.constant 0 : index
    %c0_17 = arith.constant 0 : index
    %c0_18 = arith.constant 0 : index
    %16 = vector.load %arg2[%c0_16, %c0_17, %c0_18] : memref<3x32x128xf32, #tpu.memory_space<vmem>>, vector<1x32x128xf32>
    %17 = vector.shape_cast %16 : vector<1x32x128xf32> to vector<32x128xf32>
    %c0_19 = arith.constant 0 : index
    %c0_20 = arith.constant 0 : index
    %c0_21 = arith.constant 0 : index
    %18 = vector.load %arg3[%c0_19, %c0_20, %c0_21] : memref<3x32x128xf32, #tpu.memory_space<vmem>>, vector<1x32x128xf32>
    %19 = vector.shape_cast %18 : vector<1x32x128xf32> to vector<32x128xf32>
    %c0_22 = arith.constant 0 : index
    %c0_23 = arith.constant 0 : index
    %c0_24 = arith.constant 0 : index
    %20 = vector.load %arg4[%c0_22, %c0_23, %c0_24] : memref<3x1x128xf32, #tpu.memory_space<vmem>>, vector<1x1x128xf32>
    %21 = vector.shape_cast %20 : vector<1x1x128xf32> to vector<1x128xf32>
    %22 = tpu.concatenate %1, %3, %5, %7, %9, %11, %13, %15 in 0 : vector<4x32xf32>, vector<4x32xf32>, vector<4x32xf32>, vector<4x32xf32>, vector<4x32xf32>, vector<4x32xf32>, vector<4x32xf32>, vector<4x32xf32> -> vector<32x32xf32>
    %cst = arith.constant dense<0.000000e+00> : vector<32x128xf32>
    %23 = tpu.matmul %22, %17, %cst {dimension_numbers = #tpu.dot_dimension_numbers<[1], [0], [0], [1], [0, 0, 1, 1], [], []>} : vector<32x32xf32>, vector<32x128xf32>, vector<32x128xf32> -> vector<32x128xf32>
    %24 = vector.broadcast %21 : vector<1x128xf32> to vector<32x128xf32>
    %25 = arith.addf %23, %24 : vector<32x128xf32>
    %cst_25 = arith.constant 0.000000e+00 : f32
    %26 = vector.broadcast %cst_25 : f32 to vector<4x32xf32>
    %cst_26 = arith.constant 0.000000e+00 : f32
    %27 = vector.broadcast %cst_26 : f32 to vector<4x32xf32>
    %28 = vector.extract_strided_slice %25 {offsets = [0, 0], sizes = [4, 128], strides = [1, 1]} : vector<32x128xf32> to vector<4x128xf32>
    %cst_27 = arith.constant dense<0.000000e+00> : vector<4x128xf32>
    %29 = tpu.matmul %26, %19, %cst_27 {dimension_numbers = #tpu.dot_dimension_numbers<[1], [0], [0], [1], [0, 0, 1, 1], [], []>} : vector<4x32xf32>, vector<32x128xf32>, vector<4x128xf32> -> vector<4x128xf32>
    %30 = arith.addf %28, %29 : vector<4x128xf32>
    %31 = arith.negf %30 : vector<4x128xf32>
    %32 = math.exp %31 : vector<4x128xf32>
    %cst_28 = arith.constant 1.000000e+00 : f32
    %33 = vector.broadcast %cst_28 : f32 to vector<4x128xf32>
    %34 = arith.addf %33, %32 : vector<4x128xf32>
    %35 = arith.divf %33, %34 : vector<4x128xf32>
    %36 = math.tanh %30 : vector<4x128xf32>
    %37 = vector.extract_strided_slice %35 {offsets = [0, 0], sizes = [4, 32], strides = [1, 1]} : vector<4x128xf32> to vector<4x32xf32>
    %38 = vector.extract_strided_slice %35 {offsets = [0, 32], sizes = [4, 32], strides = [1, 1]} : vector<4x128xf32> to vector<4x32xf32>
    %39 = vector.extract_strided_slice %35 {offsets = [0, 96], sizes = [4, 32], strides = [1, 1]} : vector<4x128xf32> to vector<4x32xf32>
    %40 = vector.extract_strided_slice %36 {offsets = [0, 64], sizes = [4, 32], strides = [1, 1]} : vector<4x128xf32> to vector<4x32xf32>
    %41 = arith.mulf %38, %27 : vector<4x32xf32>
    %42 = arith.mulf %37, %40 : vector<4x32xf32>
    %43 = arith.addf %41, %42 : vector<4x32xf32>
    %44 = math.tanh %43 : vector<4x32xf32>
    %45 = arith.mulf %39, %44 : vector<4x32xf32>
    %46 = vector.extract_strided_slice %25 {offsets = [4, 0], sizes = [4, 128], strides = [1, 1]} : vector<32x128xf32> to vector<4x128xf32>
    %cst_29 = arith.constant dense<0.000000e+00> : vector<4x128xf32>
    %47 = tpu.matmul %45, %19, %cst_29 {dimension_numbers = #tpu.dot_dimension_numbers<[1], [0], [0], [1], [0, 0, 1, 1], [], []>} : vector<4x32xf32>, vector<32x128xf32>, vector<4x128xf32> -> vector<4x128xf32>
    %48 = arith.addf %46, %47 : vector<4x128xf32>
    %49 = arith.negf %48 : vector<4x128xf32>
    %50 = math.exp %49 : vector<4x128xf32>
    %cst_30 = arith.constant 1.000000e+00 : f32
    %51 = vector.broadcast %cst_30 : f32 to vector<4x128xf32>
    %52 = arith.addf %51, %50 : vector<4x128xf32>
    %53 = arith.divf %51, %52 : vector<4x128xf32>
    %54 = math.tanh %48 : vector<4x128xf32>
    %55 = vector.extract_strided_slice %53 {offsets = [0, 0], sizes = [4, 32], strides = [1, 1]} : vector<4x128xf32> to vector<4x32xf32>
    %56 = vector.extract_strided_slice %53 {offsets = [0, 32], sizes = [4, 32], strides = [1, 1]} : vector<4x128xf32> to vector<4x32xf32>
    %57 = vector.extract_strided_slice %53 {offsets = [0, 96], sizes = [4, 32], strides = [1, 1]} : vector<4x128xf32> to vector<4x32xf32>
    %58 = vector.extract_strided_slice %54 {offsets = [0, 64], sizes = [4, 32], strides = [1, 1]} : vector<4x128xf32> to vector<4x32xf32>
    %59 = arith.mulf %56, %43 : vector<4x32xf32>
    %60 = arith.mulf %55, %58 : vector<4x32xf32>
    %61 = arith.addf %59, %60 : vector<4x32xf32>
    %62 = math.tanh %61 : vector<4x32xf32>
    %63 = arith.mulf %57, %62 : vector<4x32xf32>
    %64 = vector.extract_strided_slice %25 {offsets = [8, 0], sizes = [4, 128], strides = [1, 1]} : vector<32x128xf32> to vector<4x128xf32>
    %cst_31 = arith.constant dense<0.000000e+00> : vector<4x128xf32>
    %65 = tpu.matmul %63, %19, %cst_31 {dimension_numbers = #tpu.dot_dimension_numbers<[1], [0], [0], [1], [0, 0, 1, 1], [], []>} : vector<4x32xf32>, vector<32x128xf32>, vector<4x128xf32> -> vector<4x128xf32>
    %66 = arith.addf %64, %65 : vector<4x128xf32>
    %67 = arith.negf %66 : vector<4x128xf32>
    %68 = math.exp %67 : vector<4x128xf32>
    %cst_32 = arith.constant 1.000000e+00 : f32
    %69 = vector.broadcast %cst_32 : f32 to vector<4x128xf32>
    %70 = arith.addf %69, %68 : vector<4x128xf32>
    %71 = arith.divf %69, %70 : vector<4x128xf32>
    %72 = math.tanh %66 : vector<4x128xf32>
    %73 = vector.extract_strided_slice %71 {offsets = [0, 0], sizes = [4, 32], strides = [1, 1]} : vector<4x128xf32> to vector<4x32xf32>
    %74 = vector.extract_strided_slice %71 {offsets = [0, 32], sizes = [4, 32], strides = [1, 1]} : vector<4x128xf32> to vector<4x32xf32>
    %75 = vector.extract_strided_slice %71 {offsets = [0, 96], sizes = [4, 32], strides = [1, 1]} : vector<4x128xf32> to vector<4x32xf32>
    %76 = vector.extract_strided_slice %72 {offsets = [0, 64], sizes = [4, 32], strides = [1, 1]} : vector<4x128xf32> to vector<4x32xf32>
    %77 = arith.mulf %74, %61 : vector<4x32xf32>
    %78 = arith.mulf %73, %76 : vector<4x32xf32>
    %79 = arith.addf %77, %78 : vector<4x32xf32>
    %80 = math.tanh %79 : vector<4x32xf32>
    %81 = arith.mulf %75, %80 : vector<4x32xf32>
    %82 = vector.extract_strided_slice %25 {offsets = [12, 0], sizes = [4, 128], strides = [1, 1]} : vector<32x128xf32> to vector<4x128xf32>
    %cst_33 = arith.constant dense<0.000000e+00> : vector<4x128xf32>
    %83 = tpu.matmul %81, %19, %cst_33 {dimension_numbers = #tpu.dot_dimension_numbers<[1], [0], [0], [1], [0, 0, 1, 1], [], []>} : vector<4x32xf32>, vector<32x128xf32>, vector<4x128xf32> -> vector<4x128xf32>
    %84 = arith.addf %82, %83 : vector<4x128xf32>
    %85 = arith.negf %84 : vector<4x128xf32>
    %86 = math.exp %85 : vector<4x128xf32>
    %cst_34 = arith.constant 1.000000e+00 : f32
    %87 = vector.broadcast %cst_34 : f32 to vector<4x128xf32>
    %88 = arith.addf %87, %86 : vector<4x128xf32>
    %89 = arith.divf %87, %88 : vector<4x128xf32>
    %90 = math.tanh %84 : vector<4x128xf32>
    %91 = vector.extract_strided_slice %89 {offsets = [0, 0], sizes = [4, 32], strides = [1, 1]} : vector<4x128xf32> to vector<4x32xf32>
    %92 = vector.extract_strided_slice %89 {offsets = [0, 32], sizes = [4, 32], strides = [1, 1]} : vector<4x128xf32> to vector<4x32xf32>
    %93 = vector.extract_strided_slice %89 {offsets = [0, 96], sizes = [4, 32], strides = [1, 1]} : vector<4x128xf32> to vector<4x32xf32>
    %94 = vector.extract_strided_slice %90 {offsets = [0, 64], sizes = [4, 32], strides = [1, 1]} : vector<4x128xf32> to vector<4x32xf32>
    %95 = arith.mulf %92, %79 : vector<4x32xf32>
    %96 = arith.mulf %91, %94 : vector<4x32xf32>
    %97 = arith.addf %95, %96 : vector<4x32xf32>
    %98 = math.tanh %97 : vector<4x32xf32>
    %99 = arith.mulf %93, %98 : vector<4x32xf32>
    %100 = vector.extract_strided_slice %25 {offsets = [16, 0], sizes = [4, 128], strides = [1, 1]} : vector<32x128xf32> to vector<4x128xf32>
    %cst_35 = arith.constant dense<0.000000e+00> : vector<4x128xf32>
    %101 = tpu.matmul %99, %19, %cst_35 {dimension_numbers = #tpu.dot_dimension_numbers<[1], [0], [0], [1], [0, 0, 1, 1], [], []>} : vector<4x32xf32>, vector<32x128xf32>, vector<4x128xf32> -> vector<4x128xf32>
    %102 = arith.addf %100, %101 : vector<4x128xf32>
    %103 = arith.negf %102 : vector<4x128xf32>
    %104 = math.exp %103 : vector<4x128xf32>
    %cst_36 = arith.constant 1.000000e+00 : f32
    %105 = vector.broadcast %cst_36 : f32 to vector<4x128xf32>
    %106 = arith.addf %105, %104 : vector<4x128xf32>
    %107 = arith.divf %105, %106 : vector<4x128xf32>
    %108 = math.tanh %102 : vector<4x128xf32>
    %109 = vector.extract_strided_slice %107 {offsets = [0, 0], sizes = [4, 32], strides = [1, 1]} : vector<4x128xf32> to vector<4x32xf32>
    %110 = vector.extract_strided_slice %107 {offsets = [0, 32], sizes = [4, 32], strides = [1, 1]} : vector<4x128xf32> to vector<4x32xf32>
    %111 = vector.extract_strided_slice %107 {offsets = [0, 96], sizes = [4, 32], strides = [1, 1]} : vector<4x128xf32> to vector<4x32xf32>
    %112 = vector.extract_strided_slice %108 {offsets = [0, 64], sizes = [4, 32], strides = [1, 1]} : vector<4x128xf32> to vector<4x32xf32>
    %113 = arith.mulf %110, %97 : vector<4x32xf32>
    %114 = arith.mulf %109, %112 : vector<4x32xf32>
    %115 = arith.addf %113, %114 : vector<4x32xf32>
    %116 = math.tanh %115 : vector<4x32xf32>
    %117 = arith.mulf %111, %116 : vector<4x32xf32>
    %118 = vector.extract_strided_slice %25 {offsets = [20, 0], sizes = [4, 128], strides = [1, 1]} : vector<32x128xf32> to vector<4x128xf32>
    %cst_37 = arith.constant dense<0.000000e+00> : vector<4x128xf32>
    %119 = tpu.matmul %117, %19, %cst_37 {dimension_numbers = #tpu.dot_dimension_numbers<[1], [0], [0], [1], [0, 0, 1, 1], [], []>} : vector<4x32xf32>, vector<32x128xf32>, vector<4x128xf32> -> vector<4x128xf32>
    %120 = arith.addf %118, %119 : vector<4x128xf32>
    %121 = arith.negf %120 : vector<4x128xf32>
    %122 = math.exp %121 : vector<4x128xf32>
    %cst_38 = arith.constant 1.000000e+00 : f32
    %123 = vector.broadcast %cst_38 : f32 to vector<4x128xf32>
    %124 = arith.addf %123, %122 : vector<4x128xf32>
    %125 = arith.divf %123, %124 : vector<4x128xf32>
    %126 = math.tanh %120 : vector<4x128xf32>
    %127 = vector.extract_strided_slice %125 {offsets = [0, 0], sizes = [4, 32], strides = [1, 1]} : vector<4x128xf32> to vector<4x32xf32>
    %128 = vector.extract_strided_slice %125 {offsets = [0, 32], sizes = [4, 32], strides = [1, 1]} : vector<4x128xf32> to vector<4x32xf32>
    %129 = vector.extract_strided_slice %125 {offsets = [0, 96], sizes = [4, 32], strides = [1, 1]} : vector<4x128xf32> to vector<4x32xf32>
    %130 = vector.extract_strided_slice %126 {offsets = [0, 64], sizes = [4, 32], strides = [1, 1]} : vector<4x128xf32> to vector<4x32xf32>
    %131 = arith.mulf %128, %115 : vector<4x32xf32>
    %132 = arith.mulf %127, %130 : vector<4x32xf32>
    %133 = arith.addf %131, %132 : vector<4x32xf32>
    %134 = math.tanh %133 : vector<4x32xf32>
    %135 = arith.mulf %129, %134 : vector<4x32xf32>
    %136 = vector.extract_strided_slice %25 {offsets = [24, 0], sizes = [4, 128], strides = [1, 1]} : vector<32x128xf32> to vector<4x128xf32>
    %cst_39 = arith.constant dense<0.000000e+00> : vector<4x128xf32>
    %137 = tpu.matmul %135, %19, %cst_39 {dimension_numbers = #tpu.dot_dimension_numbers<[1], [0], [0], [1], [0, 0, 1, 1], [], []>} : vector<4x32xf32>, vector<32x128xf32>, vector<4x128xf32> -> vector<4x128xf32>
    %138 = arith.addf %136, %137 : vector<4x128xf32>
    %139 = arith.negf %138 : vector<4x128xf32>
    %140 = math.exp %139 : vector<4x128xf32>
    %cst_40 = arith.constant 1.000000e+00 : f32
    %141 = vector.broadcast %cst_40 : f32 to vector<4x128xf32>
    %142 = arith.addf %141, %140 : vector<4x128xf32>
    %143 = arith.divf %141, %142 : vector<4x128xf32>
    %144 = math.tanh %138 : vector<4x128xf32>
    %145 = vector.extract_strided_slice %143 {offsets = [0, 0], sizes = [4, 32], strides = [1, 1]} : vector<4x128xf32> to vector<4x32xf32>
    %146 = vector.extract_strided_slice %143 {offsets = [0, 32], sizes = [4, 32], strides = [1, 1]} : vector<4x128xf32> to vector<4x32xf32>
    %147 = vector.extract_strided_slice %143 {offsets = [0, 96], sizes = [4, 32], strides = [1, 1]} : vector<4x128xf32> to vector<4x32xf32>
    %148 = vector.extract_strided_slice %144 {offsets = [0, 64], sizes = [4, 32], strides = [1, 1]} : vector<4x128xf32> to vector<4x32xf32>
    %149 = arith.mulf %146, %133 : vector<4x32xf32>
    %150 = arith.mulf %145, %148 : vector<4x32xf32>
    %151 = arith.addf %149, %150 : vector<4x32xf32>
    %152 = math.tanh %151 : vector<4x32xf32>
    %153 = arith.mulf %147, %152 : vector<4x32xf32>
    %154 = vector.extract_strided_slice %25 {offsets = [28, 0], sizes = [4, 128], strides = [1, 1]} : vector<32x128xf32> to vector<4x128xf32>
    %cst_41 = arith.constant dense<0.000000e+00> : vector<4x128xf32>
    %155 = tpu.matmul %153, %19, %cst_41 {dimension_numbers = #tpu.dot_dimension_numbers<[1], [0], [0], [1], [0, 0, 1, 1], [], []>} : vector<4x32xf32>, vector<32x128xf32>, vector<4x128xf32> -> vector<4x128xf32>
    %156 = arith.addf %154, %155 : vector<4x128xf32>
    %157 = arith.negf %156 : vector<4x128xf32>
    %158 = math.exp %157 : vector<4x128xf32>
    %cst_42 = arith.constant 1.000000e+00 : f32
    %159 = vector.broadcast %cst_42 : f32 to vector<4x128xf32>
    %160 = arith.addf %159, %158 : vector<4x128xf32>
    %161 = arith.divf %159, %160 : vector<4x128xf32>
    %162 = math.tanh %156 : vector<4x128xf32>
    %163 = vector.extract_strided_slice %161 {offsets = [0, 0], sizes = [4, 32], strides = [1, 1]} : vector<4x128xf32> to vector<4x32xf32>
    %164 = vector.extract_strided_slice %161 {offsets = [0, 32], sizes = [4, 32], strides = [1, 1]} : vector<4x128xf32> to vector<4x32xf32>
    %165 = vector.extract_strided_slice %161 {offsets = [0, 96], sizes = [4, 32], strides = [1, 1]} : vector<4x128xf32> to vector<4x32xf32>
    %166 = vector.extract_strided_slice %162 {offsets = [0, 64], sizes = [4, 32], strides = [1, 1]} : vector<4x128xf32> to vector<4x32xf32>
    %167 = arith.mulf %164, %151 : vector<4x32xf32>
    %168 = arith.mulf %163, %166 : vector<4x32xf32>
    %169 = arith.addf %167, %168 : vector<4x32xf32>
    %170 = math.tanh %169 : vector<4x32xf32>
    %171 = arith.mulf %165, %170 : vector<4x32xf32>
    %c1_43 = arith.constant 1 : index
    %c0_44 = arith.constant 0 : index
    %c0_45 = arith.constant 0 : index
    %172 = vector.load %arg2[%c1_43, %c0_44, %c0_45] : memref<3x32x128xf32, #tpu.memory_space<vmem>>, vector<1x32x128xf32>
    %173 = vector.shape_cast %172 : vector<1x32x128xf32> to vector<32x128xf32>
    %c1_46 = arith.constant 1 : index
    %c0_47 = arith.constant 0 : index
    %c0_48 = arith.constant 0 : index
    %174 = vector.load %arg3[%c1_46, %c0_47, %c0_48] : memref<3x32x128xf32, #tpu.memory_space<vmem>>, vector<1x32x128xf32>
    %175 = vector.shape_cast %174 : vector<1x32x128xf32> to vector<32x128xf32>
    %c1_49 = arith.constant 1 : index
    %c0_50 = arith.constant 0 : index
    %c0_51 = arith.constant 0 : index
    %176 = vector.load %arg4[%c1_49, %c0_50, %c0_51] : memref<3x1x128xf32, #tpu.memory_space<vmem>>, vector<1x1x128xf32>
    %177 = vector.shape_cast %176 : vector<1x1x128xf32> to vector<1x128xf32>
    %178 = tpu.concatenate %45, %63, %81, %99, %117, %135, %153, %171 in 0 : vector<4x32xf32>, vector<4x32xf32>, vector<4x32xf32>, vector<4x32xf32>, vector<4x32xf32>, vector<4x32xf32>, vector<4x32xf32>, vector<4x32xf32> -> vector<32x32xf32>
    %cst_52 = arith.constant dense<0.000000e+00> : vector<32x128xf32>
    %179 = tpu.matmul %178, %173, %cst_52 {dimension_numbers = #tpu.dot_dimension_numbers<[1], [0], [0], [1], [0, 0, 1, 1], [], []>} : vector<32x32xf32>, vector<32x128xf32>, vector<32x128xf32> -> vector<32x128xf32>
    %180 = vector.broadcast %177 : vector<1x128xf32> to vector<32x128xf32>
    %181 = arith.addf %179, %180 : vector<32x128xf32>
    %cst_53 = arith.constant 0.000000e+00 : f32
    %182 = vector.broadcast %cst_53 : f32 to vector<4x32xf32>
    %cst_54 = arith.constant 0.000000e+00 : f32
    %183 = vector.broadcast %cst_54 : f32 to vector<4x32xf32>
    %184 = vector.extract_strided_slice %181 {offsets = [0, 0], sizes = [4, 128], strides = [1, 1]} : vector<32x128xf32> to vector<4x128xf32>
    %cst_55 = arith.constant dense<0.000000e+00> : vector<4x128xf32>
    %185 = tpu.matmul %182, %175, %cst_55 {dimension_numbers = #tpu.dot_dimension_numbers<[1], [0], [0], [1], [0, 0, 1, 1], [], []>} : vector<4x32xf32>, vector<32x128xf32>, vector<4x128xf32> -> vector<4x128xf32>
    %186 = arith.addf %184, %185 : vector<4x128xf32>
    %187 = arith.negf %186 : vector<4x128xf32>
    %188 = math.exp %187 : vector<4x128xf32>
    %cst_56 = arith.constant 1.000000e+00 : f32
    %189 = vector.broadcast %cst_56 : f32 to vector<4x128xf32>
    %190 = arith.addf %189, %188 : vector<4x128xf32>
    %191 = arith.divf %189, %190 : vector<4x128xf32>
    %192 = math.tanh %186 : vector<4x128xf32>
    %193 = vector.extract_strided_slice %191 {offsets = [0, 0], sizes = [4, 32], strides = [1, 1]} : vector<4x128xf32> to vector<4x32xf32>
    %194 = vector.extract_strided_slice %191 {offsets = [0, 32], sizes = [4, 32], strides = [1, 1]} : vector<4x128xf32> to vector<4x32xf32>
    %195 = vector.extract_strided_slice %191 {offsets = [0, 96], sizes = [4, 32], strides = [1, 1]} : vector<4x128xf32> to vector<4x32xf32>
    %196 = vector.extract_strided_slice %192 {offsets = [0, 64], sizes = [4, 32], strides = [1, 1]} : vector<4x128xf32> to vector<4x32xf32>
    %197 = arith.mulf %194, %183 : vector<4x32xf32>
    %198 = arith.mulf %193, %196 : vector<4x32xf32>
    %199 = arith.addf %197, %198 : vector<4x32xf32>
    %200 = math.tanh %199 : vector<4x32xf32>
    %201 = arith.mulf %195, %200 : vector<4x32xf32>
    %202 = vector.extract_strided_slice %181 {offsets = [4, 0], sizes = [4, 128], strides = [1, 1]} : vector<32x128xf32> to vector<4x128xf32>
    %cst_57 = arith.constant dense<0.000000e+00> : vector<4x128xf32>
    %203 = tpu.matmul %201, %175, %cst_57 {dimension_numbers = #tpu.dot_dimension_numbers<[1], [0], [0], [1], [0, 0, 1, 1], [], []>} : vector<4x32xf32>, vector<32x128xf32>, vector<4x128xf32> -> vector<4x128xf32>
    %204 = arith.addf %202, %203 : vector<4x128xf32>
    %205 = arith.negf %204 : vector<4x128xf32>
    %206 = math.exp %205 : vector<4x128xf32>
    %cst_58 = arith.constant 1.000000e+00 : f32
    %207 = vector.broadcast %cst_58 : f32 to vector<4x128xf32>
    %208 = arith.addf %207, %206 : vector<4x128xf32>
    %209 = arith.divf %207, %208 : vector<4x128xf32>
    %210 = math.tanh %204 : vector<4x128xf32>
    %211 = vector.extract_strided_slice %209 {offsets = [0, 0], sizes = [4, 32], strides = [1, 1]} : vector<4x128xf32> to vector<4x32xf32>
    %212 = vector.extract_strided_slice %209 {offsets = [0, 32], sizes = [4, 32], strides = [1, 1]} : vector<4x128xf32> to vector<4x32xf32>
    %213 = vector.extract_strided_slice %209 {offsets = [0, 96], sizes = [4, 32], strides = [1, 1]} : vector<4x128xf32> to vector<4x32xf32>
    %214 = vector.extract_strided_slice %210 {offsets = [0, 64], sizes = [4, 32], strides = [1, 1]} : vector<4x128xf32> to vector<4x32xf32>
    %215 = arith.mulf %212, %199 : vector<4x32xf32>
    %216 = arith.mulf %211, %214 : vector<4x32xf32>
    %217 = arith.addf %215, %216 : vector<4x32xf32>
    %218 = math.tanh %217 : vector<4x32xf32>
    %219 = arith.mulf %213, %218 : vector<4x32xf32>
    %220 = vector.extract_strided_slice %181 {offsets = [8, 0], sizes = [4, 128], strides = [1, 1]} : vector<32x128xf32> to vector<4x128xf32>
    %cst_59 = arith.constant dense<0.000000e+00> : vector<4x128xf32>
    %221 = tpu.matmul %219, %175, %cst_59 {dimension_numbers = #tpu.dot_dimension_numbers<[1], [0], [0], [1], [0, 0, 1, 1], [], []>} : vector<4x32xf32>, vector<32x128xf32>, vector<4x128xf32> -> vector<4x128xf32>
    %222 = arith.addf %220, %221 : vector<4x128xf32>
    %223 = arith.negf %222 : vector<4x128xf32>
    %224 = math.exp %223 : vector<4x128xf32>
    %cst_60 = arith.constant 1.000000e+00 : f32
    %225 = vector.broadcast %cst_60 : f32 to vector<4x128xf32>
    %226 = arith.addf %225, %224 : vector<4x128xf32>
    %227 = arith.divf %225, %226 : vector<4x128xf32>
    %228 = math.tanh %222 : vector<4x128xf32>
    %229 = vector.extract_strided_slice %227 {offsets = [0, 0], sizes = [4, 32], strides = [1, 1]} : vector<4x128xf32> to vector<4x32xf32>
    %230 = vector.extract_strided_slice %227 {offsets = [0, 32], sizes = [4, 32], strides = [1, 1]} : vector<4x128xf32> to vector<4x32xf32>
    %231 = vector.extract_strided_slice %227 {offsets = [0, 96], sizes = [4, 32], strides = [1, 1]} : vector<4x128xf32> to vector<4x32xf32>
    %232 = vector.extract_strided_slice %228 {offsets = [0, 64], sizes = [4, 32], strides = [1, 1]} : vector<4x128xf32> to vector<4x32xf32>
    %233 = arith.mulf %230, %217 : vector<4x32xf32>
    %234 = arith.mulf %229, %232 : vector<4x32xf32>
    %235 = arith.addf %233, %234 : vector<4x32xf32>
    %236 = math.tanh %235 : vector<4x32xf32>
    %237 = arith.mulf %231, %236 : vector<4x32xf32>
    %238 = vector.extract_strided_slice %181 {offsets = [12, 0], sizes = [4, 128], strides = [1, 1]} : vector<32x128xf32> to vector<4x128xf32>
    %cst_61 = arith.constant dense<0.000000e+00> : vector<4x128xf32>
    %239 = tpu.matmul %237, %175, %cst_61 {dimension_numbers = #tpu.dot_dimension_numbers<[1], [0], [0], [1], [0, 0, 1, 1], [], []>} : vector<4x32xf32>, vector<32x128xf32>, vector<4x128xf32> -> vector<4x128xf32>
    %240 = arith.addf %238, %239 : vector<4x128xf32>
    %241 = arith.negf %240 : vector<4x128xf32>
    %242 = math.exp %241 : vector<4x128xf32>
    %cst_62 = arith.constant 1.000000e+00 : f32
    %243 = vector.broadcast %cst_62 : f32 to vector<4x128xf32>
    %244 = arith.addf %243, %242 : vector<4x128xf32>
    %245 = arith.divf %243, %244 : vector<4x128xf32>
    %246 = math.tanh %240 : vector<4x128xf32>
    %247 = vector.extract_strided_slice %245 {offsets = [0, 0], sizes = [4, 32], strides = [1, 1]} : vector<4x128xf32> to vector<4x32xf32>
    %248 = vector.extract_strided_slice %245 {offsets = [0, 32], sizes = [4, 32], strides = [1, 1]} : vector<4x128xf32> to vector<4x32xf32>
    %249 = vector.extract_strided_slice %245 {offsets = [0, 96], sizes = [4, 32], strides = [1, 1]} : vector<4x128xf32> to vector<4x32xf32>
    %250 = vector.extract_strided_slice %246 {offsets = [0, 64], sizes = [4, 32], strides = [1, 1]} : vector<4x128xf32> to vector<4x32xf32>
    %251 = arith.mulf %248, %235 : vector<4x32xf32>
    %252 = arith.mulf %247, %250 : vector<4x32xf32>
    %253 = arith.addf %251, %252 : vector<4x32xf32>
    %254 = math.tanh %253 : vector<4x32xf32>
    %255 = arith.mulf %249, %254 : vector<4x32xf32>
    %256 = vector.extract_strided_slice %181 {offsets = [16, 0], sizes = [4, 128], strides = [1, 1]} : vector<32x128xf32> to vector<4x128xf32>
    %cst_63 = arith.constant dense<0.000000e+00> : vector<4x128xf32>
    %257 = tpu.matmul %255, %175, %cst_63 {dimension_numbers = #tpu.dot_dimension_numbers<[1], [0], [0], [1], [0, 0, 1, 1], [], []>} : vector<4x32xf32>, vector<32x128xf32>, vector<4x128xf32> -> vector<4x128xf32>
    %258 = arith.addf %256, %257 : vector<4x128xf32>
    %259 = arith.negf %258 : vector<4x128xf32>
    %260 = math.exp %259 : vector<4x128xf32>
    %cst_64 = arith.constant 1.000000e+00 : f32
    %261 = vector.broadcast %cst_64 : f32 to vector<4x128xf32>
    %262 = arith.addf %261, %260 : vector<4x128xf32>
    %263 = arith.divf %261, %262 : vector<4x128xf32>
    %264 = math.tanh %258 : vector<4x128xf32>
    %265 = vector.extract_strided_slice %263 {offsets = [0, 0], sizes = [4, 32], strides = [1, 1]} : vector<4x128xf32> to vector<4x32xf32>
    %266 = vector.extract_strided_slice %263 {offsets = [0, 32], sizes = [4, 32], strides = [1, 1]} : vector<4x128xf32> to vector<4x32xf32>
    %267 = vector.extract_strided_slice %263 {offsets = [0, 96], sizes = [4, 32], strides = [1, 1]} : vector<4x128xf32> to vector<4x32xf32>
    %268 = vector.extract_strided_slice %264 {offsets = [0, 64], sizes = [4, 32], strides = [1, 1]} : vector<4x128xf32> to vector<4x32xf32>
    %269 = arith.mulf %266, %253 : vector<4x32xf32>
    %270 = arith.mulf %265, %268 : vector<4x32xf32>
    %271 = arith.addf %269, %270 : vector<4x32xf32>
    %272 = math.tanh %271 : vector<4x32xf32>
    %273 = arith.mulf %267, %272 : vector<4x32xf32>
    %274 = vector.extract_strided_slice %181 {offsets = [20, 0], sizes = [4, 128], strides = [1, 1]} : vector<32x128xf32> to vector<4x128xf32>
    %cst_65 = arith.constant dense<0.000000e+00> : vector<4x128xf32>
    %275 = tpu.matmul %273, %175, %cst_65 {dimension_numbers = #tpu.dot_dimension_numbers<[1], [0], [0], [1], [0, 0, 1, 1], [], []>} : vector<4x32xf32>, vector<32x128xf32>, vector<4x128xf32> -> vector<4x128xf32>
    %276 = arith.addf %274, %275 : vector<4x128xf32>
    %277 = arith.negf %276 : vector<4x128xf32>
    %278 = math.exp %277 : vector<4x128xf32>
    %cst_66 = arith.constant 1.000000e+00 : f32
    %279 = vector.broadcast %cst_66 : f32 to vector<4x128xf32>
    %280 = arith.addf %279, %278 : vector<4x128xf32>
    %281 = arith.divf %279, %280 : vector<4x128xf32>
    %282 = math.tanh %276 : vector<4x128xf32>
    %283 = vector.extract_strided_slice %281 {offsets = [0, 0], sizes = [4, 32], strides = [1, 1]} : vector<4x128xf32> to vector<4x32xf32>
    %284 = vector.extract_strided_slice %281 {offsets = [0, 32], sizes = [4, 32], strides = [1, 1]} : vector<4x128xf32> to vector<4x32xf32>
    %285 = vector.extract_strided_slice %281 {offsets = [0, 96], sizes = [4, 32], strides = [1, 1]} : vector<4x128xf32> to vector<4x32xf32>
    %286 = vector.extract_strided_slice %282 {offsets = [0, 64], sizes = [4, 32], strides = [1, 1]} : vector<4x128xf32> to vector<4x32xf32>
    %287 = arith.mulf %284, %271 : vector<4x32xf32>
    %288 = arith.mulf %283, %286 : vector<4x32xf32>
    %289 = arith.addf %287, %288 : vector<4x32xf32>
    %290 = math.tanh %289 : vector<4x32xf32>
    %291 = arith.mulf %285, %290 : vector<4x32xf32>
    %292 = vector.extract_strided_slice %181 {offsets = [24, 0], sizes = [4, 128], strides = [1, 1]} : vector<32x128xf32> to vector<4x128xf32>
    %cst_67 = arith.constant dense<0.000000e+00> : vector<4x128xf32>
    %293 = tpu.matmul %291, %175, %cst_67 {dimension_numbers = #tpu.dot_dimension_numbers<[1], [0], [0], [1], [0, 0, 1, 1], [], []>} : vector<4x32xf32>, vector<32x128xf32>, vector<4x128xf32> -> vector<4x128xf32>
    %294 = arith.addf %292, %293 : vector<4x128xf32>
    %295 = arith.negf %294 : vector<4x128xf32>
    %296 = math.exp %295 : vector<4x128xf32>
    %cst_68 = arith.constant 1.000000e+00 : f32
    %297 = vector.broadcast %cst_68 : f32 to vector<4x128xf32>
    %298 = arith.addf %297, %296 : vector<4x128xf32>
    %299 = arith.divf %297, %298 : vector<4x128xf32>
    %300 = math.tanh %294 : vector<4x128xf32>
    %301 = vector.extract_strided_slice %299 {offsets = [0, 0], sizes = [4, 32], strides = [1, 1]} : vector<4x128xf32> to vector<4x32xf32>
    %302 = vector.extract_strided_slice %299 {offsets = [0, 32], sizes = [4, 32], strides = [1, 1]} : vector<4x128xf32> to vector<4x32xf32>
    %303 = vector.extract_strided_slice %299 {offsets = [0, 96], sizes = [4, 32], strides = [1, 1]} : vector<4x128xf32> to vector<4x32xf32>
    %304 = vector.extract_strided_slice %300 {offsets = [0, 64], sizes = [4, 32], strides = [1, 1]} : vector<4x128xf32> to vector<4x32xf32>
    %305 = arith.mulf %302, %289 : vector<4x32xf32>
    %306 = arith.mulf %301, %304 : vector<4x32xf32>
    %307 = arith.addf %305, %306 : vector<4x32xf32>
    %308 = math.tanh %307 : vector<4x32xf32>
    %309 = arith.mulf %303, %308 : vector<4x32xf32>
    %310 = vector.extract_strided_slice %181 {offsets = [28, 0], sizes = [4, 128], strides = [1, 1]} : vector<32x128xf32> to vector<4x128xf32>
    %cst_69 = arith.constant dense<0.000000e+00> : vector<4x128xf32>
    %311 = tpu.matmul %309, %175, %cst_69 {dimension_numbers = #tpu.dot_dimension_numbers<[1], [0], [0], [1], [0, 0, 1, 1], [], []>} : vector<4x32xf32>, vector<32x128xf32>, vector<4x128xf32> -> vector<4x128xf32>
    %312 = arith.addf %310, %311 : vector<4x128xf32>
    %313 = arith.negf %312 : vector<4x128xf32>
    %314 = math.exp %313 : vector<4x128xf32>
    %cst_70 = arith.constant 1.000000e+00 : f32
    %315 = vector.broadcast %cst_70 : f32 to vector<4x128xf32>
    %316 = arith.addf %315, %314 : vector<4x128xf32>
    %317 = arith.divf %315, %316 : vector<4x128xf32>
    %318 = math.tanh %312 : vector<4x128xf32>
    %319 = vector.extract_strided_slice %317 {offsets = [0, 0], sizes = [4, 32], strides = [1, 1]} : vector<4x128xf32> to vector<4x32xf32>
    %320 = vector.extract_strided_slice %317 {offsets = [0, 32], sizes = [4, 32], strides = [1, 1]} : vector<4x128xf32> to vector<4x32xf32>
    %321 = vector.extract_strided_slice %317 {offsets = [0, 96], sizes = [4, 32], strides = [1, 1]} : vector<4x128xf32> to vector<4x32xf32>
    %322 = vector.extract_strided_slice %318 {offsets = [0, 64], sizes = [4, 32], strides = [1, 1]} : vector<4x128xf32> to vector<4x32xf32>
    %323 = arith.mulf %320, %307 : vector<4x32xf32>
    %324 = arith.mulf %319, %322 : vector<4x32xf32>
    %325 = arith.addf %323, %324 : vector<4x32xf32>
    %326 = math.tanh %325 : vector<4x32xf32>
    %327 = arith.mulf %321, %326 : vector<4x32xf32>
    %c2_71 = arith.constant 2 : index
    %c0_72 = arith.constant 0 : index
    %c0_73 = arith.constant 0 : index
    %328 = vector.load %arg2[%c2_71, %c0_72, %c0_73] : memref<3x32x128xf32, #tpu.memory_space<vmem>>, vector<1x32x128xf32>
    %329 = vector.shape_cast %328 : vector<1x32x128xf32> to vector<32x128xf32>
    %c2_74 = arith.constant 2 : index
    %c0_75 = arith.constant 0 : index
    %c0_76 = arith.constant 0 : index
    %330 = vector.load %arg3[%c2_74, %c0_75, %c0_76] : memref<3x32x128xf32, #tpu.memory_space<vmem>>, vector<1x32x128xf32>
    %331 = vector.shape_cast %330 : vector<1x32x128xf32> to vector<32x128xf32>
    %c2_77 = arith.constant 2 : index
    %c0_78 = arith.constant 0 : index
    %c0_79 = arith.constant 0 : index
    %332 = vector.load %arg4[%c2_77, %c0_78, %c0_79] : memref<3x1x128xf32, #tpu.memory_space<vmem>>, vector<1x1x128xf32>
    %333 = vector.shape_cast %332 : vector<1x1x128xf32> to vector<1x128xf32>
    %334 = tpu.concatenate %201, %219, %237, %255, %273, %291, %309, %327 in 0 : vector<4x32xf32>, vector<4x32xf32>, vector<4x32xf32>, vector<4x32xf32>, vector<4x32xf32>, vector<4x32xf32>, vector<4x32xf32>, vector<4x32xf32> -> vector<32x32xf32>
    %cst_80 = arith.constant dense<0.000000e+00> : vector<32x128xf32>
    %335 = tpu.matmul %334, %329, %cst_80 {dimension_numbers = #tpu.dot_dimension_numbers<[1], [0], [0], [1], [0, 0, 1, 1], [], []>} : vector<32x32xf32>, vector<32x128xf32>, vector<32x128xf32> -> vector<32x128xf32>
    %336 = vector.broadcast %333 : vector<1x128xf32> to vector<32x128xf32>
    %337 = arith.addf %335, %336 : vector<32x128xf32>
    %cst_81 = arith.constant 0.000000e+00 : f32
    %338 = vector.broadcast %cst_81 : f32 to vector<4x32xf32>
    %cst_82 = arith.constant 0.000000e+00 : f32
    %339 = vector.broadcast %cst_82 : f32 to vector<4x32xf32>
    %340 = vector.extract_strided_slice %337 {offsets = [0, 0], sizes = [4, 128], strides = [1, 1]} : vector<32x128xf32> to vector<4x128xf32>
    %cst_83 = arith.constant dense<0.000000e+00> : vector<4x128xf32>
    %341 = tpu.matmul %338, %331, %cst_83 {dimension_numbers = #tpu.dot_dimension_numbers<[1], [0], [0], [1], [0, 0, 1, 1], [], []>} : vector<4x32xf32>, vector<32x128xf32>, vector<4x128xf32> -> vector<4x128xf32>
    %342 = arith.addf %340, %341 : vector<4x128xf32>
    %343 = arith.negf %342 : vector<4x128xf32>
    %344 = math.exp %343 : vector<4x128xf32>
    %cst_84 = arith.constant 1.000000e+00 : f32
    %345 = vector.broadcast %cst_84 : f32 to vector<4x128xf32>
    %346 = arith.addf %345, %344 : vector<4x128xf32>
    %347 = arith.divf %345, %346 : vector<4x128xf32>
    %348 = math.tanh %342 : vector<4x128xf32>
    %349 = vector.extract_strided_slice %347 {offsets = [0, 0], sizes = [4, 32], strides = [1, 1]} : vector<4x128xf32> to vector<4x32xf32>
    %350 = vector.extract_strided_slice %347 {offsets = [0, 32], sizes = [4, 32], strides = [1, 1]} : vector<4x128xf32> to vector<4x32xf32>
    %351 = vector.extract_strided_slice %347 {offsets = [0, 96], sizes = [4, 32], strides = [1, 1]} : vector<4x128xf32> to vector<4x32xf32>
    %352 = vector.extract_strided_slice %348 {offsets = [0, 64], sizes = [4, 32], strides = [1, 1]} : vector<4x128xf32> to vector<4x32xf32>
    %353 = arith.mulf %350, %339 : vector<4x32xf32>
    %354 = arith.mulf %349, %352 : vector<4x32xf32>
    %355 = arith.addf %353, %354 : vector<4x32xf32>
    %356 = math.tanh %355 : vector<4x32xf32>
    %357 = arith.mulf %351, %356 : vector<4x32xf32>
    %358 = vector.extract_strided_slice %337 {offsets = [4, 0], sizes = [4, 128], strides = [1, 1]} : vector<32x128xf32> to vector<4x128xf32>
    %cst_85 = arith.constant dense<0.000000e+00> : vector<4x128xf32>
    %359 = tpu.matmul %357, %331, %cst_85 {dimension_numbers = #tpu.dot_dimension_numbers<[1], [0], [0], [1], [0, 0, 1, 1], [], []>} : vector<4x32xf32>, vector<32x128xf32>, vector<4x128xf32> -> vector<4x128xf32>
    %360 = arith.addf %358, %359 : vector<4x128xf32>
    %361 = arith.negf %360 : vector<4x128xf32>
    %362 = math.exp %361 : vector<4x128xf32>
    %cst_86 = arith.constant 1.000000e+00 : f32
    %363 = vector.broadcast %cst_86 : f32 to vector<4x128xf32>
    %364 = arith.addf %363, %362 : vector<4x128xf32>
    %365 = arith.divf %363, %364 : vector<4x128xf32>
    %366 = math.tanh %360 : vector<4x128xf32>
    %367 = vector.extract_strided_slice %365 {offsets = [0, 0], sizes = [4, 32], strides = [1, 1]} : vector<4x128xf32> to vector<4x32xf32>
    %368 = vector.extract_strided_slice %365 {offsets = [0, 32], sizes = [4, 32], strides = [1, 1]} : vector<4x128xf32> to vector<4x32xf32>
    %369 = vector.extract_strided_slice %365 {offsets = [0, 96], sizes = [4, 32], strides = [1, 1]} : vector<4x128xf32> to vector<4x32xf32>
    %370 = vector.extract_strided_slice %366 {offsets = [0, 64], sizes = [4, 32], strides = [1, 1]} : vector<4x128xf32> to vector<4x32xf32>
    %371 = arith.mulf %368, %355 : vector<4x32xf32>
    %372 = arith.mulf %367, %370 : vector<4x32xf32>
    %373 = arith.addf %371, %372 : vector<4x32xf32>
    %374 = math.tanh %373 : vector<4x32xf32>
    %375 = arith.mulf %369, %374 : vector<4x32xf32>
    %376 = vector.extract_strided_slice %337 {offsets = [8, 0], sizes = [4, 128], strides = [1, 1]} : vector<32x128xf32> to vector<4x128xf32>
    %cst_87 = arith.constant dense<0.000000e+00> : vector<4x128xf32>
    %377 = tpu.matmul %375, %331, %cst_87 {dimension_numbers = #tpu.dot_dimension_numbers<[1], [0], [0], [1], [0, 0, 1, 1], [], []>} : vector<4x32xf32>, vector<32x128xf32>, vector<4x128xf32> -> vector<4x128xf32>
    %378 = arith.addf %376, %377 : vector<4x128xf32>
    %379 = arith.negf %378 : vector<4x128xf32>
    %380 = math.exp %379 : vector<4x128xf32>
    %cst_88 = arith.constant 1.000000e+00 : f32
    %381 = vector.broadcast %cst_88 : f32 to vector<4x128xf32>
    %382 = arith.addf %381, %380 : vector<4x128xf32>
    %383 = arith.divf %381, %382 : vector<4x128xf32>
    %384 = math.tanh %378 : vector<4x128xf32>
    %385 = vector.extract_strided_slice %383 {offsets = [0, 0], sizes = [4, 32], strides = [1, 1]} : vector<4x128xf32> to vector<4x32xf32>
    %386 = vector.extract_strided_slice %383 {offsets = [0, 32], sizes = [4, 32], strides = [1, 1]} : vector<4x128xf32> to vector<4x32xf32>
    %387 = vector.extract_strided_slice %383 {offsets = [0, 96], sizes = [4, 32], strides = [1, 1]} : vector<4x128xf32> to vector<4x32xf32>
    %388 = vector.extract_strided_slice %384 {offsets = [0, 64], sizes = [4, 32], strides = [1, 1]} : vector<4x128xf32> to vector<4x32xf32>
    %389 = arith.mulf %386, %373 : vector<4x32xf32>
    %390 = arith.mulf %385, %388 : vector<4x32xf32>
    %391 = arith.addf %389, %390 : vector<4x32xf32>
    %392 = math.tanh %391 : vector<4x32xf32>
    %393 = arith.mulf %387, %392 : vector<4x32xf32>
    %394 = vector.extract_strided_slice %337 {offsets = [12, 0], sizes = [4, 128], strides = [1, 1]} : vector<32x128xf32> to vector<4x128xf32>
    %cst_89 = arith.constant dense<0.000000e+00> : vector<4x128xf32>
    %395 = tpu.matmul %393, %331, %cst_89 {dimension_numbers = #tpu.dot_dimension_numbers<[1], [0], [0], [1], [0, 0, 1, 1], [], []>} : vector<4x32xf32>, vector<32x128xf32>, vector<4x128xf32> -> vector<4x128xf32>
    %396 = arith.addf %394, %395 : vector<4x128xf32>
    %397 = arith.negf %396 : vector<4x128xf32>
    %398 = math.exp %397 : vector<4x128xf32>
    %cst_90 = arith.constant 1.000000e+00 : f32
    %399 = vector.broadcast %cst_90 : f32 to vector<4x128xf32>
    %400 = arith.addf %399, %398 : vector<4x128xf32>
    %401 = arith.divf %399, %400 : vector<4x128xf32>
    %402 = math.tanh %396 : vector<4x128xf32>
    %403 = vector.extract_strided_slice %401 {offsets = [0, 0], sizes = [4, 32], strides = [1, 1]} : vector<4x128xf32> to vector<4x32xf32>
    %404 = vector.extract_strided_slice %401 {offsets = [0, 32], sizes = [4, 32], strides = [1, 1]} : vector<4x128xf32> to vector<4x32xf32>
    %405 = vector.extract_strided_slice %401 {offsets = [0, 96], sizes = [4, 32], strides = [1, 1]} : vector<4x128xf32> to vector<4x32xf32>
    %406 = vector.extract_strided_slice %402 {offsets = [0, 64], sizes = [4, 32], strides = [1, 1]} : vector<4x128xf32> to vector<4x32xf32>
    %407 = arith.mulf %404, %391 : vector<4x32xf32>
    %408 = arith.mulf %403, %406 : vector<4x32xf32>
    %409 = arith.addf %407, %408 : vector<4x32xf32>
    %410 = math.tanh %409 : vector<4x32xf32>
    %411 = arith.mulf %405, %410 : vector<4x32xf32>
    %412 = vector.extract_strided_slice %337 {offsets = [16, 0], sizes = [4, 128], strides = [1, 1]} : vector<32x128xf32> to vector<4x128xf32>
    %cst_91 = arith.constant dense<0.000000e+00> : vector<4x128xf32>
    %413 = tpu.matmul %411, %331, %cst_91 {dimension_numbers = #tpu.dot_dimension_numbers<[1], [0], [0], [1], [0, 0, 1, 1], [], []>} : vector<4x32xf32>, vector<32x128xf32>, vector<4x128xf32> -> vector<4x128xf32>
    %414 = arith.addf %412, %413 : vector<4x128xf32>
    %415 = arith.negf %414 : vector<4x128xf32>
    %416 = math.exp %415 : vector<4x128xf32>
    %cst_92 = arith.constant 1.000000e+00 : f32
    %417 = vector.broadcast %cst_92 : f32 to vector<4x128xf32>
    %418 = arith.addf %417, %416 : vector<4x128xf32>
    %419 = arith.divf %417, %418 : vector<4x128xf32>
    %420 = math.tanh %414 : vector<4x128xf32>
    %421 = vector.extract_strided_slice %419 {offsets = [0, 0], sizes = [4, 32], strides = [1, 1]} : vector<4x128xf32> to vector<4x32xf32>
    %422 = vector.extract_strided_slice %419 {offsets = [0, 32], sizes = [4, 32], strides = [1, 1]} : vector<4x128xf32> to vector<4x32xf32>
    %423 = vector.extract_strided_slice %419 {offsets = [0, 96], sizes = [4, 32], strides = [1, 1]} : vector<4x128xf32> to vector<4x32xf32>
    %424 = vector.extract_strided_slice %420 {offsets = [0, 64], sizes = [4, 32], strides = [1, 1]} : vector<4x128xf32> to vector<4x32xf32>
    %425 = arith.mulf %422, %409 : vector<4x32xf32>
    %426 = arith.mulf %421, %424 : vector<4x32xf32>
    %427 = arith.addf %425, %426 : vector<4x32xf32>
    %428 = math.tanh %427 : vector<4x32xf32>
    %429 = arith.mulf %423, %428 : vector<4x32xf32>
    %430 = vector.extract_strided_slice %337 {offsets = [20, 0], sizes = [4, 128], strides = [1, 1]} : vector<32x128xf32> to vector<4x128xf32>
    %cst_93 = arith.constant dense<0.000000e+00> : vector<4x128xf32>
    %431 = tpu.matmul %429, %331, %cst_93 {dimension_numbers = #tpu.dot_dimension_numbers<[1], [0], [0], [1], [0, 0, 1, 1], [], []>} : vector<4x32xf32>, vector<32x128xf32>, vector<4x128xf32> -> vector<4x128xf32>
    %432 = arith.addf %430, %431 : vector<4x128xf32>
    %433 = arith.negf %432 : vector<4x128xf32>
    %434 = math.exp %433 : vector<4x128xf32>
    %cst_94 = arith.constant 1.000000e+00 : f32
    %435 = vector.broadcast %cst_94 : f32 to vector<4x128xf32>
    %436 = arith.addf %435, %434 : vector<4x128xf32>
    %437 = arith.divf %435, %436 : vector<4x128xf32>
    %438 = math.tanh %432 : vector<4x128xf32>
    %439 = vector.extract_strided_slice %437 {offsets = [0, 0], sizes = [4, 32], strides = [1, 1]} : vector<4x128xf32> to vector<4x32xf32>
    %440 = vector.extract_strided_slice %437 {offsets = [0, 32], sizes = [4, 32], strides = [1, 1]} : vector<4x128xf32> to vector<4x32xf32>
    %441 = vector.extract_strided_slice %437 {offsets = [0, 96], sizes = [4, 32], strides = [1, 1]} : vector<4x128xf32> to vector<4x32xf32>
    %442 = vector.extract_strided_slice %438 {offsets = [0, 64], sizes = [4, 32], strides = [1, 1]} : vector<4x128xf32> to vector<4x32xf32>
    %443 = arith.mulf %440, %427 : vector<4x32xf32>
    %444 = arith.mulf %439, %442 : vector<4x32xf32>
    %445 = arith.addf %443, %444 : vector<4x32xf32>
    %446 = math.tanh %445 : vector<4x32xf32>
    %447 = arith.mulf %441, %446 : vector<4x32xf32>
    %448 = vector.extract_strided_slice %337 {offsets = [24, 0], sizes = [4, 128], strides = [1, 1]} : vector<32x128xf32> to vector<4x128xf32>
    %cst_95 = arith.constant dense<0.000000e+00> : vector<4x128xf32>
    %449 = tpu.matmul %447, %331, %cst_95 {dimension_numbers = #tpu.dot_dimension_numbers<[1], [0], [0], [1], [0, 0, 1, 1], [], []>} : vector<4x32xf32>, vector<32x128xf32>, vector<4x128xf32> -> vector<4x128xf32>
    %450 = arith.addf %448, %449 : vector<4x128xf32>
    %451 = arith.negf %450 : vector<4x128xf32>
    %452 = math.exp %451 : vector<4x128xf32>
    %cst_96 = arith.constant 1.000000e+00 : f32
    %453 = vector.broadcast %cst_96 : f32 to vector<4x128xf32>
    %454 = arith.addf %453, %452 : vector<4x128xf32>
    %455 = arith.divf %453, %454 : vector<4x128xf32>
    %456 = math.tanh %450 : vector<4x128xf32>
    %457 = vector.extract_strided_slice %455 {offsets = [0, 0], sizes = [4, 32], strides = [1, 1]} : vector<4x128xf32> to vector<4x32xf32>
    %458 = vector.extract_strided_slice %455 {offsets = [0, 32], sizes = [4, 32], strides = [1, 1]} : vector<4x128xf32> to vector<4x32xf32>
    %459 = vector.extract_strided_slice %455 {offsets = [0, 96], sizes = [4, 32], strides = [1, 1]} : vector<4x128xf32> to vector<4x32xf32>
    %460 = vector.extract_strided_slice %456 {offsets = [0, 64], sizes = [4, 32], strides = [1, 1]} : vector<4x128xf32> to vector<4x32xf32>
    %461 = arith.mulf %458, %445 : vector<4x32xf32>
    %462 = arith.mulf %457, %460 : vector<4x32xf32>
    %463 = arith.addf %461, %462 : vector<4x32xf32>
    %464 = math.tanh %463 : vector<4x32xf32>
    %465 = arith.mulf %459, %464 : vector<4x32xf32>
    %466 = vector.extract_strided_slice %337 {offsets = [28, 0], sizes = [4, 128], strides = [1, 1]} : vector<32x128xf32> to vector<4x128xf32>
    %cst_97 = arith.constant dense<0.000000e+00> : vector<4x128xf32>
    %467 = tpu.matmul %465, %331, %cst_97 {dimension_numbers = #tpu.dot_dimension_numbers<[1], [0], [0], [1], [0, 0, 1, 1], [], []>} : vector<4x32xf32>, vector<32x128xf32>, vector<4x128xf32> -> vector<4x128xf32>
    %468 = arith.addf %466, %467 : vector<4x128xf32>
    %469 = arith.negf %468 : vector<4x128xf32>
    %470 = math.exp %469 : vector<4x128xf32>
    %cst_98 = arith.constant 1.000000e+00 : f32
    %471 = vector.broadcast %cst_98 : f32 to vector<4x128xf32>
    %472 = arith.addf %471, %470 : vector<4x128xf32>
    %473 = arith.divf %471, %472 : vector<4x128xf32>
    %474 = math.tanh %468 : vector<4x128xf32>
    %475 = vector.extract_strided_slice %473 {offsets = [0, 0], sizes = [4, 32], strides = [1, 1]} : vector<4x128xf32> to vector<4x32xf32>
    %476 = vector.extract_strided_slice %473 {offsets = [0, 32], sizes = [4, 32], strides = [1, 1]} : vector<4x128xf32> to vector<4x32xf32>
    %477 = vector.extract_strided_slice %473 {offsets = [0, 96], sizes = [4, 32], strides = [1, 1]} : vector<4x128xf32> to vector<4x32xf32>
    %478 = vector.extract_strided_slice %474 {offsets = [0, 64], sizes = [4, 32], strides = [1, 1]} : vector<4x128xf32> to vector<4x32xf32>
    %479 = arith.mulf %476, %463 : vector<4x32xf32>
    %480 = arith.mulf %475, %478 : vector<4x32xf32>
    %481 = arith.addf %479, %480 : vector<4x32xf32>
    %482 = math.tanh %481 : vector<4x32xf32>
    %483 = arith.mulf %477, %482 : vector<4x32xf32>
    %484 = arith.addf %357, %375 : vector<4x32xf32>
    %485 = arith.addf %484, %393 : vector<4x32xf32>
    %486 = arith.addf %485, %411 : vector<4x32xf32>
    %487 = arith.addf %486, %429 : vector<4x32xf32>
    %488 = arith.addf %487, %447 : vector<4x32xf32>
    %489 = arith.addf %488, %465 : vector<4x32xf32>
    %490 = arith.addf %489, %483 : vector<4x32xf32>
    %cst_99 = arith.constant 1.250000e-01 : f32
    %491 = vector.broadcast %cst_99 : f32 to vector<4x32xf32>
    %492 = arith.mulf %490, %491 : vector<4x32xf32>
    %c0_100 = arith.constant 0 : index
    %c0_101 = arith.constant 0 : index
    %c0_102 = arith.constant 0 : index
    %493 = vector.load %arg1[%c0_100, %c0_101, %c0_102] : memref<8x4x32xf32, #tpu.memory_space<vmem>>, vector<8x4x32xf32>
    %cst_103 = arith.constant dense<0.000000e+00> : vector<4x32xf32>
    %494 = vector.multi_reduction <add>, %493, %cst_103 [0] : vector<8x4x32xf32> to vector<4x32xf32>
    %cst_104 = arith.constant 8.000000e+00 : f32
    %495 = vector.broadcast %cst_104 : f32 to vector<4x32xf32>
    %496 = arith.divf %494, %495 : vector<4x32xf32>
    %497 = tpu.concatenate %496, %492 in 1 : vector<4x32xf32>, vector<4x32xf32> -> vector<4x64xf32>
    %c0_105 = arith.constant 0 : index
    %c0_106 = arith.constant 0 : index
    %498 = vector.load %arg5[%c0_105, %c0_106] : memref<2x64xf32, #tpu.memory_space<vmem>>, vector<1x64xf32>
    %c1_107 = arith.constant 1 : index
    %c0_108 = arith.constant 0 : index
    %499 = vector.load %arg5[%c1_107, %c0_108] : memref<2x64xf32, #tpu.memory_space<vmem>>, vector<1x64xf32>
    %cst_109 = arith.constant dense<0.000000e+00> : vector<64xf32>
    %500 = vector.multi_reduction <add>, %497, %cst_109 [0] : vector<4x64xf32> to vector<64xf32>
    %501 = vector.shape_cast %500 : vector<64xf32> to vector<1x64xf32>
    %cst_110 = arith.constant 4.000000e+00 : f32
    %502 = vector.broadcast %cst_110 : f32 to vector<1x64xf32>
    %503 = arith.divf %501, %502 : vector<1x64xf32>
    %504 = vector.broadcast %503 : vector<1x64xf32> to vector<4x64xf32>
    %505 = arith.subf %497, %504 : vector<4x64xf32>
    %506 = arith.mulf %505, %505 : vector<4x64xf32>
    %cst_111 = arith.constant dense<0.000000e+00> : vector<64xf32>
    %507 = vector.multi_reduction <add>, %506, %cst_111 [0] : vector<4x64xf32> to vector<64xf32>
    %508 = vector.shape_cast %507 : vector<64xf32> to vector<1x64xf32>
    %cst_112 = arith.constant 4.000000e+00 : f32
    %509 = vector.broadcast %cst_112 : f32 to vector<1x64xf32>
    %510 = arith.divf %508, %509 : vector<1x64xf32>
    %511 = vector.broadcast %503 : vector<1x64xf32> to vector<4x64xf32>
    %512 = arith.subf %497, %511 : vector<4x64xf32>
    %cst_113 = arith.constant 9.99999974E-6 : f32
    %513 = vector.broadcast %cst_113 : f32 to vector<1x64xf32>
    %514 = arith.addf %510, %513 : vector<1x64xf32>
    %515 = math.rsqrt %514 : vector<1x64xf32>
    %516 = vector.broadcast %515 : vector<1x64xf32> to vector<4x64xf32>
    %517 = arith.mulf %512, %516 : vector<4x64xf32>
    %518 = vector.broadcast %498 : vector<1x64xf32> to vector<4x64xf32>
    %519 = arith.mulf %517, %518 : vector<4x64xf32>
    %520 = vector.broadcast %499 : vector<1x64xf32> to vector<4x64xf32>
    %521 = arith.addf %519, %520 : vector<4x64xf32>
    %cst_114 = arith.constant 0.000000e+00 : f32
    %522 = vector.broadcast %cst_114 : f32 to vector<4x64xf32>
    %523 = arith.cmpf oge, %521, %522 : vector<4x64xf32>
    %cst_115 = arith.constant 2.000000e-01 : f32
    %524 = vector.broadcast %cst_115 : f32 to vector<4x64xf32>
    %525 = arith.mulf %524, %521 : vector<4x64xf32>
    %526 = arith.select %523, %521, %525 : vector<4x64xi1>, vector<4x64xf32>
    %c0_116 = arith.constant 0 : index
    %c0_117 = arith.constant 0 : index
    %527 = vector.load %arg6[%c0_116, %c0_117] : memref<64x16xf32, #tpu.memory_space<vmem>>, vector<64x16xf32>
    %cst_118 = arith.constant dense<0.000000e+00> : vector<4x16xf32>
    %528 = tpu.matmul %526, %527, %cst_118 {dimension_numbers = #tpu.dot_dimension_numbers<[1], [0], [0], [1], [0, 0, 1, 1], [], []>} : vector<4x64xf32>, vector<64x16xf32>, vector<4x16xf32> -> vector<4x16xf32>
    %c0_119 = arith.constant 0 : index
    %c0_120 = arith.constant 0 : index
    %529 = vector.load %arg7[%c0_119, %c0_120] : memref<3x16xf32, #tpu.memory_space<vmem>>, vector<1x16xf32>
    %530 = vector.broadcast %529 : vector<1x16xf32> to vector<4x16xf32>
    %531 = arith.addf %528, %530 : vector<4x16xf32>
    %c1_121 = arith.constant 1 : index
    %c0_122 = arith.constant 0 : index
    %532 = vector.load %arg7[%c1_121, %c0_122] : memref<3x16xf32, #tpu.memory_space<vmem>>, vector<1x16xf32>
    %c2_123 = arith.constant 2 : index
    %c0_124 = arith.constant 0 : index
    %533 = vector.load %arg7[%c2_123, %c0_124] : memref<3x16xf32, #tpu.memory_space<vmem>>, vector<1x16xf32>
    %cst_125 = arith.constant dense<0.000000e+00> : vector<16xf32>
    %534 = vector.multi_reduction <add>, %531, %cst_125 [0] : vector<4x16xf32> to vector<16xf32>
    %535 = vector.shape_cast %534 : vector<16xf32> to vector<1x16xf32>
    %cst_126 = arith.constant 4.000000e+00 : f32
    %536 = vector.broadcast %cst_126 : f32 to vector<1x16xf32>
    %537 = arith.divf %535, %536 : vector<1x16xf32>
    %538 = vector.broadcast %537 : vector<1x16xf32> to vector<4x16xf32>
    %539 = arith.subf %531, %538 : vector<4x16xf32>
    %540 = arith.mulf %539, %539 : vector<4x16xf32>
    %cst_127 = arith.constant dense<0.000000e+00> : vector<16xf32>
    %541 = vector.multi_reduction <add>, %540, %cst_127 [0] : vector<4x16xf32> to vector<16xf32>
    %542 = vector.shape_cast %541 : vector<16xf32> to vector<1x16xf32>
    %cst_128 = arith.constant 4.000000e+00 : f32
    %543 = vector.broadcast %cst_128 : f32 to vector<1x16xf32>
    %544 = arith.divf %542, %543 : vector<1x16xf32>
    %545 = vector.broadcast %537 : vector<1x16xf32> to vector<4x16xf32>
    %546 = arith.subf %531, %545 : vector<4x16xf32>
    %cst_129 = arith.constant 9.99999974E-6 : f32
    %547 = vector.broadcast %cst_129 : f32 to vector<1x16xf32>
    %548 = arith.addf %544, %547 : vector<1x16xf32>
    %549 = math.rsqrt %548 : vector<1x16xf32>
    %550 = vector.broadcast %549 : vector<1x16xf32> to vector<4x16xf32>
    %551 = arith.mulf %546, %550 : vector<4x16xf32>
    %552 = vector.broadcast %532 : vector<1x16xf32> to vector<4x16xf32>
    %553 = arith.mulf %551, %552 : vector<4x16xf32>
    %554 = vector.broadcast %533 : vector<1x16xf32> to vector<4x16xf32>
    %555 = arith.addf %553, %554 : vector<4x16xf32>
    %cst_130 = arith.constant 0.000000e+00 : f32
    %556 = vector.broadcast %cst_130 : f32 to vector<4x48xf32>
    %557 = tpu.concatenate %526, %555, %556 in 1 : vector<4x64xf32>, vector<4x16xf32>, vector<4x48xf32> -> vector<4x128xf32>
    %c0_131 = arith.constant 0 : index
    %c0_132 = arith.constant 0 : index
    %558 = vector.load %arg8[%c0_131, %c0_132] : memref<4x128xf32, #tpu.memory_space<vmem>>, vector<4x128xf32>
    tpu.vector_store %arg8[%c0_131, %c0_132], %557 {strides = array<i32>} : memref<4x128xf32, #tpu.memory_space<vmem>>, vector<4x128xf32>,
    return
  }
}

</mosaic_0001>

<llo_original>
// kernel: tpu_custom_call.1
$region0: #{tpu_custom_call.1}
  #allocation0 [shape = 'u32[]', space=smem, size = 0x4, offset = 0x4, fixed_abs, tag = 'smem constant byte address 0x4 - core index']
  #allocation1 [shape = 'u32[144,128]{1,0:T(1,128)}', space=vmem, size = 0x12000, scoped, tag = 'internal scratch']
  %s0 = inlined_call_operand.vmem [shape: f32[8,4,32], index: 0, kind: input, shape index: {}]
  %s1 = inlined_call_operand.vmem [shape: f32[8,4,32], index: 1, kind: input, shape index: {}]
  %s2 = inlined_call_operand.hbm [shape: f32[3,32,128], index: 2, kind: input, shape index: {}]
  %s3 = inlined_call_operand.hbm [shape: f32[3,32,128], index: 3, kind: input, shape index: {}]
  %s4 = inlined_call_operand.vmem [shape: f32[3,1,128], index: 4, kind: input, shape index: {}]
  %s5 = inlined_call_operand.vmem [shape: f32[2,64], index: 5, kind: input, shape index: {}]
  %s6 = inlined_call_operand.vmem [shape: f32[64,16], index: 6, kind: input, shape index: {}]
  %s7 = inlined_call_operand.vmem [shape: f32[3,16], index: 7, kind: input, shape index: {}]
  %s8 = inlined_call_operand.hbm [shape: f32[4,128], index: 8, kind: output, shape index: {}]
  %s9 = sld [smem:[#allocation0]]
  $region50: #{tpu_custom_call.1} parent=0
    _
  %s11 = ssub.s32 1, %s9
  %s12 = scalar_select 0, %s11, %s9
  $region1: #{tpu_custom_call.1} parent=0
    #allocation2 [shape = 'u8[49152]{0}', space=vmem, size = 0xc000, scoped, tag = 'input window, operand 2, single buffered']
    #allocation3 [shape = 's32[1]{0}', space=sflag, size = 0x4, scoped, tag = 'scoped memory for tpu_custom_call.1']
    #allocation4 [shape = 's32[1]{0}', space=sflag, size = 0x4, scoped, tag = 'scoped memory for tpu_custom_call.1']
    #allocation5 [shape = 'u8[49152]{0}', space=vmem, size = 0xc000, scoped, tag = 'input window, operand 3, single buffered']
    #allocation6 [shape = 's32[1]{0}', space=sflag, size = 0x4, scoped, tag = 'scoped memory for tpu_custom_call.1']
    #allocation7 [shape = 'u8[2048]{0}', space=vmem, size = 0x800, scoped, tag = 'output window, operand 0, single buffered']
    %13 = vsyncpa [#allocation3], 0
    %14 = vsyncpa [#allocation6], 0
    %15 = vsyncpa [#allocation4], 0
    // Predicated region
    $region2: #{tpu_custom_call.1} parent=1 // pred_check
      _
    $region3: #{tpu_custom_call.1} parent=1 // pred_check_branch
      %17 = sbr.rel (0) target = $region5
    $region4: #{tpu_custom_call.1} parent=1 // pred_region
      _
    $region5: #{tpu_custom_call.1} parent=1 // pred_fallthru
      _
    // Predicated region
    $region6: #{tpu_custom_call.1} parent=1 // pred_check
      _
    $region7: #{tpu_custom_call.1} parent=1 // pred_check_branch
      %19 = sbr.rel (0) target = $region9
    $region8: #{tpu_custom_call.1} parent=1 // pred_region
      _
    $region9: #{tpu_custom_call.1} parent=1 // pred_fallthru
      _
    // Predicated region
    $region10: #{tpu_custom_call.1} parent=1 // pred_check
      _
    $region11: #{tpu_custom_call.1} parent=1 // pred_check_branch
      %21 = sbr.rel (0) target = $region13
    $region12: #{tpu_custom_call.1} parent=1 // pred_region
      %s23 = ssub.s32 1536, 1536
      %24 = vsyncadd [#allocation3], %s23
      %s25 = sshll.u32 [#allocation2], 4
      %s26 = int_to_ptr.vmem [resolvable:$true] %s25
      %31 = dma.hbm_to_vmem [thread:$0]  %s2, 1536, %s26, [#allocation3], 128, 128, 8
    $region13: #{tpu_custom_call.1} parent=1 // pred_fallthru
      _
    // Predicated region
    $region14: #{tpu_custom_call.1} parent=1 // pred_check
      _
    $region15: #{tpu_custom_call.1} parent=1 // pred_check_branch
      %33 = sbr.rel (0) target = $region17
    $region16: #{tpu_custom_call.1} parent=1 // pred_region
      %s35 = ssub.s32 1536, 1536
      %36 = vsyncadd [#allocation6], %s35
      %s37 = sshll.u32 [#allocation5], 4
      %s38 = int_to_ptr.vmem [resolvable:$true] %s37
      %43 = dma.hbm_to_vmem [thread:$0]  %s3, 1536, %s38, [#allocation6], 128, 128, 8
    $region17: #{tpu_custom_call.1} parent=1 // pred_fallthru
      _
    // Predicated region
    $region18: #{tpu_custom_call.1} parent=1 // pred_check
      _
    $region19: #{tpu_custom_call.1} parent=1 // pred_check_branch
      %45 = sbr.rel (0) target = $region21
    $region20: #{tpu_custom_call.1} parent=1 // pred_region
      _
    $region21: #{tpu_custom_call.1} parent=1 // pred_fallthru
      _
    // Predicated region
    $region22: #{tpu_custom_call.1} parent=1 // pred_check
      _
    $region23: #{tpu_custom_call.1} parent=1 // pred_check_branch
      %47 = sbr.rel (0) target = $region25
    $region24: #{tpu_custom_call.1} parent=1 // pred_region
      _
    $region25: #{tpu_custom_call.1} parent=1 // pred_fallthru
      _
    // Predicated region
    $region26: #{tpu_custom_call.1} parent=1 // pred_check
      _
    $region27: #{tpu_custom_call.1} parent=1 // pred_check_branch
      %49 = sbr.rel (0) target = $region29
    $region28: #{tpu_custom_call.1} parent=1 // pred_region
      _
    $region29: #{tpu_custom_call.1} parent=1 // pred_fallthru
      _
    // Predicated region
    $region30: #{tpu_custom_call.1} parent=1 // pred_check
      _
    $region31: #{tpu_custom_call.1} parent=1 // pred_check_branch
      %51 = sbr.rel (0) target = $region33
    $region32: #{tpu_custom_call.1} parent=1 // pred_region
      _
    $region33: #{tpu_custom_call.1} parent=1 // pred_fallthru
      _
    // Predicated region
    $region34: #{tpu_custom_call.1} parent=1 // pred_check
      _
    $region35: #{tpu_custom_call.1} parent=1 // pred_check_branch
      %53 = sbr.rel (0) target = $region37
    $region36: #{tpu_custom_call.1} parent=1 // pred_region
      %54 = dma.done [#allocation3], 1536
    $region37: #{tpu_custom_call.1} parent=1 // pred_fallthru
      _
    // Predicated region
    $region38: #{tpu_custom_call.1} parent=1 // pred_check
      _
    $region39: #{tpu_custom_call.1} parent=1 // pred_check_branch
      %56 = sbr.rel (0) target = $region41
    $region40: #{tpu_custom_call.1} parent=1 // pred_region
      %57 = dma.done [#allocation6], 1536
    $region41: #{tpu_custom_call.1} parent=1 // pred_fallthru
      _
    %v58 = vld [vmem:[%s0] sm:$0xf]
    %s59 = scalar_lea.vmem %s0, 4
    %v60 = vld [vmem:[%s59] sm:$0xf]
    %s61 = scalar_lea.vmem %s0, 8
    %v62 = vld [vmem:[%s61] sm:$0xf]
    %s63 = scalar_lea.vmem %s0, 12
    %v64 = vld [vmem:[%s63] sm:$0xf]
    %s65 = scalar_lea.vmem %s0, 16
    %v66 = vld [vmem:[%s65] sm:$0xf]
    %s67 = scalar_lea.vmem %s0, 20
    %v68 = vld [vmem:[%s67] sm:$0xf]
    %s69 = scalar_lea.vmem %s0, 24
    %v70 = vld [vmem:[%s69] sm:$0xf]
    %s71 = scalar_lea.vmem %s0, 28
    %v72 = vld [vmem:[%s71] sm:$0xf]
    %v73 = vld [vmem:[#allocation2] sm:$0xff]
    %v74 = vld [vmem:[#allocation2 + $0x8] sm:$0xff]
    %v75 = vld [vmem:[#allocation2 + $0x10] sm:$0xff]
    %v76 = vld [vmem:[#allocation2 + $0x18] sm:$0xff]
    %v77 = vld [vmem:[#allocation5] sm:$0xff]
    %v78 = vld [vmem:[#allocation5 + $0x8] sm:$0xff]
    %v79 = vld [vmem:[#allocation5 + $0x10] sm:$0xff]
    %v80 = vld [vmem:[#allocation5 + $0x18] sm:$0xff]
    %v81 = vld [vmem:[%s4] sm:$0x1]
    %v83 = vrot.slane %v60, 4
    %v86 = vrot.slane %v64, 4
    %v89 = vrot.slane %v68, 4
    %v92 = vrot.slane %v72, 4
    %vm94 = vcmask 1043456
    %v95 = vsel %vm94, %v58, %v83
    %v96 = vsel %vm94, %v62, %v86
    %v97 = vsel %vm94, %v66, %v89
    %v98 = vsel %vm94, %v70, %v92
    %v100 = vlaneseq
    %v101 = vshrl.u32 %v100, 7
    %v102 = vsub.s32 0, %v101
    %v103 = vrot.slane %v81, %v102
    %vm105 = vcmask 261120
    %v107 = vsel %vm105, %v95, 0
    %v110 = vsel %vm105, %v96, 0
    %v113 = vsel %vm105, %v97, 0
    %v116 = vsel %vm105, %v98, 0
    %118 = vmatprep.subr.mxu0 0.0
    %119 = vmatpush1.msra.mxu0 %v73
    %120 = vmatprep.subr.mxu0 0.0
    %121 = vmatpush1.msra.mxu0 %v74
    %122 = vmatprep.subr.mxu0 0.0
    %123 = vmatpush1.msra.mxu0 %v75
    %124 = vmatprep.subr.mxu0 0.0
    %125 = vmatpush1.msra.mxu0 %v76
    %126 = vmatprep.subr.mxu0 0.0
    %127 = vmatpush1.msra.mxu0 0.0
    %128 = vmatprep.subr.mxu0 0.0
    %129 = vmatpush1.msra.mxu0 0.0
    %130 = vmatprep.subr.mxu0 0.0
    %131 = vmatpush1.msra.mxu0 0.0
    %132 = vmatprep.subr.mxu0 0.0
    %133 = vmatpush1.msra.mxu0 0.0
    %134 = vmatprep.subr.mxu0 0.0
    %135 = vmatpush1.msra.mxu0 0.0
    %136 = vmatprep.subr.mxu0 0.0
    %137 = vmatpush1.msra.mxu0 0.0
    %138 = vmatprep.subr.mxu0 0.0
    %139 = vmatpush1.msra.mxu0 0.0
    %140 = vmatprep.subr.mxu0 0.0
    %141 = vmatpush1.msra.mxu0 0.0
    %142 = vmatprep.subr.mxu0 0.0
    %143 = vmatpush1.msra.mxu0 0.0
    %144 = vmatprep.subr.mxu0 0.0
    %145 = vmatpush1.msra.mxu0 0.0
    %146 = vmatprep.subr.mxu0 0.0
    %147 = vmatpush1.msra.mxu0 0.0
    %148 = vmatprep.subr.mxu0 0.0
    %149 = vmatpush1.msra.mxu0 0.0
    %150 = vmatprep.subr.mxu0 0.0
    %151 = vmatpush1.msra.mxu0 0.0
    %152 = vmatprep.subr.mxu0 0.0
    %153 = vmatpush1.msra.mxu0 0.0
    %154 = vmatprep.subr.mxu0 0.0
    %155 = vmatpush1.msra.mxu0 0.0
    %156 = vmatprep.subr.mxu0 0.0
    %157 = vmatpush1.msra.mxu0 0.0
    %158 = vmatprep.subr.mxu0 0.0
    %159 = vmatpush1.msra.mxu0 0.0
    %160 = vmatprep.subr.mxu0 0.0
    %161 = vmatpush1.msra.mxu0 0.0
    %162 = vmatprep.subr.mxu0 0.0
    %163 = vmatpush1.msra.mxu0 0.0
    %164 = vmatprep.subr.mxu0 0.0
    %165 = vmatpush1.msra.mxu0 0.0
    %166 = vmatprep.subr.mxu0 0.0
    %167 = vmatpush1.msra.mxu0 0.0
    %168 = vmatprep.subr.mxu0 0.0
    %169 = vmatpush1.msra.mxu0 0.0
    %170 = vmatprep.subr.mxu0 0.0
    %171 = vmatpush1.msra.mxu0 0.0
    %172 = vmatprep.subr.mxu0 0.0
    %173 = vmatpush1.msra.mxu0 0.0
    %174 = vmatprep.subr.mxu0 0.0
    %175 = vmatpush1.msra.mxu0 0.0
    %176 = vmatprep.subr.mxu0 0.0
    %177 = vmatpush1.msra.mxu0 0.0
    %178 = vmatprep.subr.mxu0 0.0
    %179 = vmatpush1.msra.mxu0 0.0
    %180 = vmatprep.subr.mxu0 0.0
    %181 = vmatpush1.msra.mxu0 0.0
    %182 = vmatprep.mubr.f32.mxu0 0.0
    %183 = vmatmul.mubr.f32.gmra.mrb[0].mxu0 %v107
    %v184 = vpop.f32.mrb[0].mxu0
    %v185 = vadd.f32 %v103, %v184
    %v186 = vpop.f32.mrb[0].mxu0
    %187 = vmatprep.mubr.f32.mxu0 0.0
    %188 = vmatmul.mubr.f32.gmra.mrb[0].mxu0 %v110
    %v189 = vpop.f32.mrb[0].mxu0
    %v190 = vadd.f32 %v103, %v189
    %v191 = vpop.f32.mrb[0].mxu0
    %192 = vmatprep.mubr.f32.mxu0 0.0
    %193 = vmatmul.mubr.f32.gmra.mrb[0].mxu0 %v113
    %v194 = vpop.f32.mrb[0].mxu0
    %v195 = vadd.f32 %v103, %v194
    %v196 = vpop.f32.mrb[0].mxu0
    %197 = vmatprep.mubr.f32.mxu0 0.0
    %198 = vmatmul.mubr.f32.gmra.mrb[0].mxu0 %v116
    %v199 = vpop.f32.mrb[0].mxu0
    %v200 = vadd.f32 %v103, %v199
    %v201 = vpop.f32.mrb[0].mxu0
    %202 = vdwg.mxu0
    %v204 = vsel %vm105, 0.0, 0
    %206 = vmatprep.subr.mxu0 0.0
    %207 = vmatpush1.msra.mxu0 %v77
    %208 = vmatprep.subr.mxu0 0.0
    %209 = vmatpush1.msra.mxu0 %v78
    %210 = vmatprep.subr.mxu0 0.0
    %211 = vmatpush1.msra.mxu0 %v79
    %212 = vmatprep.subr.mxu0 0.0
    %213 = vmatpush1.msra.mxu0 %v80
    %214 = vmatprep.subr.mxu0 0.0
    %215 = vmatpush1.msra.mxu0 0.0
    %216 = vmatprep.subr.mxu0 0.0
    %217 = vmatpush1.msra.mxu0 0.0
    %218 = vmatprep.subr.mxu0 0.0
    %219 = vmatpush1.msra.mxu0 0.0
    %220 = vmatprep.subr.mxu0 0.0
    %221 = vmatpush1.msra.mxu0 0.0
    %222 = vmatprep.subr.mxu0 0.0
    %223 = vmatpush1.msra.mxu0 0.0
    %224 = vmatprep.subr.mxu0 0.0
    %225 = vmatpush1.msra.mxu0 0.0
    %226 = vmatprep.subr.mxu0 0.0
    %227 = vmatpush1.msra.mxu0 0.0
    %228 = vmatprep.subr.mxu0 0.0
    %229 = vmatpush1.msra.mxu0 0.0
    %230 = vmatprep.subr.mxu0 0.0
    %231 = vmatpush1.msra.mxu0 0.0
    %232 = vmatprep.subr.mxu0 0.0
    %233 = vmatpush1.msra.mxu0 0.0
    %234 = vmatprep.subr.mxu0 0.0
    %235 = vmatpush1.msra.mxu0 0.0
    %236 = vmatprep.subr.mxu0 0.0
    %237 = vmatpush1.msra.mxu0 0.0
    %238 = vmatprep.subr.mxu0 0.0
    %239 = vmatpush1.msra.mxu0 0.0
    %240 = vmatprep.subr.mxu0 0.0
    %241 = vmatpush1.msra.mxu0 0.0
    %242 = vmatprep.subr.mxu0 0.0
    %243 = vmatpush1.msra.mxu0 0.0
    %244 = vmatprep.subr.mxu0 0.0
    %245 = vmatpush1.msra.mxu0 0.0
    %246 = vmatprep.subr.mxu0 0.0
    %247 = vmatpush1.msra.mxu0 0.0
    %248 = vmatprep.subr.mxu0 0.0
    %249 = vmatpush1.msra.mxu0 0.0
    %250 = vmatprep.subr.mxu0 0.0
    %251 = vmatpush1.msra.mxu0 0.0
    %252 = vmatprep.subr.mxu0 0.0
    %253 = vmatpush1.msra.mxu0 0.0
    %254 = vmatprep.subr.mxu0 0.0
    %255 = vmatpush1.msra.mxu0 0.0
    %256 = vmatprep.subr.mxu0 0.0
    %257 = vmatpush1.msra.mxu0 0.0
    %258 = vmatprep.subr.mxu0 0.0
    %259 = vmatpush1.msra.mxu0 0.0
    %260 = vmatprep.subr.mxu0 0.0
    %261 = vmatpush1.msra.mxu0 0.0
    %262 = vmatprep.subr.mxu0 0.0
    %263 = vmatpush1.msra.mxu0 0.0
    %264 = vmatprep.subr.mxu0 0.0
    %265 = vmatpush1.msra.mxu0 0.0
    %266 = vmatprep.subr.mxu0 0.0
    %267 = vmatpush1.msra.mxu0 0.0
    %268 = vmatprep.subr.mxu0 0.0
    %269 = vmatpush1.msra.mxu0 0.0
    %270 = vmatprep.mubr.f32.mxu0 0.0
    %271 = vmatmul.mubr.f32.gmra.mrb[0].mxu0 %v204
    %v272 = vpop.f32.mrb[0].mxu0
    %v273 = vadd.f32 0.0, %v272
    %v274 = vpop.f32.mrb[0].mxu0
    %275 = vdwg.mxu0
    %v276 = vadd.f32 %v185, %v273
    %v277 = vxor.u32 %v276, 2147483648
    %v278 = vmul.f32 %v277, 1.442695
    %v279 = vpow.pop %v278
    %v280 = vadd.f32 %v279, 1.0
    %v281 = vrcp.pop %v280
    %v282 = vmul.f32 1.0, %v281
    %v283 = vtanh.pop %v276
    %v284 = vmul.f32 %v282, 0.0
    %286 = vrot.lane.b32.xlu0 %v283, 64
    %v287 = vpop.permute.xlu0 %286
    %v289 = vmul.f32 %v282, %v287
    %291 = vrot.lane.b32.xlu0 %v289, 32
    %v292 = vpop.permute.xlu0 %291
    %v294 = vadd.f32 %v284, %v292
    %v295 = vtanh.pop %v294
    %297 = vrot.lane.b32.xlu0 %v295, 64
    %v298 = vpop.permute.xlu0 %297
    %v300 = vmul.f32 %v282, %v298
    %302 = vrot.lane.b32.xlu0 %v300, 32
    %v303 = vpop.permute.xlu0 %302
    %v304 = vsel %vm105, %v303, 0
    %306 = vmatprep.subr.mxu0 0.0
    %307 = vmatpush1.msra.mxu0 %v77
    %308 = vmatprep.subr.mxu0 0.0
    %309 = vmatpush1.msra.mxu0 %v78
    %310 = vmatprep.subr.mxu0 0.0
    %311 = vmatpush1.msra.mxu0 %v79
    %312 = vmatprep.subr.mxu0 0.0
    %313 = vmatpush1.msra.mxu0 %v80
    %314 = vmatprep.subr.mxu0 0.0
    %315 = vmatpush1.msra.mxu0 0.0
    %316 = vmatprep.subr.mxu0 0.0
    %317 = vmatpush1.msra.mxu0 0.0
    %318 = vmatprep.subr.mxu0 0.0
    %319 = vmatpush1.msra.mxu0 0.0
    %320 = vmatprep.subr.mxu0 0.0
    %321 = vmatpush1.msra.mxu0 0.0
    %322 = vmatprep.subr.mxu0 0.0
    %323 = vmatpush1.msra.mxu0 0.0
    %324 = vmatprep.subr.mxu0 0.0
    %325 = vmatpush1.msra.mxu0 0.0
    %326 = vmatprep.subr.mxu0 0.0
    %327 = vmatpush1.msra.mxu0 0.0
    %328 = vmatprep.subr.mxu0 0.0
    %329 = vmatpush1.msra.mxu0 0.0
    %330 = vmatprep.subr.mxu0 0.0
    %331 = vmatpush1.msra.mxu0 0.0
    %332 = vmatprep.subr.mxu0 0.0
    %333 = vmatpush1.msra.mxu0 0.0
    %334 = vmatprep.subr.mxu0 0.0
    %335 = vmatpush1.msra.mxu0 0.0
    %336 = vmatprep.subr.mxu0 0.0
    %337 = vmatpush1.msra.mxu0 0.0
    %338 = vmatprep.subr.mxu0 0.0
    %339 = vmatpush1.msra.mxu0 0.0
    %340 = vmatprep.subr.mxu0 0.0
    %341 = vmatpush1.msra.mxu0 0.0
    %342 = vmatprep.subr.mxu0 0.0
    %343 = vmatpush1.msra.mxu0 0.0
    %344 = vmatprep.subr.mxu0 0.0
    %345 = vmatpush1.msra.mxu0 0.0
    %346 = vmatprep.subr.mxu0 0.0
    %347 = vmatpush1.msra.mxu0 0.0
    %348 = vmatprep.subr.mxu0 0.0
    %349 = vmatpush1.msra.mxu0 0.0
    %350 = vmatprep.subr.mxu0 0.0
    %351 = vmatpush1.msra.mxu0 0.0
    %352 = vmatprep.subr.mxu0 0.0
    %353 = vmatpush1.msra.mxu0 0.0
    %354 = vmatprep.subr.mxu0 0.0
    %355 = vmatpush1.msra.mxu0 0.0
    %356 = vmatprep.subr.mxu0 0.0
    %357 = vmatpush1.msra.mxu0 0.0
    %358 = vmatprep.subr.mxu0 0.0
    %359 = vmatpush1.msra.mxu0 0.0
    %360 = vmatprep.subr.mxu0 0.0
    %361 = vmatpush1.msra.mxu0 0.0
    %362 = vmatprep.subr.mxu0 0.0
    %363 = vmatpush1.msra.mxu0 0.0
    %364 = vmatprep.subr.mxu0 0.0
    %365 = vmatpush1.msra.mxu0 0.0
    %366 = vmatprep.subr.mxu0 0.0
    %367 = vmatpush1.msra.mxu0 0.0
    %368 = vmatprep.subr.mxu0 0.0
    %369 = vmatpush1.msra.mxu0 0.0
    %370 = vmatprep.mubr.f32.mxu0 0.0
    %371 = vmatmul.mubr.f32.gmra.mrb[0].mxu0 %v304
    %v372 = vpop.f32.mrb[0].mxu0
    %v373 = vadd.f32 0.0, %v372
    %v374 = vpop.f32.mrb[0].mxu0
    %375 = vdwg.mxu0
    %v377 = vrot.slane %v373, 4
    %v379 = vadd.f32 %v185, %v377
    %v380 = vxor.u32 %v379, 2147483648
    %v381 = vmul.f32 %v380, 1.442695
    %v382 = vpow.pop %v381
    %v383 = vadd.f32 %v382, 1.0
    %v384 = vrcp.pop %v383
    %v385 = vmul.f32 1.0, %v384
    %v386 = vtanh.pop %v379
    %v388 = vrot.slane %v294, 4
    %v390 = vmul.f32 %v385, %v388
    %392 = vrot.lane.b32.xlu0 %v386, 64
    %v393 = vpop.permute.xlu0 %392
    %v395 = vmul.f32 %v385, %v393
    %397 = vrot.lane.b32.xlu0 %v395, 32
    %v398 = vpop.permute.xlu0 %397
    %v400 = vadd.f32 %v390, %v398
    %v401 = vtanh.pop %v400
    %403 = vrot.lane.b32.xlu0 %v401, 64
    %v404 = vpop.permute.xlu0 %403
    %v406 = vmul.f32 %v385, %v404
    %v408 = vrot.slane %v406, 4
    %409 = vrot.lane.b32.xlu0 %v408, 32
    %v410 = vpop.permute.xlu0 %409
    %v411 = vsel %vm105, %v410, 0
    %413 = vmatprep.subr.mxu0 0.0
    %414 = vmatpush1.msra.mxu0 %v77
    %415 = vmatprep.subr.mxu0 0.0
    %416 = vmatpush1.msra.mxu0 %v78
    %417 = vmatprep.subr.mxu0 0.0
    %418 = vmatpush1.msra.mxu0 %v79
    %419 = vmatprep.subr.mxu0 0.0
    %420 = vmatpush1.msra.mxu0 %v80
    %421 = vmatprep.subr.mxu0 0.0
    %422 = vmatpush1.msra.mxu0 0.0
    %423 = vmatprep.subr.mxu0 0.0
    %424 = vmatpush1.msra.mxu0 0.0
    %425 = vmatprep.subr.mxu0 0.0
    %426 = vmatpush1.msra.mxu0 0.0
    %427 = vmatprep.subr.mxu0 0.0
    %428 = vmatpush1.msra.mxu0 0.0
    %429 = vmatprep.subr.mxu0 0.0
    %430 = vmatpush1.msra.mxu0 0.0
    %431 = vmatprep.subr.mxu0 0.0
    %432 = vmatpush1.msra.mxu0 0.0
    %433 = vmatprep.subr.mxu0 0.0
    %434 = vmatpush1.msra.mxu0 0.0
    %435 = vmatprep.subr.mxu0 0.0
    %436 = vmatpush1.msra.mxu0 0.0
    %437 = vmatprep.subr.mxu0 0.0
    %438 = vmatpush1.msra.mxu0 0.0
    %439 = vmatprep.subr.mxu0 0.0
    %440 = vmatpush1.msra.mxu0 0.0
    %441 = vmatprep.subr.mxu0 0.0
    %442 = vmatpush1.msra.mxu0 0.0
    %443 = vmatprep.subr.mxu0 0.0
    %444 = vmatpush1.msra.mxu0 0.0
    %445 = vmatprep.subr.mxu0 0.0
    %446 = vmatpush1.msra.mxu0 0.0
    %447 = vmatprep.subr.mxu0 0.0
    %448 = vmatpush1.msra.mxu0 0.0
    %449 = vmatprep.subr.mxu0 0.0
    %450 = vmatpush1.msra.mxu0 0.0
    %451 = vmatprep.subr.mxu0 0.0
    %452 = vmatpush1.msra.mxu0 0.0
    %453 = vmatprep.subr.mxu0 0.0
    %454 = vmatpush1.msra.mxu0 0.0
    %455 = vmatprep.subr.mxu0 0.0
    %456 = vmatpush1.msra.mxu0 0.0
    %457 = vmatprep.subr.mxu0 0.0
    %458 = vmatpush1.msra.mxu0 0.0
    %459 = vmatprep.subr.mxu0 0.0
    %460 = vmatpush1.msra.mxu0 0.0
    %461 = vmatprep.subr.mxu0 0.0
    %462 = vmatpush1.msra.mxu0 0.0
    %463 = vmatprep.subr.mxu0 0.0
    %464 = vmatpush1.msra.mxu0 0.0
    %465 = vmatprep.subr.mxu0 0.0
    %466 = vmatpush1.msra.mxu0 0.0
    %467 = vmatprep.subr.mxu0 0.0
    %468 = vmatpush1.msra.mxu0 0.0
    %469 = vmatprep.subr.mxu0 0.0
    %470 = vmatpush1.msra.mxu0 0.0
    %471 = vmatprep.subr.mxu0 0.0
    %472 = vmatpush1.msra.mxu0 0.0
    %473 = vmatprep.subr.mxu0 0.0
    %474 = vmatpush1.msra.mxu0 0.0
    %475 = vmatprep.subr.mxu0 0.0
    %476 = vmatpush1.msra.mxu0 0.0
    %477 = vmatprep.mubr.f32.mxu0 0.0
    %478 = vmatmul.mubr.f32.gmra.mrb[0].mxu0 %v411
    %v479 = vpop.f32.mrb[0].mxu0
    %v480 = vadd.f32 0.0, %v479
    %v481 = vpop.f32.mrb[0].mxu0
    %482 = vdwg.mxu0
    %v483 = vadd.f32 %v190, %v480
    %v484 = vxor.u32 %v483, 2147483648
    %v485 = vmul.f32 %v484, 1.442695
    %v486 = vpow.pop %v485
    %v487 = vadd.f32 %v486, 1.0
    %v488 = vrcp.pop %v487
    %v489 = vmul.f32 1.0, %v488
    %v490 = vtanh.pop %v483
    %v492 = vrot.slane %v400, 4
    %v494 = vmul.f32 %v489, %v492
    %496 = vrot.lane.b32.xlu0 %v490, 64
    %v497 = vpop.permute.xlu0 %496
    %v499 = vmul.f32 %v489, %v497
    %501 = vrot.lane.b32.xlu0 %v499, 32
    %v502 = vpop.permute.xlu0 %501
    %v504 = vadd.f32 %v494, %v502
    %v505 = vtanh.pop %v504
    %507 = vrot.lane.b32.xlu0 %v505, 64
    %v508 = vpop.permute.xlu0 %507
    %v510 = vmul.f32 %v489, %v508
    %512 = vrot.lane.b32.xlu0 %v510, 32
    %v513 = vpop.permute.xlu0 %512
    %v514 = vsel %vm105, %v513, 0
    %516 = vmatprep.subr.mxu0 0.0
    %517 = vmatpush1.msra.mxu0 %v77
    %518 = vmatprep.subr.mxu0 0.0
    %519 = vmatpush1.msra.mxu0 %v78
    %520 = vmatprep.subr.mxu0 0.0
    %521 = vmatpush1.msra.mxu0 %v79
    %522 = vmatprep.subr.mxu0 0.0
    %523 = vmatpush1.msra.mxu0 %v80
    %524 = vmatprep.subr.mxu0 0.0
    %525 = vmatpush1.msra.mxu0 0.0
    %526 = vmatprep.subr.mxu0 0.0
    %527 = vmatpush1.msra.mxu0 0.0
    %528 = vmatprep.subr.mxu0 0.0
    %529 = vmatpush1.msra.mxu0 0.0
    %530 = vmatprep.subr.mxu0 0.0
    %531 = vmatpush1.msra.mxu0 0.0
    %532 = vmatprep.subr.mxu0 0.0
    %533 = vmatpush1.msra.mxu0 0.0
    %534 = vmatprep.subr.mxu0 0.0
    %535 = vmatpush1.msra.mxu0 0.0
    %536 = vmatprep.subr.mxu0 0.0
    %537 = vmatpush1.msra.mxu0 0.0
    %538 = vmatprep.subr.mxu0 0.0
    %539 = vmatpush1.msra.mxu0 0.0
    %540 = vmatprep.subr.mxu0 0.0
    %541 = vmatpush1.msra.mxu0 0.0
    %542 = vmatprep.subr.mxu0 0.0
    %543 = vmatpush1.msra.mxu0 0.0
    %544 = vmatprep.subr.mxu0 0.0
    %545 = vmatpush1.msra.mxu0 0.0
    %546 = vmatprep.subr.mxu0 0.0
    %547 = vmatpush1.msra.mxu0 0.0
    %548 = vmatprep.subr.mxu0 0.0
    %549 = vmatpush1.msra.mxu0 0.0
    %550 = vmatprep.subr.mxu0 0.0
    %551 = vmatpush1.msra.mxu0 0.0
    %552 = vmatprep.subr.mxu0 0.0
    %553 = vmatpush1.msra.mxu0 0.0
    %554 = vmatprep.subr.mxu0 0.0
    %555 = vmatpush1.msra.mxu0 0.0
    %556 = vmatprep.subr.mxu0 0.0
    %557 = vmatpush1.msra.mxu0 0.0
    %558 = vmatprep.subr.mxu0 0.0
    %559 = vmatpush1.msra.mxu0 0.0
    %560 = vmatprep.subr.mxu0 0.0
    %561 = vmatpush1.msra.mxu0 0.0
    %562 = vmatprep.subr.mxu0 0.0
    %563 = vmatpush1.msra.mxu0 0.0
    %564 = vmatprep.subr.mxu0 0.0
    %565 = vmatpush1.msra.mxu0 0.0
    %566 = vmatprep.subr.mxu0 0.0
    %567 = vmatpush1.msra.mxu0 0.0
    %568 = vmatprep.subr.mxu0 0.0
    %569 = vmatpush1.msra.mxu0 0.0
    %570 = vmatprep.subr.mxu0 0.0
    %571 = vmatpush1.msra.mxu0 0.0
    %572 = vmatprep.subr.mxu0 0.0
    %573 = vmatpush1.msra.mxu0 0.0
    %574 = vmatprep.subr.mxu0 0.0
    %575 = vmatpush1.msra.mxu0 0.0
    %576 = vmatprep.subr.mxu0 0.0
    %577 = vmatpush1.msra.mxu0 0.0
    %578 = vmatprep.subr.mxu0 0.0
    %579 = vmatpush1.msra.mxu0 0.0
    %580 = vmatprep.mubr.f32.mxu0 0.0
    %581 = vmatmul.mubr.f32.gmra.mrb[0].mxu0 %v514
    %v582 = vpop.f32.mrb[0].mxu0
    %v583 = vadd.f32 0.0, %v582
    %v584 = vpop.f32.mrb[0].mxu0
    %585 = vdwg.mxu0
    %v587 = vrot.slane %v583, 4
    %v589 = vadd.f32 %v190, %v587
    %v590 = vxor.u32 %v589, 2147483648
    %v591 = vmul.f32 %v590, 1.442695
    %v592 = vpow.pop %v591
    %v593 = vadd.f32 %v592, 1.0
    %v594 = vrcp.pop %v593
    %v595 = vmul.f32 1.0, %v594
    %v596 = vtanh.pop %v589
    %v598 = vrot.slane %v504, 4
    %v600 = vmul.f32 %v595, %v598
    %602 = vrot.lane.b32.xlu0 %v596, 64
    %v603 = vpop.permute.xlu0 %602
    %v605 = vmul.f32 %v595, %v603
    %607 = vrot.lane.b32.xlu0 %v605, 32
    %v608 = vpop.permute.xlu0 %607
    %v610 = vadd.f32 %v600, %v608
    %v611 = vtanh.pop %v610
    %613 = vrot.lane.b32.xlu0 %v611, 64
    %v614 = vpop.permute.xlu0 %613
    %v616 = vmul.f32 %v595, %v614
    %v618 = vrot.slane %v616, 4
    %619 = vrot.lane.b32.xlu0 %v618, 32
    %v620 = vpop.permute.xlu0 %619
    %v621 = vsel %vm105, %v620, 0
    %623 = vmatprep.subr.mxu0 0.0
    %624 = vmatpush1.msra.mxu0 %v77
    %625 = vmatprep.subr.mxu0 0.0
    %626 = vmatpush1.msra.mxu0 %v78
    %627 = vmatprep.subr.mxu0 0.0
    %628 = vmatpush1.msra.mxu0 %v79
    %629 = vmatprep.subr.mxu0 0.0
    %630 = vmatpush1.msra.mxu0 %v80
    %631 = vmatprep.subr.mxu0 0.0
    %632 = vmatpush1.msra.mxu0 0.0
    %633 = vmatprep.subr.mxu0 0.0
    %634 = vmatpush1.msra.mxu0 0.0
    %635 = vmatprep.subr.mxu0 0.0
    %636 = vmatpush1.msra.mxu0 0.0
    %637 = vmatprep.subr.mxu0 0.0
    %638 = vmatpush1.msra.mxu0 0.0
    %639 = vmatprep.subr.mxu0 0.0
    %640 = vmatpush1.msra.mxu0 0.0
    %641 = vmatprep.subr.mxu0 0.0
    %642 = vmatpush1.msra.mxu0 0.0
    %643 = vmatprep.subr.mxu0 0.0
    %644 = vmatpush1.msra.mxu0 0.0
    %645 = vmatprep.subr.mxu0 0.0
    %646 = vmatpush1.msra.mxu0 0.0
    %647 = vmatprep.subr.mxu0 0.0
    %648 = vmatpush1.msra.mxu0 0.0
    %649 = vmatprep.subr.mxu0 0.0
    %650 = vmatpush1.msra.mxu0 0.0
    %651 = vmatprep.subr.mxu0 0.0
    %652 = vmatpush1.msra.mxu0 0.0
    %653 = vmatprep.subr.mxu0 0.0
    %654 = vmatpush1.msra.mxu0 0.0
    %655 = vmatprep.subr.mxu0 0.0
    %656 = vmatpush1.msra.mxu0 0.0
    %657 = vmatprep.subr.mxu0 0.0
    %658 = vmatpush1.msra.mxu0 0.0
    %659 = vmatprep.subr.mxu0 0.0
    %660 = vmatpush1.msra.mxu0 0.0
    %661 = vmatprep.subr.mxu0 0.0
    %662 = vmatpush1.msra.mxu0 0.0
    %663 = vmatprep.subr.mxu0 0.0
    %664 = vmatpush1.msra.mxu0 0.0
    %665 = vmatprep.subr.mxu0 0.0
    %666 = vmatpush1.msra.mxu0 0.0
    %667 = vmatprep.subr.mxu0 0.0
    %668 = vmatpush1.msra.mxu0 0.0
    %669 = vmatprep.subr.mxu0 0.0
    %670 = vmatpush1.msra.mxu0 0.0
    %671 = vmatprep.subr.mxu0 0.0
    %672 = vmatpush1.msra.mxu0 0.0
    %673 = vmatprep.subr.mxu0 0.0
    %674 = vmatpush1.msra.mxu0 0.0
    %675 = vmatprep.subr.mxu0 0.0
    %676 = vmatpush1.msra.mxu0 0.0
    %677 = vmatprep.subr.mxu0 0.0
    %678 = vmatpush1.msra.mxu0 0.0
    %679 = vmatprep.subr.mxu0 0.0
    %680 = vmatpush1.msra.mxu0 0.0
    %681 = vmatprep.subr.mxu0 0.0
    %682 = vmatpush1.msra.mxu0 0.0
    %683 = vmatprep.subr.mxu0 0.0
    %684 = vmatpush1.msra.mxu0 0.0
    %685 = vmatprep.subr.mxu0 0.0
    %686 = vmatpush1.msra.mxu0 0.0
    %687 = vmatprep.mubr.f32.mxu0 0.0
    %688 = vmatmul.mubr.f32.gmra.mrb[0].mxu0 %v621
    %v689 = vpop.f32.mrb[0].mxu0
    %v690 = vadd.f32 0.0, %v689
    %v691 = vpop.f32.mrb[0].mxu0
    %692 = vdwg.mxu0
    %v693 = vadd.f32 %v195, %v690
    %v694 = vxor.u32 %v693, 2147483648
    %v695 = vmul.f32 %v694, 1.442695
    %v696 = vpow.pop %v695
    %v697 = vadd.f32 %v696, 1.0
    %v698 = vrcp.pop %v697
    %v699 = vmul.f32 1.0, %v698
    %v700 = vtanh.pop %v693
    %v702 = vrot.slane %v610, 4
    %v704 = vmul.f32 %v699, %v702
    %706 = vrot.lane.b32.xlu0 %v700, 64
    %v707 = vpop.permute.xlu0 %706
    %v709 = vmul.f32 %v699, %v707
    %711 = vrot.lane.b32.xlu0 %v709, 32
    %v712 = vpop.permute.xlu0 %711
    %v714 = vadd.f32 %v704, %v712
    %v715 = vtanh.pop %v714
    %717 = vrot.lane.b32.xlu0 %v715, 64
    %v718 = vpop.permute.xlu0 %717
    %v720 = vmul.f32 %v699, %v718
    %722 = vrot.lane.b32.xlu0 %v720, 32
    %v723 = vpop.permute.xlu0 %722
    %v724 = vsel %vm105, %v723, 0
    %726 = vmatprep.subr.mxu0 0.0
    %727 = vmatpush1.msra.mxu0 %v77
    %728 = vmatprep.subr.mxu0 0.0
    %729 = vmatpush1.msra.mxu0 %v78
    %730 = vmatprep.subr.mxu0 0.0
    %731 = vmatpush1.msra.mxu0 %v79
    %732 = vmatprep.subr.mxu0 0.0
    %733 = vmatpush1.msra.mxu0 %v80
    %734 = vmatprep.subr.mxu0 0.0
    %735 = vmatpush1.msra.mxu0 0.0
    %736 = vmatprep.subr.mxu0 0.0
    %737 = vmatpush1.msra.mxu0 0.0
    %738 = vmatprep.subr.mxu0 0.0
    %739 = vmatpush1.msra.mxu0 0.0
    %740 = vmatprep.subr.mxu0 0.0
    %741 = vmatpush1.msra.mxu0 0.0
    %742 = vmatprep.subr.mxu0 0.0
    %743 = vmatpush1.msra.mxu0 0.0
    %744 = vmatprep.subr.mxu0 0.0
    %745 = vmatpush1.msra.mxu0 0.0
    %746 = vmatprep.subr.mxu0 0.0
    %747 = vmatpush1.msra.mxu0 0.0
    %748 = vmatprep.subr.mxu0 0.0
    %749 = vmatpush1.msra.mxu0 0.0
    %750 = vmatprep.subr.mxu0 0.0
    %751 = vmatpush1.msra.mxu0 0.0
    %752 = vmatprep.subr.mxu0 0.0
    %753 = vmatpush1.msra.mxu0 0.0
    %754 = vmatprep.subr.mxu0 0.0
    %755 = vmatpush1.msra.mxu0 0.0
    %756 = vmatprep.subr.mxu0 0.0
    %757 = vmatpush1.msra.mxu0 0.0
    %758 = vmatprep.subr.mxu0 0.0
    %759 = vmatpush1.msra.mxu0 0.0
    %760 = vmatprep.subr.mxu0 0.0
    %761 = vmatpush1.msra.mxu0 0.0
    %762 = vmatprep.subr.mxu0 0.0
    %763 = vmatpush1.msra.mxu0 0.0
    %764 = vmatprep.subr.mxu0 0.0
    %765 = vmatpush1.msra.mxu0 0.0
    %766 = vmatprep.subr.mxu0 0.0
    %767 = vmatpush1.msra.mxu0 0.0
    %768 = vmatprep.subr.mxu0 0.0
    %769 = vmatpush1.msra.mxu0 0.0
    %770 = vmatprep.subr.mxu0 0.0
    %771 = vmatpush1.msra.mxu0 0.0
    %772 = vmatprep.subr.mxu0 0.0
    %773 = vmatpush1.msra.mxu0 0.0
    %774 = vmatprep.subr.mxu0 0.0
    %775 = vmatpush1.msra.mxu0 0.0
    %776 = vmatprep.subr.mxu0 0.0
    %777 = vmatpush1.msra.mxu0 0.0
    %778 = vmatprep.subr.mxu0 0.0
    %779 = vmatpush1.msra.mxu0 0.0
    %780 = vmatprep.subr.mxu0 0.0
    %781 = vmatpush1.msra.mxu0 0.0
    %782 = vmatprep.subr.mxu0 0.0
    %783 = vmatpush1.msra.mxu0 0.0
    %784 = vmatprep.subr.mxu0 0.0
    %785 = vmatpush1.msra.mxu0 0.0
    %786 = vmatprep.subr.mxu0 0.0
    %787 = vmatpush1.msra.mxu0 0.0
    %788 = vmatprep.subr.mxu0 0.0
    %789 = vmatpush1.msra.mxu0 0.0
    %790 = vmatprep.mubr.f32.mxu0 0.0
    %791 = vmatmul.mubr.f32.gmra.mrb[0].mxu0 %v724
    %v792 = vpop.f32.mrb[0].mxu0
    %v793 = vadd.f32 0.0, %v792
    %v794 = vpop.f32.mrb[0].mxu0
    %795 = vdwg.mxu0
    %v797 = vrot.slane %v793, 4
    %v799 = vadd.f32 %v195, %v797
    %v800 = vxor.u32 %v799, 2147483648
    %v801 = vmul.f32 %v800, 1.442695
    %v802 = vpow.pop %v801
    %v803 = vadd.f32 %v802, 1.0
    %v804 = vrcp.pop %v803
    %v805 = vmul.f32 1.0, %v804
    %v806 = vtanh.pop %v799
    %v808 = vrot.slane %v714, 4
    %v810 = vmul.f32 %v805, %v808
    %812 = vrot.lane.b32.xlu0 %v806, 64
    %v813 = vpop.permute.xlu0 %812
    %v815 = vmul.f32 %v805, %v813
    %817 = vrot.lane.b32.xlu0 %v815, 32
    %v818 = vpop.permute.xlu0 %817
    %v820 = vadd.f32 %v810, %v818
    %v821 = vtanh.pop %v820
    %823 = vrot.lane.b32.xlu0 %v821, 64
    %v824 = vpop.permute.xlu0 %823
    %v826 = vmul.f32 %v805, %v824
    %v828 = vrot.slane %v826, 4
    %829 = vrot.lane.b32.xlu0 %v828, 32
    %v830 = vpop.permute.xlu0 %829
    %v831 = vsel %vm105, %v830, 0
    %833 = vmatprep.subr.mxu0 0.0
    %834 = vmatpush1.msra.mxu0 %v77
    %835 = vmatprep.subr.mxu0 0.0
    %836 = vmatpush1.msra.mxu0 %v78
    %837 = vmatprep.subr.mxu0 0.0
    %838 = vmatpush1.msra.mxu0 %v79
    %839 = vmatprep.subr.mxu0 0.0
    %840 = vmatpush1.msra.mxu0 %v80
    %841 = vmatprep.subr.mxu0 0.0
    %842 = vmatpush1.msra.mxu0 0.0
    %843 = vmatprep.subr.mxu0 0.0
    %844 = vmatpush1.msra.mxu0 0.0
    %845 = vmatprep.subr.mxu0 0.0
    %846 = vmatpush1.msra.mxu0 0.0
    %847 = vmatprep.subr.mxu0 0.0
    %848 = vmatpush1.msra.mxu0 0.0
    %849 = vmatprep.subr.mxu0 0.0
    %850 = vmatpush1.msra.mxu0 0.0
    %851 = vmatprep.subr.mxu0 0.0
    %852 = vmatpush1.msra.mxu0 0.0
    %853 = vmatprep.subr.mxu0 0.0
    %854 = vmatpush1.msra.mxu0 0.0
    %855 = vmatprep.subr.mxu0 0.0
    %856 = vmatpush1.msra.mxu0 0.0
    %857 = vmatprep.subr.mxu0 0.0
    %858 = vmatpush1.msra.mxu0 0.0
    %859 = vmatprep.subr.mxu0 0.0
    %860 = vmatpush1.msra.mxu0 0.0
    %861 = vmatprep.subr.mxu0 0.0
    %862 = vmatpush1.msra.mxu0 0.0
    %863 = vmatprep.subr.mxu0 0.0
    %864 = vmatpush1.msra.mxu0 0.0
    %865 = vmatprep.subr.mxu0 0.0
    %866 = vmatpush1.msra.mxu0 0.0
    %867 = vmatprep.subr.mxu0 0.0
    %868 = vmatpush1.msra.mxu0 0.0
    %869 = vmatprep.subr.mxu0 0.0
    %870 = vmatpush1.msra.mxu0 0.0
    %871 = vmatprep.subr.mxu0 0.0
    %872 = vmatpush1.msra.mxu0 0.0
    %873 = vmatprep.subr.mxu0 0.0
    %874 = vmatpush1.msra.mxu0 0.0
    %875 = vmatprep.subr.mxu0 0.0
    %876 = vmatpush1.msra.mxu0 0.0
    %877 = vmatprep.subr.mxu0 0.0
    %878 = vmatpush1.msra.mxu0 0.0
    %879 = vmatprep.subr.mxu0 0.0
    %880 = vmatpush1.msra.mxu0 0.0
    %881 = vmatprep.subr.mxu0 0.0
    %882 = vmatpush1.msra.mxu0 0.0
    %883 = vmatprep.subr.mxu0 0.0
    %884 = vmatpush1.msra.mxu0 0.0
    %885 = vmatprep.subr.mxu0 0.0
    %886 = vmatpush1.msra.mxu0 0.0
    %887 = vmatprep.subr.mxu0 0.0
    %888 = vmatpush1.msra.mxu0 0.0
    %889 = vmatprep.subr.mxu0 0.0
    %890 = vmatpush1.msra.mxu0 0.0
    %891 = vmatprep.subr.mxu0 0.0
    %892 = vmatpush1.msra.mxu0 0.0
    %893 = vmatprep.subr.mxu0 0.0
    %894 = vmatpush1.msra.mxu0 0.0
    %895 = vmatprep.subr.mxu0 0.0
    %896 = vmatpush1.msra.mxu0 0.0
    %897 = vmatprep.mubr.f32.mxu0 0.0
    %898 = vmatmul.mubr.f32.gmra.mrb[0].mxu0 %v831
    %v899 = vpop.f32.mrb[0].mxu0
    %v900 = vadd.f32 0.0, %v899
    %v901 = vpop.f32.mrb[0].mxu0
    %902 = vdwg.mxu0
    %v903 = vadd.f32 %v200, %v900
    %v904 = vxor.u32 %v903, 2147483648
    %v905 = vmul.f32 %v904, 1.442695
    %v906 = vpow.pop %v905
    %v907 = vadd.f32 %v906, 1.0
    %v908 = vrcp.pop %v907
    %v909 = vmul.f32 1.0, %v908
    %v910 = vtanh.pop %v903
    %v912 = vrot.slane %v820, 4
    %v914 = vmul.f32 %v909, %v912
    %916 = vrot.lane.b32.xlu0 %v910, 64
    %v917 = vpop.permute.xlu0 %916
    %v919 = vmul.f32 %v909, %v917
    %921 = vrot.lane.b32.xlu0 %v919, 32
    %v922 = vpop.permute.xlu0 %921
    %v924 = vadd.f32 %v914, %v922
    %v925 = vtanh.pop %v924
    %927 = vrot.lane.b32.xlu0 %v925, 64
    %v928 = vpop.permute.xlu0 %927
    %v930 = vmul.f32 %v909, %v928
    %932 = vrot.lane.b32.xlu0 %v930, 32
    %v933 = vpop.permute.xlu0 %932
    %v934 = vsel %vm105, %v933, 0
    %936 = vmatprep.subr.mxu0 0.0
    %937 = vmatpush1.msra.mxu0 %v77
    %938 = vmatprep.subr.mxu0 0.0
    %939 = vmatpush1.msra.mxu0 %v78
    %940 = vmatprep.subr.mxu0 0.0
    %941 = vmatpush1.msra.mxu0 %v79
    %942 = vmatprep.subr.mxu0 0.0
    %943 = vmatpush1.msra.mxu0 %v80
    %944 = vmatprep.subr.mxu0 0.0
    %945 = vmatpush1.msra.mxu0 0.0
    %946 = vmatprep.subr.mxu0 0.0
    %947 = vmatpush1.msra.mxu0 0.0
    %948 = vmatprep.subr.mxu0 0.0
    %949 = vmatpush1.msra.mxu0 0.0
    %950 = vmatprep.subr.mxu0 0.0
    %951 = vmatpush1.msra.mxu0 0.0
    %952 = vmatprep.subr.mxu0 0.0
    %953 = vmatpush1.msra.mxu0 0.0
    %954 = vmatprep.subr.mxu0 0.0
    %955 = vmatpush1.msra.mxu0 0.0
    %956 = vmatprep.subr.mxu0 0.0
    %957 = vmatpush1.msra.mxu0 0.0
    %958 = vmatprep.subr.mxu0 0.0
    %959 = vmatpush1.msra.mxu0 0.0
    %960 = vmatprep.subr.mxu0 0.0
    %961 = vmatpush1.msra.mxu0 0.0
    %962 = vmatprep.subr.mxu0 0.0
    %963 = vmatpush1.msra.mxu0 0.0
    %964 = vmatprep.subr.mxu0 0.0
    %965 = vmatpush1.msra.mxu0 0.0
    %966 = vmatprep.subr.mxu0 0.0
    %967 = vmatpush1.msra.mxu0 0.0
    %968 = vmatprep.subr.mxu0 0.0
    %969 = vmatpush1.msra.mxu0 0.0
    %970 = vmatprep.subr.mxu0 0.0
    %971 = vmatpush1.msra.mxu0 0.0
    %972 = vmatprep.subr.mxu0 0.0
    %973 = vmatpush1.msra.mxu0 0.0
    %974 = vmatprep.subr.mxu0 0.0
    %975 = vmatpush1.msra.mxu0 0.0
    %976 = vmatprep.subr.mxu0 0.0
    %977 = vmatpush1.msra.mxu0 0.0
    %978 = vmatprep.subr.mxu0 0.0
    %979 = vmatpush1.msra.mxu0 0.0
    %980 = vmatprep.subr.mxu0 0.0
    %981 = vmatpush1.msra.mxu0 0.0
    %982 = vmatprep.subr.mxu0 0.0
    %983 = vmatpush1.msra.mxu0 0.0
    %984 = vmatprep.subr.mxu0 0.0
    %985 = vmatpush1.msra.mxu0 0.0
    %986 = vmatprep.subr.mxu0 0.0
    %987 = vmatpush1.msra.mxu0 0.0
    %988 = vmatprep.subr.mxu0 0.0
    %989 = vmatpush1.msra.mxu0 0.0
    %990 = vmatprep.subr.mxu0 0.0
    %991 = vmatpush1.msra.mxu0 0.0
    %992 = vmatprep.subr.mxu0 0.0
    %993 = vmatpush1.msra.mxu0 0.0
    %994 = vmatprep.subr.mxu0 0.0
    %995 = vmatpush1.msra.mxu0 0.0
    %996 = vmatprep.subr.mxu0 0.0
    %997 = vmatpush1.msra.mxu0 0.0
    %998 = vmatprep.subr.mxu0 0.0
    %999 = vmatpush1.msra.mxu0 0.0
    %1000 = vmatprep.mubr.f32.mxu0 0.0
    %1001 = vmatmul.mubr.f32.gmra.mrb[0].mxu0 %v934
    %v1002 = vpop.f32.mrb[0].mxu0
    %v1003 = vadd.f32 0.0, %v1002
    %v1004 = vpop.f32.mrb[0].mxu0
    %1005 = vdwg.mxu0
    %v1007 = vrot.slane %v1003, 4
    %v1009 = vadd.f32 %v200, %v1007
    %v1010 = vxor.u32 %v1009, 2147483648
    %v1011 = vmul.f32 %v1010, 1.442695
    %v1012 = vpow.pop %v1011
    %v1013 = vadd.f32 %v1012, 1.0
    %v1014 = vrcp.pop %v1013
    %v1015 = vmul.f32 1.0, %v1014
    %v1016 = vtanh.pop %v1009
    %v1018 = vrot.slane %v924, 4
    %v1020 = vmul.f32 %v1015, %v1018
    %1022 = vrot.lane.b32.xlu0 %v1016, 64
    %v1023 = vpop.permute.xlu0 %1022
    %v1025 = vmul.f32 %v1015, %v1023
    %1027 = vrot.lane.b32.xlu0 %v1025, 32
    %v1028 = vpop.permute.xlu0 %1027
    %v1030 = vadd.f32 %v1020, %v1028
    %v1031 = vtanh.pop %v1030
    %1033 = vrot.lane.b32.xlu0 %v1031, 64
    %v1034 = vpop.permute.xlu0 %1033
    %v1036 = vmul.f32 %v1015, %v1034
    %s1037 = scalar_lea.vmem [#allocation2], 32
    %v1038 = vld [vmem:[%s1037] sm:$0xff]
    %v1039 = vld [vmem:[%s1037 + $0x8] sm:$0xff]
    %v1040 = vld [vmem:[%s1037 + $0x10] sm:$0xff]
    %v1041 = vld [vmem:[%s1037 + $0x18] sm:$0xff]
    %s1042 = scalar_lea.vmem [#allocation5], 32
    %v1043 = vld [vmem:[%s1042] sm:$0xff]
    %v1044 = vld [vmem:[%s1042 + $0x8] sm:$0xff]
    %v1045 = vld [vmem:[%s1042 + $0x10] sm:$0xff]
    %v1046 = vld [vmem:[%s1042 + $0x18] sm:$0xff]
    %s1047 = scalar_lea.vmem %s4, 1
    %v1048 = vld [vmem:[%s1047] sm:$0x1]
    %v1049 = vsel %vm94, %v300, %v406
    %v1050 = vsel %vm94, %v510, %v616
    %v1051 = vsel %vm94, %v720, %v826
    %v1052 = vsel %vm94, %v930, %v1036
    %v1054 = vlaneseq
    %v1055 = vshrl.u32 %v1054, 7
    %v1056 = vsub.s32 0, %v1055
    %v1057 = vrot.slane %v1048, %v1056
    %1063 = vrot.lane.b32.xlu0 %v1049, 32
    %v1064 = vpop.permute.xlu0 %1063
    %1065 = vrot.lane.b32.xlu0 %v1050, 32
    %v1066 = vpop.permute.xlu0 %1065
    %1067 = vrot.lane.b32.xlu0 %v1051, 32
    %v1068 = vpop.permute.xlu0 %1067
    %1069 = vrot.lane.b32.xlu0 %v1052, 32
    %v1070 = vpop.permute.xlu0 %1069
    %v1071 = vsel %vm105, %v1064, 0
    %v1073 = vsel %vm105, %v1066, 0
    %v1075 = vsel %vm105, %v1068, 0
    %v1077 = vsel %vm105, %v1070, 0
    %1079 = vmatprep.subr.mxu0 0.0
    %1080 = vmatpush1.msra.mxu0 %v1038
    %1081 = vmatprep.subr.mxu0 0.0
    %1082 = vmatpush1.msra.mxu0 %v1039
    %1083 = vmatprep.subr.mxu0 0.0
    %1084 = vmatpush1.msra.mxu0 %v1040
    %1085 = vmatprep.subr.mxu0 0.0
    %1086 = vmatpush1.msra.mxu0 %v1041
    %1087 = vmatprep.subr.mxu0 0.0
    %1088 = vmatpush1.msra.mxu0 0.0
    %1089 = vmatprep.subr.mxu0 0.0
    %1090 = vmatpush1.msra.mxu0 0.0
    %1091 = vmatprep.subr.mxu0 0.0
    %1092 = vmatpush1.msra.mxu0 0.0
    %1093 = vmatprep.subr.mxu0 0.0
    %1094 = vmatpush1.msra.mxu0 0.0
    %1095 = vmatprep.subr.mxu0 0.0
    %1096 = vmatpush1.msra.mxu0 0.0
    %1097 = vmatprep.subr.mxu0 0.0
    %1098 = vmatpush1.msra.mxu0 0.0
    %1099 = vmatprep.subr.mxu0 0.0
    %1100 = vmatpush1.msra.mxu0 0.0
    %1101 = vmatprep.subr.mxu0 0.0
    %1102 = vmatpush1.msra.mxu0 0.0
    %1103 = vmatprep.subr.mxu0 0.0
    %1104 = vmatpush1.msra.mxu0 0.0
    %1105 = vmatprep.subr.mxu0 0.0
    %1106 = vmatpush1.msra.mxu0 0.0
    %1107 = vmatprep.subr.mxu0 0.0
    %1108 = vmatpush1.msra.mxu0 0.0
    %1109 = vmatprep.subr.mxu0 0.0
    %1110 = vmatpush1.msra.mxu0 0.0
    %1111 = vmatprep.subr.mxu0 0.0
    %1112 = vmatpush1.msra.mxu0 0.0
    %1113 = vmatprep.subr.mxu0 0.0
    %1114 = vmatpush1.msra.mxu0 0.0
    %1115 = vmatprep.subr.mxu0 0.0
    %1116 = vmatpush1.msra.mxu0 0.0
    %1117 = vmatprep.subr.mxu0 0.0
    %1118 = vmatpush1.msra.mxu0 0.0
    %1119 = vmatprep.subr.mxu0 0.0
    %1120 = vmatpush1.msra.mxu0 0.0
    %1121 = vmatprep.subr.mxu0 0.0
    %1122 = vmatpush1.msra.mxu0 0.0
    %1123 = vmatprep.subr.mxu0 0.0
    %1124 = vmatpush1.msra.mxu0 0.0
    %1125 = vmatprep.subr.mxu0 0.0
    %1126 = vmatpush1.msra.mxu0 0.0
    %1127 = vmatprep.subr.mxu0 0.0
    %1128 = vmatpush1.msra.mxu0 0.0
    %1129 = vmatprep.subr.mxu0 0.0
    %1130 = vmatpush1.msra.mxu0 0.0
    %1131 = vmatprep.subr.mxu0 0.0
    %1132 = vmatpush1.msra.mxu0 0.0
    %1133 = vmatprep.subr.mxu0 0.0
    %1134 = vmatpush1.msra.mxu0 0.0
    %1135 = vmatprep.subr.mxu0 0.0
    %1136 = vmatpush1.msra.mxu0 0.0
    %1137 = vmatprep.subr.mxu0 0.0
    %1138 = vmatpush1.msra.mxu0 0.0
    %1139 = vmatprep.subr.mxu0 0.0
    %1140 = vmatpush1.msra.mxu0 0.0
    %1141 = vmatprep.subr.mxu0 0.0
    %1142 = vmatpush1.msra.mxu0 0.0
    %1143 = vmatprep.mubr.f32.mxu0 0.0
    %1144 = vmatmul.mubr.f32.gmra.mrb[0].mxu0 %v1071
    %v1145 = vpop.f32.mrb[0].mxu0
    %v1146 = vadd.f32 %v1057, %v1145
    %v1147 = vpop.f32.mrb[0].mxu0
    %1148 = vmatprep.mubr.f32.mxu0 0.0
    %1149 = vmatmul.mubr.f32.gmra.mrb[0].mxu0 %v1073
    %v1150 = vpop.f32.mrb[0].mxu0
    %v1151 = vadd.f32 %v1057, %v1150
    %v1152 = vpop.f32.mrb[0].mxu0
    %1153 = vmatprep.mubr.f32.mxu0 0.0
    %1154 = vmatmul.mubr.f32.gmra.mrb[0].mxu0 %v1075
    %v1155 = vpop.f32.mrb[0].mxu0
    %v1156 = vadd.f32 %v1057, %v1155
    %v1157 = vpop.f32.mrb[0].mxu0
    %1158 = vmatprep.mubr.f32.mxu0 0.0
    %1159 = vmatmul.mubr.f32.gmra.mrb[0].mxu0 %v1077
    %v1160 = vpop.f32.mrb[0].mxu0
    %v1161 = vadd.f32 %v1057, %v1160
    %v1162 = vpop.f32.mrb[0].mxu0
    %1163 = vdwg.mxu0
    %1164 = vmatprep.subr.mxu0 0.0
    %1165 = vmatpush1.msra.mxu0 %v1043
    %1166 = vmatprep.subr.mxu0 0.0
    %1167 = vmatpush1.msra.mxu0 %v1044
    %1168 = vmatprep.subr.mxu0 0.0
    %1169 = vmatpush1.msra.mxu0 %v1045
    %1170 = vmatprep.subr.mxu0 0.0
    %1171 = vmatpush1.msra.mxu0 %v1046
    %1172 = vmatprep.subr.mxu0 0.0
    %1173 = vmatpush1.msra.mxu0 0.0
    %1174 = vmatprep.subr.mxu0 0.0
    %1175 = vmatpush1.msra.mxu0 0.0
    %1176 = vmatprep.subr.mxu0 0.0
    %1177 = vmatpush1.msra.mxu0 0.0
    %1178 = vmatprep.subr.mxu0 0.0
    %1179 = vmatpush1.msra.mxu0 0.0
    %1180 = vmatprep.subr.mxu0 0.0
    %1181 = vmatpush1.msra.mxu0 0.0
    %1182 = vmatprep.subr.mxu0 0.0
    %1183 = vmatpush1.msra.mxu0 0.0
    %1184 = vmatprep.subr.mxu0 0.0
    %1185 = vmatpush1.msra.mxu0 0.0
    %1186 = vmatprep.subr.mxu0 0.0
    %1187 = vmatpush1.msra.mxu0 0.0
    %1188 = vmatprep.subr.mxu0 0.0
    %1189 = vmatpush1.msra.mxu0 0.0
    %1190 = vmatprep.subr.mxu0 0.0
    %1191 = vmatpush1.msra.mxu0 0.0
    %1192 = vmatprep.subr.mxu0 0.0
    %1193 = vmatpush1.msra.mxu0 0.0
    %1194 = vmatprep.subr.mxu0 0.0
    %1195 = vmatpush1.msra.mxu0 0.0
    %1196 = vmatprep.subr.mxu0 0.0
    %1197 = vmatpush1.msra.mxu0 0.0
    %1198 = vmatprep.subr.mxu0 0.0
    %1199 = vmatpush1.msra.mxu0 0.0
    %1200 = vmatprep.subr.mxu0 0.0
    %1201 = vmatpush1.msra.mxu0 0.0
    %1202 = vmatprep.subr.mxu0 0.0
    %1203 = vmatpush1.msra.mxu0 0.0
    %1204 = vmatprep.subr.mxu0 0.0
    %1205 = vmatpush1.msra.mxu0 0.0
    %1206 = vmatprep.subr.mxu0 0.0
    %1207 = vmatpush1.msra.mxu0 0.0
    %1208 = vmatprep.subr.mxu0 0.0
    %1209 = vmatpush1.msra.mxu0 0.0
    %1210 = vmatprep.subr.mxu0 0.0
    %1211 = vmatpush1.msra.mxu0 0.0
    %1212 = vmatprep.subr.mxu0 0.0
    %1213 = vmatpush1.msra.mxu0 0.0
    %1214 = vmatprep.subr.mxu0 0.0
    %1215 = vmatpush1.msra.mxu0 0.0
    %1216 = vmatprep.subr.mxu0 0.0
    %1217 = vmatpush1.msra.mxu0 0.0
    %1218 = vmatprep.subr.mxu0 0.0
    %1219 = vmatpush1.msra.mxu0 0.0
    %1220 = vmatprep.subr.mxu0 0.0
    %1221 = vmatpush1.msra.mxu0 0.0
    %1222 = vmatprep.subr.mxu0 0.0
    %1223 = vmatpush1.msra.mxu0 0.0
    %1224 = vmatprep.subr.mxu0 0.0
    %1225 = vmatpush1.msra.mxu0 0.0
    %1226 = vmatprep.subr.mxu0 0.0
    %1227 = vmatpush1.msra.mxu0 0.0
    %1228 = vmatprep.mubr.f32.mxu0 0.0
    %1229 = vmatmul.mubr.f32.gmra.mrb[0].mxu0 %v204
    %v1230 = vpop.f32.mrb[0].mxu0
    %v1231 = vadd.f32 0.0, %v1230
    %v1232 = vpop.f32.mrb[0].mxu0
    %1233 = vdwg.mxu0
    %v1234 = vadd.f32 %v1146, %v1231
    %v1235 = vxor.u32 %v1234, 2147483648
    %v1236 = vmul.f32 %v1235, 1.442695
    %v1237 = vpow.pop %v1236
    %v1238 = vadd.f32 %v1237, 1.0
    %v1239 = vrcp.pop %v1238
    %v1240 = vmul.f32 1.0, %v1239
    %v1241 = vtanh.pop %v1234
    %v1242 = vmul.f32 %v1240, 0.0
    %1244 = vrot.lane.b32.xlu0 %v1241, 64
    %v1245 = vpop.permute.xlu0 %1244
    %v1247 = vmul.f32 %v1240, %v1245
    %1249 = vrot.lane.b32.xlu0 %v1247, 32
    %v1250 = vpop.permute.xlu0 %1249
    %v1252 = vadd.f32 %v1242, %v1250
    %v1253 = vtanh.pop %v1252
    %1255 = vrot.lane.b32.xlu0 %v1253, 64
    %v1256 = vpop.permute.xlu0 %1255
    %v1258 = vmul.f32 %v1240, %v1256
    %1260 = vrot.lane.b32.xlu0 %v1258, 32
    %v1261 = vpop.permute.xlu0 %1260
    %v1262 = vsel %vm105, %v1261, 0
    %1264 = vmatprep.subr.mxu0 0.0
    %1265 = vmatpush1.msra.mxu0 %v1043
    %1266 = vmatprep.subr.mxu0 0.0
    %1267 = vmatpush1.msra.mxu0 %v1044
    %1268 = vmatprep.subr.mxu0 0.0
    %1269 = vmatpush1.msra.mxu0 %v1045
    %1270 = vmatprep.subr.mxu0 0.0
    %1271 = vmatpush1.msra.mxu0 %v1046
    %1272 = vmatprep.subr.mxu0 0.0
    %1273 = vmatpush1.msra.mxu0 0.0
    %1274 = vmatprep.subr.mxu0 0.0
    %1275 = vmatpush1.msra.mxu0 0.0
    %1276 = vmatprep.subr.mxu0 0.0
    %1277 = vmatpush1.msra.mxu0 0.0
    %1278 = vmatprep.subr.mxu0 0.0
    %1279 = vmatpush1.msra.mxu0 0.0
    %1280 = vmatprep.subr.mxu0 0.0
    %1281 = vmatpush1.msra.mxu0 0.0
    %1282 = vmatprep.subr.mxu0 0.0
    %1283 = vmatpush1.msra.mxu0 0.0
    %1284 = vmatprep.subr.mxu0 0.0
    %1285 = vmatpush1.msra.mxu0 0.0
    %1286 = vmatprep.subr.mxu0 0.0
    %1287 = vmatpush1.msra.mxu0 0.0
    %1288 = vmatprep.subr.mxu0 0.0
    %1289 = vmatpush1.msra.mxu0 0.0
    %1290 = vmatprep.subr.mxu0 0.0
    %1291 = vmatpush1.msra.mxu0 0.0
    %1292 = vmatprep.subr.mxu0 0.0
    %1293 = vmatpush1.msra.mxu0 0.0
    %1294 = vmatprep.subr.mxu0 0.0
    %1295 = vmatpush1.msra.mxu0 0.0
    %1296 = vmatprep.subr.mxu0 0.0
    %1297 = vmatpush1.msra.mxu0 0.0
    %1298 = vmatprep.subr.mxu0 0.0
    %1299 = vmatpush1.msra.mxu0 0.0
    %1300 = vmatprep.subr.mxu0 0.0
    %1301 = vmatpush1.msra.mxu0 0.0
    %1302 = vmatprep.subr.mxu0 0.0
    %1303 = vmatpush1.msra.mxu0 0.0
    %1304 = vmatprep.subr.mxu0 0.0
    %1305 = vmatpush1.msra.mxu0 0.0
    %1306 = vmatprep.subr.mxu0 0.0
    %1307 = vmatpush1.msra.mxu0 0.0
    %1308 = vmatprep.subr.mxu0 0.0
    %1309 = vmatpush1.msra.mxu0 0.0
    %1310 = vmatprep.subr.mxu0 0.0
    %1311 = vmatpush1.msra.mxu0 0.0
    %1312 = vmatprep.subr.mxu0 0.0
    %1313 = vmatpush1.msra.mxu0 0.0
    %1314 = vmatprep.subr.mxu0 0.0
    %1315 = vmatpush1.msra.mxu0 0.0
    %1316 = vmatprep.subr.mxu0 0.0
    %1317 = vmatpush1.msra.mxu0 0.0
    %1318 = vmatprep.subr.mxu0 0.0
    %1319 = vmatpush1.msra.mxu0 0.0
    %1320 = vmatprep.subr.mxu0 0.0
    %1321 = vmatpush1.msra.mxu0 0.0
    %1322 = vmatprep.subr.mxu0 0.0
    %1323 = vmatpush1.msra.mxu0 0.0
    %1324 = vmatprep.subr.mxu0 0.0
    %1325 = vmatpush1.msra.mxu0 0.0
    %1326 = vmatprep.subr.mxu0 0.0
    %1327 = vmatpush1.msra.mxu0 0.0
    %1328 = vmatprep.mubr.f32.mxu0 0.0
    %1329 = vmatmul.mubr.f32.gmra.mrb[0].mxu0 %v1262
    %v1330 = vpop.f32.mrb[0].mxu0
    %v1331 = vadd.f32 0.0, %v1330
    %v1332 = vpop.f32.mrb[0].mxu0
    %1333 = vdwg.mxu0
    %v1335 = vrot.slane %v1331, 4
    %v1337 = vadd.f32 %v1146, %v1335
    %v1338 = vxor.u32 %v1337, 2147483648
    %v1339 = vmul.f32 %v1338, 1.442695
    %v1340 = vpow.pop %v1339
    %v1341 = vadd.f32 %v1340, 1.0
    %v1342 = vrcp.pop %v1341
    %v1343 = vmul.f32 1.0, %v1342
    %v1344 = vtanh.pop %v1337
    %v1346 = vrot.slane %v1252, 4
    %v1348 = vmul.f32 %v1343, %v1346
    %1350 = vrot.lane.b32.xlu0 %v1344, 64
    %v1351 = vpop.permute.xlu0 %1350
    %v1353 = vmul.f32 %v1343, %v1351
    %1355 = vrot.lane.b32.xlu0 %v1353, 32
    %v1356 = vpop.permute.xlu0 %1355
    %v1358 = vadd.f32 %v1348, %v1356
    %v1359 = vtanh.pop %v1358
    %1361 = vrot.lane.b32.xlu0 %v1359, 64
    %v1362 = vpop.permute.xlu0 %1361
    %v1364 = vmul.f32 %v1343, %v1362
    %v1366 = vrot.slane %v1364, 4
    %1367 = vrot.lane.b32.xlu0 %v1366, 32
    %v1368 = vpop.permute.xlu0 %1367
    %v1369 = vsel %vm105, %v1368, 0
    %1371 = vmatprep.subr.mxu0 0.0
    %1372 = vmatpush1.msra.mxu0 %v1043
    %1373 = vmatprep.subr.mxu0 0.0
    %1374 = vmatpush1.msra.mxu0 %v1044
    %1375 = vmatprep.subr.mxu0 0.0
    %1376 = vmatpush1.msra.mxu0 %v1045
    %1377 = vmatprep.subr.mxu0 0.0
    %1378 = vmatpush1.msra.mxu0 %v1046
    %1379 = vmatprep.subr.mxu0 0.0
    %1380 = vmatpush1.msra.mxu0 0.0
    %1381 = vmatprep.subr.mxu0 0.0
    %1382 = vmatpush1.msra.mxu0 0.0
    %1383 = vmatprep.subr.mxu0 0.0
    %1384 = vmatpush1.msra.mxu0 0.0
    %1385 = vmatprep.subr.mxu0 0.0
    %1386 = vmatpush1.msra.mxu0 0.0
    %1387 = vmatprep.subr.mxu0 0.0
    %1388 = vmatpush1.msra.mxu0 0.0
    %1389 = vmatprep.subr.mxu0 0.0
    %1390 = vmatpush1.msra.mxu0 0.0
    %1391 = vmatprep.subr.mxu0 0.0
    %1392 = vmatpush1.msra.mxu0 0.0
    %1393 = vmatprep.subr.mxu0 0.0
    %1394 = vmatpush1.msra.mxu0 0.0
    %1395 = vmatprep.subr.mxu0 0.0
    %1396 = vmatpush1.msra.mxu0 0.0
    %1397 = vmatprep.subr.mxu0 0.0
    %1398 = vmatpush1.msra.mxu0 0.0
    %1399 = vmatprep.subr.mxu0 0.0
    %1400 = vmatpush1.msra.mxu0 0.0
    %1401 = vmatprep.subr.mxu0 0.0
    %1402 = vmatpush1.msra.mxu0 0.0
    %1403 = vmatprep.subr.mxu0 0.0
    %1404 = vmatpush1.msra.mxu0 0.0
    %1405 = vmatprep.subr.mxu0 0.0
    %1406 = vmatpush1.msra.mxu0 0.0
    %1407 = vmatprep.subr.mxu0 0.0
    %1408 = vmatpush1.msra.mxu0 0.0
    %1409 = vmatprep.subr.mxu0 0.0
    %1410 = vmatpush1.msra.mxu0 0.0
    %1411 = vmatprep.subr.mxu0 0.0
    %1412 = vmatpush1.msra.mxu0 0.0
    %1413 = vmatprep.subr.mxu0 0.0
    %1414 = vmatpush1.msra.mxu0 0.0
    %1415 = vmatprep.subr.mxu0 0.0
    %1416 = vmatpush1.msra.mxu0 0.0
    %1417 = vmatprep.subr.mxu0 0.0
    %1418 = vmatpush1.msra.mxu0 0.0
    %1419 = vmatprep.subr.mxu0 0.0
    %1420 = vmatpush1.msra.mxu0 0.0
    %1421 = vmatprep.subr.mxu0 0.0
    %1422 = vmatpush1.msra.mxu0 0.0
    %1423 = vmatprep.subr.mxu0 0.0
    %1424 = vmatpush1.msra.mxu0 0.0
    %1425 = vmatprep.subr.mxu0 0.0
    %1426 = vmatpush1.msra.mxu0 0.0
    %1427 = vmatprep.subr.mxu0 0.0
    %1428 = vmatpush1.msra.mxu0 0.0
    %1429 = vmatprep.subr.mxu0 0.0
    %1430 = vmatpush1.msra.mxu0 0.0
    %1431 = vmatprep.subr.mxu0 0.0
    %1432 = vmatpush1.msra.mxu0 0.0
    %1433 = vmatprep.subr.mxu0 0.0
    %1434 = vmatpush1.msra.mxu0 0.0
    %1435 = vmatprep.mubr.f32.mxu0 0.0
    %1436 = vmatmul.mubr.f32.gmra.mrb[0].mxu0 %v1369
    %v1437 = vpop.f32.mrb[0].mxu0
    %v1438 = vadd.f32 0.0, %v1437
    %v1439 = vpop.f32.mrb[0].mxu0
    %1440 = vdwg.mxu0
    %v1441 = vadd.f32 %v1151, %v1438
    %v1442 = vxor.u32 %v1441, 2147483648
    %v1443 = vmul.f32 %v1442, 1.442695
    %v1444 = vpow.pop %v1443
    %v1445 = vadd.f32 %v1444, 1.0
    %v1446 = vrcp.pop %v1445
    %v1447 = vmul.f32 1.0, %v1446
    %v1448 = vtanh.pop %v1441
    %v1450 = vrot.slane %v1358, 4
    %v1452 = vmul.f32 %v1447, %v1450
    %1454 = vrot.lane.b32.xlu0 %v1448, 64
    %v1455 = vpop.permute.xlu0 %1454
    %v1457 = vmul.f32 %v1447, %v1455
    %1459 = vrot.lane.b32.xlu0 %v1457, 32
    %v1460 = vpop.permute.xlu0 %1459
    %v1462 = vadd.f32 %v1452, %v1460
    %v1463 = vtanh.pop %v1462
    %1465 = vrot.lane.b32.xlu0 %v1463, 64
    %v1466 = vpop.permute.xlu0 %1465
    %v1468 = vmul.f32 %v1447, %v1466
    %1470 = vrot.lane.b32.xlu0 %v1468, 32
    %v1471 = vpop.permute.xlu0 %1470
    %v1472 = vsel %vm105, %v1471, 0
    %1474 = vmatprep.subr.mxu0 0.0
    %1475 = vmatpush1.msra.mxu0 %v1043
    %1476 = vmatprep.subr.mxu0 0.0
    %1477 = vmatpush1.msra.mxu0 %v1044
    %1478 = vmatprep.subr.mxu0 0.0
    %1479 = vmatpush1.msra.mxu0 %v1045
    %1480 = vmatprep.subr.mxu0 0.0
    %1481 = vmatpush1.msra.mxu0 %v1046
    %1482 = vmatprep.subr.mxu0 0.0
    %1483 = vmatpush1.msra.mxu0 0.0
    %1484 = vmatprep.subr.mxu0 0.0
    %1485 = vmatpush1.msra.mxu0 0.0
    %1486 = vmatprep.subr.mxu0 0.0
    %1487 = vmatpush1.msra.mxu0 0.0
    %1488 = vmatprep.subr.mxu0 0.0
    %1489 = vmatpush1.msra.mxu0 0.0
    %1490 = vmatprep.subr.mxu0 0.0
    %1491 = vmatpush1.msra.mxu0 0.0
    %1492 = vmatprep.subr.mxu0 0.0
    %1493 = vmatpush1.msra.mxu0 0.0
    %1494 = vmatprep.subr.mxu0 0.0
    %1495 = vmatpush1.msra.mxu0 0.0
    %1496 = vmatprep.subr.mxu0 0.0
    %1497 = vmatpush1.msra.mxu0 0.0
    %1498 = vmatprep.subr.mxu0 0.0
    %1499 = vmatpush1.msra.mxu0 0.0
    %1500 = vmatprep.subr.mxu0 0.0
    %1501 = vmatpush1.msra.mxu0 0.0
    %1502 = vmatprep.subr.mxu0 0.0
    %1503 = vmatpush1.msra.mxu0 0.0
    %1504 = vmatprep.subr.mxu0 0.0
    %1505 = vmatpush1.msra.mxu0 0.0
    %1506 = vmatprep.subr.mxu0 0.0
    %1507 = vmatpush1.msra.mxu0 0.0
    %1508 = vmatprep.subr.mxu0 0.0
    %1509 = vmatpush1.msra.mxu0 0.0
    %1510 = vmatprep.subr.mxu0 0.0
    %1511 = vmatpush1.msra.mxu0 0.0
    %1512 = vmatprep.subr.mxu0 0.0
    %1513 = vmatpush1.msra.mxu0 0.0
    %1514 = vmatprep.subr.mxu0 0.0
    %1515 = vmatpush1.msra.mxu0 0.0
    %1516 = vmatprep.subr.mxu0 0.0
    %1517 = vmatpush1.msra.mxu0 0.0
    %1518 = vmatprep.subr.mxu0 0.0
    %1519 = vmatpush1.msra.mxu0 0.0
    %1520 = vmatprep.subr.mxu0 0.0
    %1521 = vmatpush1.msra.mxu0 0.0
    %1522 = vmatprep.subr.mxu0 0.0
    %1523 = vmatpush1.msra.mxu0 0.0
    %1524 = vmatprep.subr.mxu0 0.0
    %1525 = vmatpush1.msra.mxu0 0.0
    %1526 = vmatprep.subr.mxu0 0.0
    %1527 = vmatpush1.msra.mxu0 0.0
    %1528 = vmatprep.subr.mxu0 0.0
    %1529 = vmatpush1.msra.mxu0 0.0
    %1530 = vmatprep.subr.mxu0 0.0
    %1531 = vmatpush1.msra.mxu0 0.0
    %1532 = vmatprep.subr.mxu0 0.0
    %1533 = vmatpush1.msra.mxu0 0.0
    %1534 = vmatprep.subr.mxu0 0.0
    %1535 = vmatpush1.msra.mxu0 0.0
    %1536 = vmatprep.subr.mxu0 0.0
    %1537 = vmatpush1.msra.mxu0 0.0
    %1538 = vmatprep.mubr.f32.mxu0 0.0
    %1539 = vmatmul.mubr.f32.gmra.mrb[0].mxu0 %v1472
    %v1540 = vpop.f32.mrb[0].mxu0
    %v1541 = vadd.f32 0.0, %v1540
    %v1542 = vpop.f32.mrb[0].mxu0
    %1543 = vdwg.mxu0
    %v1545 = vrot.slane %v1541, 4
    %v1547 = vadd.f32 %v1151, %v1545
    %v1548 = vxor.u32 %v1547, 2147483648
    %v1549 = vmul.f32 %v1548, 1.442695
    %v1550 = vpow.pop %v1549
    %v1551 = vadd.f32 %v1550, 1.0
    %v1552 = vrcp.pop %v1551
    %v1553 = vmul.f32 1.0, %v1552
    %v1554 = vtanh.pop %v1547
    %v1556 = vrot.slane %v1462, 4
    %v1558 = vmul.f32 %v1553, %v1556
    %1560 = vrot.lane.b32.xlu0 %v1554, 64
    %v1561 = vpop.permute.xlu0 %1560
    %v1563 = vmul.f32 %v1553, %v1561
    %1565 = vrot.lane.b32.xlu0 %v1563, 32
    %v1566 = vpop.permute.xlu0 %1565
    %v1568 = vadd.f32 %v1558, %v1566
    %v1569 = vtanh.pop %v1568
    %1571 = vrot.lane.b32.xlu0 %v1569, 64
    %v1572 = vpop.permute.xlu0 %1571
    %v1574 = vmul.f32 %v1553, %v1572
    %v1576 = vrot.slane %v1574, 4
    %1577 = vrot.lane.b32.xlu0 %v1576, 32
    %v1578 = vpop.permute.xlu0 %1577
    %v1579 = vsel %vm105, %v1578, 0
    %1581 = vmatprep.subr.mxu0 0.0
    %1582 = vmatpush1.msra.mxu0 %v1043
    %1583 = vmatprep.subr.mxu0 0.0
    %1584 = vmatpush1.msra.mxu0 %v1044
    %1585 = vmatprep.subr.mxu0 0.0
    %1586 = vmatpush1.msra.mxu0 %v1045
    %1587 = vmatprep.subr.mxu0 0.0
    %1588 = vmatpush1.msra.mxu0 %v1046
    %1589 = vmatprep.subr.mxu0 0.0
    %1590 = vmatpush1.msra.mxu0 0.0
    %1591 = vmatprep.subr.mxu0 0.0
    %1592 = vmatpush1.msra.mxu0 0.0
    %1593 = vmatprep.subr.mxu0 0.0
    %1594 = vmatpush1.msra.mxu0 0.0
    %1595 = vmatprep.subr.mxu0 0.0
    %1596 = vmatpush1.msra.mxu0 0.0
    %1597 = vmatprep.subr.mxu0 0.0
    %1598 = vmatpush1.msra.mxu0 0.0
    %1599 = vmatprep.subr.mxu0 0.0
    %1600 = vmatpush1.msra.mxu0 0.0
    %1601 = vmatprep.subr.mxu0 0.0
    %1602 = vmatpush1.msra.mxu0 0.0
    %1603 = vmatprep.subr.mxu0 0.0
    %1604 = vmatpush1.msra.mxu0 0.0
    %1605 = vmatprep.subr.mxu0 0.0
    %1606 = vmatpush1.msra.mxu0 0.0
    %1607 = vmatprep.subr.mxu0 0.0
    %1608 = vmatpush1.msra.mxu0 0.0
    %1609 = vmatprep.subr.mxu0 0.0
    %1610 = vmatpush1.msra.mxu0 0.0
    %1611 = vmatprep.subr.mxu0 0.0
    %1612 = vmatpush1.msra.mxu0 0.0
    %1613 = vmatprep.subr.mxu0 0.0
    %1614 = vmatpush1.msra.mxu0 0.0
    %1615 = vmatprep.subr.mxu0 0.0
    %1616 = vmatpush1.msra.mxu0 0.0
    %1617 = vmatprep.subr.mxu0 0.0
    %1618 = vmatpush1.msra.mxu0 0.0
    %1619 = vmatprep.subr.mxu0 0.0
    %1620 = vmatpush1.msra.mxu0 0.0
    %1621 = vmatprep.subr.mxu0 0.0
    %1622 = vmatpush1.msra.mxu0 0.0
    %1623 = vmatprep.subr.mxu0 0.0
    %1624 = vmatpush1.msra.mxu0 0.0
    %1625 = vmatprep.subr.mxu0 0.0
    %1626 = vmatpush1.msra.mxu0 0.0
    %1627 = vmatprep.subr.mxu0 0.0
    %1628 = vmatpush1.msra.mxu0 0.0
    %1629 = vmatprep.subr.mxu0 0.0
    %1630 = vmatpush1.msra.mxu0 0.0
    %1631 = vmatprep.subr.mxu0 0.0
    %1632 = vmatpush1.msra.mxu0 0.0
    %1633 = vmatprep.subr.mxu0 0.0
    %1634 = vmatpush1.msra.mxu0 0.0
    %1635 = vmatprep.subr.mxu0 0.0
    %1636 = vmatpush1.msra.mxu0 0.0
    %1637 = vmatprep.subr.mxu0 0.0
    %1638 = vmatpush1.msra.mxu0 0.0
    %1639 = vmatprep.subr.mxu0 0.0
    %1640 = vmatpush1.msra.mxu0 0.0
    %1641 = vmatprep.subr.mxu0 0.0
    %1642 = vmatpush1.msra.mxu0 0.0
    %1643 = vmatprep.subr.mxu0 0.0
    %1644 = vmatpush1.msra.mxu0 0.0
    %1645 = vmatprep.mubr.f32.mxu0 0.0
    %1646 = vmatmul.mubr.f32.gmra.mrb[0].mxu0 %v1579
    %v1647 = vpop.f32.mrb[0].mxu0
    %v1648 = vadd.f32 0.0, %v1647
    %v1649 = vpop.f32.mrb[0].mxu0
    %1650 = vdwg.mxu0
    %v1651 = vadd.f32 %v1156, %v1648
    %v1652 = vxor.u32 %v1651, 2147483648
    %v1653 = vmul.f32 %v1652, 1.442695
    %v1654 = vpow.pop %v1653
    %v1655 = vadd.f32 %v1654, 1.0
    %v1656 = vrcp.pop %v1655
    %v1657 = vmul.f32 1.0, %v1656
    %v1658 = vtanh.pop %v1651
    %v1660 = vrot.slane %v1568, 4
    %v1662 = vmul.f32 %v1657, %v1660
    %1664 = vrot.lane.b32.xlu0 %v1658, 64
    %v1665 = vpop.permute.xlu0 %1664
    %v1667 = vmul.f32 %v1657, %v1665
    %1669 = vrot.lane.b32.xlu0 %v1667, 32
    %v1670 = vpop.permute.xlu0 %1669
    %v1672 = vadd.f32 %v1662, %v1670
    %v1673 = vtanh.pop %v1672
    %1675 = vrot.lane.b32.xlu0 %v1673, 64
    %v1676 = vpop.permute.xlu0 %1675
    %v1678 = vmul.f32 %v1657, %v1676
    %1680 = vrot.lane.b32.xlu0 %v1678, 32
    %v1681 = vpop.permute.xlu0 %1680
    %v1682 = vsel %vm105, %v1681, 0
    %1684 = vmatprep.subr.mxu0 0.0
    %1685 = vmatpush1.msra.mxu0 %v1043
    %1686 = vmatprep.subr.mxu0 0.0
    %1687 = vmatpush1.msra.mxu0 %v1044
    %1688 = vmatprep.subr.mxu0 0.0
    %1689 = vmatpush1.msra.mxu0 %v1045
    %1690 = vmatprep.subr.mxu0 0.0
    %1691 = vmatpush1.msra.mxu0 %v1046
    %1692 = vmatprep.subr.mxu0 0.0
    %1693 = vmatpush1.msra.mxu0 0.0
    %1694 = vmatprep.subr.mxu0 0.0
    %1695 = vmatpush1.msra.mxu0 0.0
    %1696 = vmatprep.subr.mxu0 0.0
    %1697 = vmatpush1.msra.mxu0 0.0
    %1698 = vmatprep.subr.mxu0 0.0
    %1699 = vmatpush1.msra.mxu0 0.0
    %1700 = vmatprep.subr.mxu0 0.0
    %1701 = vmatpush1.msra.mxu0 0.0
    %1702 = vmatprep.subr.mxu0 0.0
    %1703 = vmatpush1.msra.mxu0 0.0
    %1704 = vmatprep.subr.mxu0 0.0
    %1705 = vmatpush1.msra.mxu0 0.0
    %1706 = vmatprep.subr.mxu0 0.0
    %1707 = vmatpush1.msra.mxu0 0.0
    %1708 = vmatprep.subr.mxu0 0.0
    %1709 = vmatpush1.msra.mxu0 0.0
    %1710 = vmatprep.subr.mxu0 0.0
    %1711 = vmatpush1.msra.mxu0 0.0
    %1712 = vmatprep.subr.mxu0 0.0
    %1713 = vmatpush1.msra.mxu0 0.0
    %1714 = vmatprep.subr.mxu0 0.0
    %1715 = vmatpush1.msra.mxu0 0.0
    %1716 = vmatprep.subr.mxu0 0.0
    %1717 = vmatpush1.msra.mxu0 0.0
    %1718 = vmatprep.subr.mxu0 0.0
    %1719 = vmatpush1.msra.mxu0 0.0
    %1720 = vmatprep.subr.mxu0 0.0
    %1721 = vmatpush1.msra.mxu0 0.0
    %1722 = vmatprep.subr.mxu0 0.0
    %1723 = vmatpush1.msra.mxu0 0.0
    %1724 = vmatprep.subr.mxu0 0.0
    %1725 = vmatpush1.msra.mxu0 0.0
    %1726 = vmatprep.subr.mxu0 0.0
    %1727 = vmatpush1.msra.mxu0 0.0
    %1728 = vmatprep.subr.mxu0 0.0
    %1729 = vmatpush1.msra.mxu0 0.0
    %1730 = vmatprep.subr.mxu0 0.0
    %1731 = vmatpush1.msra.mxu0 0.0
    %1732 = vmatprep.subr.mxu0 0.0
    %1733 = vmatpush1.msra.mxu0 0.0
    %1734 = vmatprep.subr.mxu0 0.0
    %1735 = vmatpush1.msra.mxu0 0.0
    %1736 = vmatprep.subr.mxu0 0.0
    %1737 = vmatpush1.msra.mxu0 0.0
    %1738 = vmatprep.subr.mxu0 0.0
    %1739 = vmatpush1.msra.mxu0 0.0
    %1740 = vmatprep.subr.mxu0 0.0
    %1741 = vmatpush1.msra.mxu0 0.0
    %1742 = vmatprep.subr.mxu0 0.0
    %1743 = vmatpush1.msra.mxu0 0.0
    %1744 = vmatprep.subr.mxu0 0.0
    %1745 = vmatpush1.msra.mxu0 0.0
    %1746 = vmatprep.subr.mxu0 0.0
    %1747 = vmatpush1.msra.mxu0 0.0
    %1748 = vmatprep.mubr.f32.mxu0 0.0
    %1749 = vmatmul.mubr.f32.gmra.mrb[0].mxu0 %v1682
    %v1750 = vpop.f32.mrb[0].mxu0
    %v1751 = vadd.f32 0.0, %v1750
    %v1752 = vpop.f32.mrb[0].mxu0
    %1753 = vdwg.mxu0
    %v1755 = vrot.slane %v1751, 4
    %v1757 = vadd.f32 %v1156, %v1755
    %v1758 = vxor.u32 %v1757, 2147483648
    %v1759 = vmul.f32 %v1758, 1.442695
    %v1760 = vpow.pop %v1759
    %v1761 = vadd.f32 %v1760, 1.0
    %v1762 = vrcp.pop %v1761
    %v1763 = vmul.f32 1.0, %v1762
    %v1764 = vtanh.pop %v1757
    %v1766 = vrot.slane %v1672, 4
    %v1768 = vmul.f32 %v1763, %v1766
    %1770 = vrot.lane.b32.xlu0 %v1764, 64
    %v1771 = vpop.permute.xlu0 %1770
    %v1773 = vmul.f32 %v1763, %v1771
    %1775 = vrot.lane.b32.xlu0 %v1773, 32
    %v1776 = vpop.permute.xlu0 %1775
    %v1778 = vadd.f32 %v1768, %v1776
    %v1779 = vtanh.pop %v1778
    %1781 = vrot.lane.b32.xlu0 %v1779, 64
    %v1782 = vpop.permute.xlu0 %1781
    %v1784 = vmul.f32 %v1763, %v1782
    %v1786 = vrot.slane %v1784, 4
    %1787 = vrot.lane.b32.xlu0 %v1786, 32
    %v1788 = vpop.permute.xlu0 %1787
    %v1789 = vsel %vm105, %v1788, 0
    %1791 = vmatprep.subr.mxu0 0.0
    %1792 = vmatpush1.msra.mxu0 %v1043
    %1793 = vmatprep.subr.mxu0 0.0
    %1794 = vmatpush1.msra.mxu0 %v1044
    %1795 = vmatprep.subr.mxu0 0.0
    %1796 = vmatpush1.msra.mxu0 %v1045
    %1797 = vmatprep.subr.mxu0 0.0
    %1798 = vmatpush1.msra.mxu0 %v1046
    %1799 = vmatprep.subr.mxu0 0.0
    %1800 = vmatpush1.msra.mxu0 0.0
    %1801 = vmatprep.subr.mxu0 0.0
    %1802 = vmatpush1.msra.mxu0 0.0
    %1803 = vmatprep.subr.mxu0 0.0
    %1804 = vmatpush1.msra.mxu0 0.0
    %1805 = vmatprep.subr.mxu0 0.0
    %1806 = vmatpush1.msra.mxu0 0.0
    %1807 = vmatprep.subr.mxu0 0.0
    %1808 = vmatpush1.msra.mxu0 0.0
    %1809 = vmatprep.subr.mxu0 0.0
    %1810 = vmatpush1.msra.mxu0 0.0
    %1811 = vmatprep.subr.mxu0 0.0
    %1812 = vmatpush1.msra.mxu0 0.0
    %1813 = vmatprep.subr.mxu0 0.0
    %1814 = vmatpush1.msra.mxu0 0.0
    %1815 = vmatprep.subr.mxu0 0.0
    %1816 = vmatpush1.msra.mxu0 0.0
    %1817 = vmatprep.subr.mxu0 0.0
    %1818 = vmatpush1.msra.mxu0 0.0
    %1819 = vmatprep.subr.mxu0 0.0
    %1820 = vmatpush1.msra.mxu0 0.0
    %1821 = vmatprep.subr.mxu0 0.0
    %1822 = vmatpush1.msra.mxu0 0.0
    %1823 = vmatprep.subr.mxu0 0.0
    %1824 = vmatpush1.msra.mxu0 0.0
    %1825 = vmatprep.subr.mxu0 0.0
    %1826 = vmatpush1.msra.mxu0 0.0
    %1827 = vmatprep.subr.mxu0 0.0
    %1828 = vmatpush1.msra.mxu0 0.0
    %1829 = vmatprep.subr.mxu0 0.0
    %1830 = vmatpush1.msra.mxu0 0.0
    %1831 = vmatprep.subr.mxu0 0.0
    %1832 = vmatpush1.msra.mxu0 0.0
    %1833 = vmatprep.subr.mxu0 0.0
    %1834 = vmatpush1.msra.mxu0 0.0
    %1835 = vmatprep.subr.mxu0 0.0
    %1836 = vmatpush1.msra.mxu0 0.0
    %1837 = vmatprep.subr.mxu0 0.0
    %1838 = vmatpush1.msra.mxu0 0.0
    %1839 = vmatprep.subr.mxu0 0.0
    %1840 = vmatpush1.msra.mxu0 0.0
    %1841 = vmatprep.subr.mxu0 0.0
    %1842 = vmatpush1.msra.mxu0 0.0
    %1843 = vmatprep.subr.mxu0 0.0
    %1844 = vmatpush1.msra.mxu0 0.0
    %1845 = vmatprep.subr.mxu0 0.0
    %1846 = vmatpush1.msra.mxu0 0.0
    %1847 = vmatprep.subr.mxu0 0.0
    %1848 = vmatpush1.msra.mxu0 0.0
    %1849 = vmatprep.subr.mxu0 0.0
    %1850 = vmatpush1.msra.mxu0 0.0
    %1851 = vmatprep.subr.mxu0 0.0
    %1852 = vmatpush1.msra.mxu0 0.0
    %1853 = vmatprep.subr.mxu0 0.0
    %1854 = vmatpush1.msra.mxu0 0.0
    %1855 = vmatprep.mubr.f32.mxu0 0.0
    %1856 = vmatmul.mubr.f32.gmra.mrb[0].mxu0 %v1789
    %v1857 = vpop.f32.mrb[0].mxu0
    %v1858 = vadd.f32 0.0, %v1857
    %v1859 = vpop.f32.mrb[0].mxu0
    %1860 = vdwg.mxu0
    %v1861 = vadd.f32 %v1161, %v1858
    %v1862 = vxor.u32 %v1861, 2147483648
    %v1863 = vmul.f32 %v1862, 1.442695
    %v1864 = vpow.pop %v1863
    %v1865 = vadd.f32 %v1864, 1.0
    %v1866 = vrcp.pop %v1865
    %v1867 = vmul.f32 1.0, %v1866
    %v1868 = vtanh.pop %v1861
    %v1870 = vrot.slane %v1778, 4
    %v1872 = vmul.f32 %v1867, %v1870
    %1874 = vrot.lane.b32.xlu0 %v1868, 64
    %v1875 = vpop.permute.xlu0 %1874
    %v1877 = vmul.f32 %v1867, %v1875
    %1879 = vrot.lane.b32.xlu0 %v1877, 32
    %v1880 = vpop.permute.xlu0 %1879
    %v1882 = vadd.f32 %v1872, %v1880
    %v1883 = vtanh.pop %v1882
    %1885 = vrot.lane.b32.xlu0 %v1883, 64
    %v1886 = vpop.permute.xlu0 %1885
    %v1888 = vmul.f32 %v1867, %v1886
    %1890 = vrot.lane.b32.xlu0 %v1888, 32
    %v1891 = vpop.permute.xlu0 %1890
    %v1892 = vsel %vm105, %v1891, 0
    %1894 = vmatprep.subr.mxu0 0.0
    %1895 = vmatpush1.msra.mxu0 %v1043
    %1896 = vmatprep.subr.mxu0 0.0
    %1897 = vmatpush1.msra.mxu0 %v1044
    %1898 = vmatprep.subr.mxu0 0.0
    %1899 = vmatpush1.msra.mxu0 %v1045
    %1900 = vmatprep.subr.mxu0 0.0
    %1901 = vmatpush1.msra.mxu0 %v1046
    %1902 = vmatprep.subr.mxu0 0.0
    %1903 = vmatpush1.msra.mxu0 0.0
    %1904 = vmatprep.subr.mxu0 0.0
    %1905 = vmatpush1.msra.mxu0 0.0
    %1906 = vmatprep.subr.mxu0 0.0
    %1907 = vmatpush1.msra.mxu0 0.0
    %1908 = vmatprep.subr.mxu0 0.0
    %1909 = vmatpush1.msra.mxu0 0.0
    %1910 = vmatprep.subr.mxu0 0.0
    %1911 = vmatpush1.msra.mxu0 0.0
    %1912 = vmatprep.subr.mxu0 0.0
    %1913 = vmatpush1.msra.mxu0 0.0
    %1914 = vmatprep.subr.mxu0 0.0
    %1915 = vmatpush1.msra.mxu0 0.0
    %1916 = vmatprep.subr.mxu0 0.0
    %1917 = vmatpush1.msra.mxu0 0.0
    %1918 = vmatprep.subr.mxu0 0.0
    %1919 = vmatpush1.msra.mxu0 0.0
    %1920 = vmatprep.subr.mxu0 0.0
    %1921 = vmatpush1.msra.mxu0 0.0
    %1922 = vmatprep.subr.mxu0 0.0
    %1923 = vmatpush1.msra.mxu0 0.0
    %1924 = vmatprep.subr.mxu0 0.0
    %1925 = vmatpush1.msra.mxu0 0.0
    %1926 = vmatprep.subr.mxu0 0.0
    %1927 = vmatpush1.msra.mxu0 0.0
    %1928 = vmatprep.subr.mxu0 0.0
    %1929 = vmatpush1.msra.mxu0 0.0
    %1930 = vmatprep.subr.mxu0 0.0
    %1931 = vmatpush1.msra.mxu0 0.0
    %1932 = vmatprep.subr.mxu0 0.0
    %1933 = vmatpush1.msra.mxu0 0.0
    %1934 = vmatprep.subr.mxu0 0.0
    %1935 = vmatpush1.msra.mxu0 0.0
    %1936 = vmatprep.subr.mxu0 0.0
    %1937 = vmatpush1.msra.mxu0 0.0
    %1938 = vmatprep.subr.mxu0 0.0
    %1939 = vmatpush1.msra.mxu0 0.0
    %1940 = vmatprep.subr.mxu0 0.0
    %1941 = vmatpush1.msra.mxu0 0.0
    %1942 = vmatprep.subr.mxu0 0.0
    %1943 = vmatpush1.msra.mxu0 0.0
    %1944 = vmatprep.subr.mxu0 0.0
    %1945 = vmatpush1.msra.mxu0 0.0
    %1946 = vmatprep.subr.mxu0 0.0
    %1947 = vmatpush1.msra.mxu0 0.0
    %1948 = vmatprep.subr.mxu0 0.0
    %1949 = vmatpush1.msra.mxu0 0.0
    %1950 = vmatprep.subr.mxu0 0.0
    %1951 = vmatpush1.msra.mxu0 0.0
    %1952 = vmatprep.subr.mxu0 0.0
    %1953 = vmatpush1.msra.mxu0 0.0
    %1954 = vmatprep.subr.mxu0 0.0
    %1955 = vmatpush1.msra.mxu0 0.0
    %1956 = vmatprep.subr.mxu0 0.0
    %1957 = vmatpush1.msra.mxu0 0.0
    %1958 = vmatprep.mubr.f32.mxu0 0.0
    %1959 = vmatmul.mubr.f32.gmra.mrb[0].mxu0 %v1892
    %v1960 = vpop.f32.mrb[0].mxu0
    %v1961 = vadd.f32 0.0, %v1960
    %v1962 = vpop.f32.mrb[0].mxu0
    %1963 = vdwg.mxu0
    %v1965 = vrot.slane %v1961, 4
    %v1967 = vadd.f32 %v1161, %v1965
    %v1968 = vxor.u32 %v1967, 2147483648
    %v1969 = vmul.f32 %v1968, 1.442695
    %v1970 = vpow.pop %v1969
    %v1971 = vadd.f32 %v1970, 1.0
    %v1972 = vrcp.pop %v1971
    %v1973 = vmul.f32 1.0, %v1972
    %v1974 = vtanh.pop %v1967
    %v1976 = vrot.slane %v1882, 4
    %v1978 = vmul.f32 %v1973, %v1976
    %1980 = vrot.lane.b32.xlu0 %v1974, 64
    %v1981 = vpop.permute.xlu0 %1980
    %v1983 = vmul.f32 %v1973, %v1981
    %1985 = vrot.lane.b32.xlu0 %v1983, 32
    %v1986 = vpop.permute.xlu0 %1985
    %v1988 = vadd.f32 %v1978, %v1986
    %v1989 = vtanh.pop %v1988
    %1991 = vrot.lane.b32.xlu0 %v1989, 64
    %v1992 = vpop.permute.xlu0 %1991
    %v1994 = vmul.f32 %v1973, %v1992
    %s1995 = scalar_lea.vmem [#allocation2], 64
    %v1996 = vld [vmem:[%s1995] sm:$0xff]
    %v1997 = vld [vmem:[%s1995 + $0x8] sm:$0xff]
    %v1998 = vld [vmem:[%s1995 + $0x10] sm:$0xff]
    %v1999 = vld [vmem:[%s1995 + $0x18] sm:$0xff]
    %s2000 = scalar_lea.vmem [#allocation5], 64
    %v2001 = vld [vmem:[%s2000] sm:$0xff]
    %v2002 = vld [vmem:[%s2000 + $0x8] sm:$0xff]
    %v2003 = vld [vmem:[%s2000 + $0x10] sm:$0xff]
    %v2004 = vld [vmem:[%s2000 + $0x18] sm:$0xff]
    %s2005 = scalar_lea.vmem %s4, 2
    %v2006 = vld [vmem:[%s2005] sm:$0x1]
    %v2007 = vsel %vm94, %v1258, %v1364
    %v2008 = vsel %vm94, %v1468, %v1574
    %v2009 = vsel %vm94, %v1678, %v1784
    %v2010 = vsel %vm94, %v1888, %v1994
    %v2012 = vlaneseq
    %v2013 = vshrl.u32 %v2012, 7
    %v2014 = vsub.s32 0, %v2013
    %v2015 = vrot.slane %v2006, %v2014
    %2021 = vrot.lane.b32.xlu0 %v2007, 32
    %v2022 = vpop.permute.xlu0 %2021
    %2023 = vrot.lane.b32.xlu0 %v2008, 32
    %v2024 = vpop.permute.xlu0 %2023
    %2025 = vrot.lane.b32.xlu0 %v2009, 32
    %v2026 = vpop.permute.xlu0 %2025
    %2027 = vrot.lane.b32.xlu0 %v2010, 32
    %v2028 = vpop.permute.xlu0 %2027
    %v2029 = vsel %vm105, %v2022, 0
    %v2031 = vsel %vm105, %v2024, 0
    %v2033 = vsel %vm105, %v2026, 0
    %v2035 = vsel %vm105, %v2028, 0
    %2037 = vmatprep.subr.mxu0 0.0
    %2038 = vmatpush1.msra.mxu0 %v1996
    %2039 = vmatprep.subr.mxu0 0.0
    %2040 = vmatpush1.msra.mxu0 %v1997
    %2041 = vmatprep.subr.mxu0 0.0
    %2042 = vmatpush1.msra.mxu0 %v1998
    %2043 = vmatprep.subr.mxu0 0.0
    %2044 = vmatpush1.msra.mxu0 %v1999
    %2045 = vmatprep.subr.mxu0 0.0
    %2046 = vmatpush1.msra.mxu0 0.0
    %2047 = vmatprep.subr.mxu0 0.0
    %2048 = vmatpush1.msra.mxu0 0.0
    %2049 = vmatprep.subr.mxu0 0.0
    %2050 = vmatpush1.msra.mxu0 0.0
    %2051 = vmatprep.subr.mxu0 0.0
    %2052 = vmatpush1.msra.mxu0 0.0
    %2053 = vmatprep.subr.mxu0 0.0
    %2054 = vmatpush1.msra.mxu0 0.0
    %2055 = vmatprep.subr.mxu0 0.0
    %2056 = vmatpush1.msra.mxu0 0.0
    %2057 = vmatprep.subr.mxu0 0.0
    %2058 = vmatpush1.msra.mxu0 0.0
    %2059 = vmatprep.subr.mxu0 0.0
    %2060 = vmatpush1.msra.mxu0 0.0
    %2061 = vmatprep.subr.mxu0 0.0
    %2062 = vmatpush1.msra.mxu0 0.0
    %2063 = vmatprep.subr.mxu0 0.0
    %2064 = vmatpush1.msra.mxu0 0.0
    %2065 = vmatprep.subr.mxu0 0.0
    %2066 = vmatpush1.msra.mxu0 0.0
    %2067 = vmatprep.subr.mxu0 0.0
    %2068 = vmatpush1.msra.mxu0 0.0
    %2069 = vmatprep.subr.mxu0 0.0
    %2070 = vmatpush1.msra.mxu0 0.0
    %2071 = vmatprep.subr.mxu0 0.0
    %2072 = vmatpush1.msra.mxu0 0.0
    %2073 = vmatprep.subr.mxu0 0.0
    %2074 = vmatpush1.msra.mxu0 0.0
    %2075 = vmatprep.subr.mxu0 0.0
    %2076 = vmatpush1.msra.mxu0 0.0
    %2077 = vmatprep.subr.mxu0 0.0
    %2078 = vmatpush1.msra.mxu0 0.0
    %2079 = vmatprep.subr.mxu0 0.0
    %2080 = vmatpush1.msra.mxu0 0.0
    %2081 = vmatprep.subr.mxu0 0.0
    %2082 = vmatpush1.msra.mxu0 0.0
    %2083 = vmatprep.subr.mxu0 0.0
    %2084 = vmatpush1.msra.mxu0 0.0
    %2085 = vmatprep.subr.mxu0 0.0
    %2086 = vmatpush1.msra.mxu0 0.0
    %2087 = vmatprep.subr.mxu0 0.0
    %2088 = vmatpush1.msra.mxu0 0.0
    %2089 = vmatprep.subr.mxu0 0.0
    %2090 = vmatpush1.msra.mxu0 0.0
    %2091 = vmatprep.subr.mxu0 0.0
    %2092 = vmatpush1.msra.mxu0 0.0
    %2093 = vmatprep.subr.mxu0 0.0
    %2094 = vmatpush1.msra.mxu0 0.0
    %2095 = vmatprep.subr.mxu0 0.0
    %2096 = vmatpush1.msra.mxu0 0.0
    %2097 = vmatprep.subr.mxu0 0.0
    %2098 = vmatpush1.msra.mxu0 0.0
    %2099 = vmatprep.subr.mxu0 0.0
    %2100 = vmatpush1.msra.mxu0 0.0
    %2101 = vmatprep.mubr.f32.mxu0 0.0
    %2102 = vmatmul.mubr.f32.gmra.mrb[0].mxu0 %v2029
    %v2103 = vpop.f32.mrb[0].mxu0
    %v2104 = vadd.f32 %v2015, %v2103
    %v2105 = vpop.f32.mrb[0].mxu0
    %2106 = vmatprep.mubr.f32.mxu0 0.0
    %2107 = vmatmul.mubr.f32.gmra.mrb[0].mxu0 %v2031
    %v2108 = vpop.f32.mrb[0].mxu0
    %v2109 = vadd.f32 %v2015, %v2108
    %v2110 = vpop.f32.mrb[0].mxu0
    %2111 = vmatprep.mubr.f32.mxu0 0.0
    %2112 = vmatmul.mubr.f32.gmra.mrb[0].mxu0 %v2033
    %v2113 = vpop.f32.mrb[0].mxu0
    %v2114 = vadd.f32 %v2015, %v2113
    %v2115 = vpop.f32.mrb[0].mxu0
    %2116 = vmatprep.mubr.f32.mxu0 0.0
    %2117 = vmatmul.mubr.f32.gmra.mrb[0].mxu0 %v2035
    %v2118 = vpop.f32.mrb[0].mxu0
    %v2119 = vadd.f32 %v2015, %v2118
    %v2120 = vpop.f32.mrb[0].mxu0
    %2121 = vdwg.mxu0
    %2122 = vmatprep.subr.mxu0 0.0
    %2123 = vmatpush1.msra.mxu0 %v2001
    %2124 = vmatprep.subr.mxu0 0.0
    %2125 = vmatpush1.msra.mxu0 %v2002
    %2126 = vmatprep.subr.mxu0 0.0
    %2127 = vmatpush1.msra.mxu0 %v2003
    %2128 = vmatprep.subr.mxu0 0.0
    %2129 = vmatpush1.msra.mxu0 %v2004
    %2130 = vmatprep.subr.mxu0 0.0
    %2131 = vmatpush1.msra.mxu0 0.0
    %2132 = vmatprep.subr.mxu0 0.0
    %2133 = vmatpush1.msra.mxu0 0.0
    %2134 = vmatprep.subr.mxu0 0.0
    %2135 = vmatpush1.msra.mxu0 0.0
    %2136 = vmatprep.subr.mxu0 0.0
    %2137 = vmatpush1.msra.mxu0 0.0
    %2138 = vmatprep.subr.mxu0 0.0
    %2139 = vmatpush1.msra.mxu0 0.0
    %2140 = vmatprep.subr.mxu0 0.0
    %2141 = vmatpush1.msra.mxu0 0.0
    %2142 = vmatprep.subr.mxu0 0.0
    %2143 = vmatpush1.msra.mxu0 0.0
    %2144 = vmatprep.subr.mxu0 0.0
    %2145 = vmatpush1.msra.mxu0 0.0
    %2146 = vmatprep.subr.mxu0 0.0
    %2147 = vmatpush1.msra.mxu0 0.0
    %2148 = vmatprep.subr.mxu0 0.0
    %2149 = vmatpush1.msra.mxu0 0.0
    %2150 = vmatprep.subr.mxu0 0.0
    %2151 = vmatpush1.msra.mxu0 0.0
    %2152 = vmatprep.subr.mxu0 0.0
    %2153 = vmatpush1.msra.mxu0 0.0
    %2154 = vmatprep.subr.mxu0 0.0
    %2155 = vmatpush1.msra.mxu0 0.0
    %2156 = vmatprep.subr.mxu0 0.0
    %2157 = vmatpush1.msra.mxu0 0.0
    %2158 = vmatprep.subr.mxu0 0.0
    %2159 = vmatpush1.msra.mxu0 0.0
    %2160 = vmatprep.subr.mxu0 0.0
    %2161 = vmatpush1.msra.mxu0 0.0
    %2162 = vmatprep.subr.mxu0 0.0
    %2163 = vmatpush1.msra.mxu0 0.0
    %2164 = vmatprep.subr.mxu0 0.0
    %2165 = vmatpush1.msra.mxu0 0.0
    %2166 = vmatprep.subr.mxu0 0.0
    %2167 = vmatpush1.msra.mxu0 0.0
    %2168 = vmatprep.subr.mxu0 0.0
    %2169 = vmatpush1.msra.mxu0 0.0
    %2170 = vmatprep.subr.mxu0 0.0
    %2171 = vmatpush1.msra.mxu0 0.0
    %2172 = vmatprep.subr.mxu0 0.0
    %2173 = vmatpush1.msra.mxu0 0.0
    %2174 = vmatprep.subr.mxu0 0.0
    %2175 = vmatpush1.msra.mxu0 0.0
    %2176 = vmatprep.subr.mxu0 0.0
    %2177 = vmatpush1.msra.mxu0 0.0
    %2178 = vmatprep.subr.mxu0 0.0
    %2179 = vmatpush1.msra.mxu0 0.0
    %2180 = vmatprep.subr.mxu0 0.0
    %2181 = vmatpush1.msra.mxu0 0.0
    %2182 = vmatprep.subr.mxu0 0.0
    %2183 = vmatpush1.msra.mxu0 0.0
    %2184 = vmatprep.subr.mxu0 0.0
    %2185 = vmatpush1.msra.mxu0 0.0
    %2186 = vmatprep.mubr.f32.mxu0 0.0
    %2187 = vmatmul.mubr.f32.gmra.mrb[0].mxu0 %v204
    %v2188 = vpop.f32.mrb[0].mxu0
    %v2189 = vadd.f32 0.0, %v2188
    %v2190 = vpop.f32.mrb[0].mxu0
    %2191 = vdwg.mxu0
    %v2192 = vadd.f32 %v2104, %v2189
    %v2193 = vxor.u32 %v2192, 2147483648
    %v2194 = vmul.f32 %v2193, 1.442695
    %v2195 = vpow.pop %v2194
    %v2196 = vadd.f32 %v2195, 1.0
    %v2197 = vrcp.pop %v2196
    %v2198 = vmul.f32 1.0, %v2197
    %v2199 = vtanh.pop %v2192
    %v2200 = vmul.f32 %v2198, 0.0
    %2202 = vrot.lane.b32.xlu0 %v2199, 64
    %v2203 = vpop.permute.xlu0 %2202
    %v2205 = vmul.f32 %v2198, %v2203
    %2207 = vrot.lane.b32.xlu0 %v2205, 32
    %v2208 = vpop.permute.xlu0 %2207
    %v2210 = vadd.f32 %v2200, %v2208
    %v2211 = vtanh.pop %v2210
    %2213 = vrot.lane.b32.xlu0 %v2211, 64
    %v2214 = vpop.permute.xlu0 %2213
    %v2216 = vmul.f32 %v2198, %v2214
    %2218 = vrot.lane.b32.xlu0 %v2216, 32
    %v2219 = vpop.permute.xlu0 %2218
    %v2220 = vsel %vm105, %v2219, 0
    %2222 = vmatprep.subr.mxu0 0.0
    %2223 = vmatpush1.msra.mxu0 %v2001
    %2224 = vmatprep.subr.mxu0 0.0
    %2225 = vmatpush1.msra.mxu0 %v2002
    %2226 = vmatprep.subr.mxu0 0.0
    %2227 = vmatpush1.msra.mxu0 %v2003
    %2228 = vmatprep.subr.mxu0 0.0
    %2229 = vmatpush1.msra.mxu0 %v2004
    %2230 = vmatprep.subr.mxu0 0.0
    %2231 = vmatpush1.msra.mxu0 0.0
    %2232 = vmatprep.subr.mxu0 0.0
    %2233 = vmatpush1.msra.mxu0 0.0
    %2234 = vmatprep.subr.mxu0 0.0
    %2235 = vmatpush1.msra.mxu0 0.0
    %2236 = vmatprep.subr.mxu0 0.0
    %2237 = vmatpush1.msra.mxu0 0.0
    %2238 = vmatprep.subr.mxu0 0.0
    %2239 = vmatpush1.msra.mxu0 0.0
    %2240 = vmatprep.subr.mxu0 0.0
    %2241 = vmatpush1.msra.mxu0 0.0
    %2242 = vmatprep.subr.mxu0 0.0
    %2243 = vmatpush1.msra.mxu0 0.0
    %2244 = vmatprep.subr.mxu0 0.0
    %2245 = vmatpush1.msra.mxu0 0.0
    %2246 = vmatprep.subr.mxu0 0.0
    %2247 = vmatpush1.msra.mxu0 0.0
    %2248 = vmatprep.subr.mxu0 0.0
    %2249 = vmatpush1.msra.mxu0 0.0
    %2250 = vmatprep.subr.mxu0 0.0
    %2251 = vmatpush1.msra.mxu0 0.0
    %2252 = vmatprep.subr.mxu0 0.0
    %2253 = vmatpush1.msra.mxu0 0.0
    %2254 = vmatprep.subr.mxu0 0.0
    %2255 = vmatpush1.msra.mxu0 0.0
    %2256 = vmatprep.subr.mxu0 0.0
    %2257 = vmatpush1.msra.mxu0 0.0
    %2258 = vmatprep.subr.mxu0 0.0
    %2259 = vmatpush1.msra.mxu0 0.0
    %2260 = vmatprep.subr.mxu0 0.0
    %2261 = vmatpush1.msra.mxu0 0.0
    %2262 = vmatprep.subr.mxu0 0.0
    %2263 = vmatpush1.msra.mxu0 0.0
    %2264 = vmatprep.subr.mxu0 0.0
    %2265 = vmatpush1.msra.mxu0 0.0
    %2266 = vmatprep.subr.mxu0 0.0
    %2267 = vmatpush1.msra.mxu0 0.0
    %2268 = vmatprep.subr.mxu0 0.0
    %2269 = vmatpush1.msra.mxu0 0.0
    %2270 = vmatprep.subr.mxu0 0.0
    %2271 = vmatpush1.msra.mxu0 0.0
    %2272 = vmatprep.subr.mxu0 0.0
    %2273 = vmatpush1.msra.mxu0 0.0
    %2274 = vmatprep.subr.mxu0 0.0
    %2275 = vmatpush1.msra.mxu0 0.0
    %2276 = vmatprep.subr.mxu0 0.0
    %2277 = vmatpush1.msra.mxu0 0.0
    %2278 = vmatprep.subr.mxu0 0.0
    %2279 = vmatpush1.msra.mxu0 0.0
    %2280 = vmatprep.subr.mxu0 0.0
    %2281 = vmatpush1.msra.mxu0 0.0
    %2282 = vmatprep.subr.mxu0 0.0
    %2283 = vmatpush1.msra.mxu0 0.0
    %2284 = vmatprep.subr.mxu0 0.0
    %2285 = vmatpush1.msra.mxu0 0.0
    %2286 = vmatprep.mubr.f32.mxu0 0.0
    %2287 = vmatmul.mubr.f32.gmra.mrb[0].mxu0 %v2220
    %v2288 = vpop.f32.mrb[0].mxu0
    %v2289 = vadd.f32 0.0, %v2288
    %v2290 = vpop.f32.mrb[0].mxu0
    %2291 = vdwg.mxu0
    %v2293 = vrot.slane %v2289, 4
    %v2295 = vadd.f32 %v2104, %v2293
    %v2296 = vxor.u32 %v2295, 2147483648
    %v2297 = vmul.f32 %v2296, 1.442695
    %v2298 = vpow.pop %v2297
    %v2299 = vadd.f32 %v2298, 1.0
    %v2300 = vrcp.pop %v2299
    %v2301 = vmul.f32 1.0, %v2300
    %v2302 = vtanh.pop %v2295
    %v2304 = vrot.slane %v2210, 4
    %v2306 = vmul.f32 %v2301, %v2304
    %2308 = vrot.lane.b32.xlu0 %v2302, 64
    %v2309 = vpop.permute.xlu0 %2308
    %v2311 = vmul.f32 %v2301, %v2309
    %2313 = vrot.lane.b32.xlu0 %v2311, 32
    %v2314 = vpop.permute.xlu0 %2313
    %v2316 = vadd.f32 %v2306, %v2314
    %v2317 = vtanh.pop %v2316
    %2319 = vrot.lane.b32.xlu0 %v2317, 64
    %v2320 = vpop.permute.xlu0 %2319
    %v2322 = vmul.f32 %v2301, %v2320
    %v2324 = vrot.slane %v2322, 4
    %2325 = vrot.lane.b32.xlu0 %v2324, 32
    %v2326 = vpop.permute.xlu0 %2325
    %v2327 = vsel %vm105, %v2326, 0
    %2329 = vmatprep.subr.mxu0 0.0
    %2330 = vmatpush1.msra.mxu0 %v2001
    %2331 = vmatprep.subr.mxu0 0.0
    %2332 = vmatpush1.msra.mxu0 %v2002
    %2333 = vmatprep.subr.mxu0 0.0
    %2334 = vmatpush1.msra.mxu0 %v2003
    %2335 = vmatprep.subr.mxu0 0.0
    %2336 = vmatpush1.msra.mxu0 %v2004
    %2337 = vmatprep.subr.mxu0 0.0
    %2338 = vmatpush1.msra.mxu0 0.0
    %2339 = vmatprep.subr.mxu0 0.0
    %2340 = vmatpush1.msra.mxu0 0.0
    %2341 = vmatprep.subr.mxu0 0.0
    %2342 = vmatpush1.msra.mxu0 0.0
    %2343 = vmatprep.subr.mxu0 0.0
    %2344 = vmatpush1.msra.mxu0 0.0
    %2345 = vmatprep.subr.mxu0 0.0
    %2346 = vmatpush1.msra.mxu0 0.0
    %2347 = vmatprep.subr.mxu0 0.0
    %2348 = vmatpush1.msra.mxu0 0.0
    %2349 = vmatprep.subr.mxu0 0.0
    %2350 = vmatpush1.msra.mxu0 0.0
    %2351 = vmatprep.subr.mxu0 0.0
    %2352 = vmatpush1.msra.mxu0 0.0
    %2353 = vmatprep.subr.mxu0 0.0
    %2354 = vmatpush1.msra.mxu0 0.0
    %2355 = vmatprep.subr.mxu0 0.0
    %2356 = vmatpush1.msra.mxu0 0.0
    %2357 = vmatprep.subr.mxu0 0.0
    %2358 = vmatpush1.msra.mxu0 0.0
    %2359 = vmatprep.subr.mxu0 0.0
    %2360 = vmatpush1.msra.mxu0 0.0
    %2361 = vmatprep.subr.mxu0 0.0
    %2362 = vmatpush1.msra.mxu0 0.0
    %2363 = vmatprep.subr.mxu0 0.0
    %2364 = vmatpush1.msra.mxu0 0.0
    %2365 = vmatprep.subr.mxu0 0.0
    %2366 = vmatpush1.msra.mxu0 0.0
    %2367 = vmatprep.subr.mxu0 0.0
    %2368 = vmatpush1.msra.mxu0 0.0
    %2369 = vmatprep.subr.mxu0 0.0
    %2370 = vmatpush1.msra.mxu0 0.0
    %2371 = vmatprep.subr.mxu0 0.0
    %2372 = vmatpush1.msra.mxu0 0.0
    %2373 = vmatprep.subr.mxu0 0.0
    %2374 = vmatpush1.msra.mxu0 0.0
    %2375 = vmatprep.subr.mxu0 0.0
    %2376 = vmatpush1.msra.mxu0 0.0
    %2377 = vmatprep.subr.mxu0 0.0
    %2378 = vmatpush1.msra.mxu0 0.0
    %2379 = vmatprep.subr.mxu0 0.0
    %2380 = vmatpush1.msra.mxu0 0.0
    %2381 = vmatprep.subr.mxu0 0.0
    %2382 = vmatpush1.msra.mxu0 0.0
    %2383 = vmatprep.subr.mxu0 0.0
    %2384 = vmatpush1.msra.mxu0 0.0
    %2385 = vmatprep.subr.mxu0 0.0
    %2386 = vmatpush1.msra.mxu0 0.0
    %2387 = vmatprep.subr.mxu0 0.0
    %2388 = vmatpush1.msra.mxu0 0.0
    %2389 = vmatprep.subr.mxu0 0.0
    %2390 = vmatpush1.msra.mxu0 0.0
    %2391 = vmatprep.subr.mxu0 0.0
    %2392 = vmatpush1.msra.mxu0 0.0
    %2393 = vmatprep.mubr.f32.mxu0 0.0
    %2394 = vmatmul.mubr.f32.gmra.mrb[0].mxu0 %v2327
    %v2395 = vpop.f32.mrb[0].mxu0
    %v2396 = vadd.f32 0.0, %v2395
    %v2397 = vpop.f32.mrb[0].mxu0
    %2398 = vdwg.mxu0
    %v2399 = vadd.f32 %v2109, %v2396
    %v2400 = vxor.u32 %v2399, 2147483648
    %v2401 = vmul.f32 %v2400, 1.442695
    %v2402 = vpow.pop %v2401
    %v2403 = vadd.f32 %v2402, 1.0
    %v2404 = vrcp.pop %v2403
    %v2405 = vmul.f32 1.0, %v2404
    %v2406 = vtanh.pop %v2399
    %v2408 = vrot.slane %v2316, 4
    %v2410 = vmul.f32 %v2405, %v2408
    %2412 = vrot.lane.b32.xlu0 %v2406, 64
    %v2413 = vpop.permute.xlu0 %2412
    %v2415 = vmul.f32 %v2405, %v2413
    %2417 = vrot.lane.b32.xlu0 %v2415, 32
    %v2418 = vpop.permute.xlu0 %2417
    %v2420 = vadd.f32 %v2410, %v2418
    %v2421 = vtanh.pop %v2420
    %2423 = vrot.lane.b32.xlu0 %v2421, 64
    %v2424 = vpop.permute.xlu0 %2423
    %v2426 = vmul.f32 %v2405, %v2424
    %2428 = vrot.lane.b32.xlu0 %v2426, 32
    %v2429 = vpop.permute.xlu0 %2428
    %v2430 = vsel %vm105, %v2429, 0
    %2432 = vmatprep.subr.mxu0 0.0
    %2433 = vmatpush1.msra.mxu0 %v2001
    %2434 = vmatprep.subr.mxu0 0.0
    %2435 = vmatpush1.msra.mxu0 %v2002
    %2436 = vmatprep.subr.mxu0 0.0
    %2437 = vmatpush1.msra.mxu0 %v2003
    %2438 = vmatprep.subr.mxu0 0.0
    %2439 = vmatpush1.msra.mxu0 %v2004
    %2440 = vmatprep.subr.mxu0 0.0
    %2441 = vmatpush1.msra.mxu0 0.0
    %2442 = vmatprep.subr.mxu0 0.0
    %2443 = vmatpush1.msra.mxu0 0.0
    %2444 = vmatprep.subr.mxu0 0.0
    %2445 = vmatpush1.msra.mxu0 0.0
    %2446 = vmatprep.subr.mxu0 0.0
    %2447 = vmatpush1.msra.mxu0 0.0
    %2448 = vmatprep.subr.mxu0 0.0
    %2449 = vmatpush1.msra.mxu0 0.0
    %2450 = vmatprep.subr.mxu0 0.0
    %2451 = vmatpush1.msra.mxu0 0.0
    %2452 = vmatprep.subr.mxu0 0.0
    %2453 = vmatpush1.msra.mxu0 0.0
    %2454 = vmatprep.subr.mxu0 0.0
    %2455 = vmatpush1.msra.mxu0 0.0
    %2456 = vmatprep.subr.mxu0 0.0
    %2457 = vmatpush1.msra.mxu0 0.0
    %2458 = vmatprep.subr.mxu0 0.0
    %2459 = vmatpush1.msra.mxu0 0.0
    %2460 = vmatprep.subr.mxu0 0.0
    %2461 = vmatpush1.msra.mxu0 0.0
    %2462 = vmatprep.subr.mxu0 0.0
    %2463 = vmatpush1.msra.mxu0 0.0
    %2464 = vmatprep.subr.mxu0 0.0
    %2465 = vmatpush1.msra.mxu0 0.0
    %2466 = vmatprep.subr.mxu0 0.0
    %2467 = vmatpush1.msra.mxu0 0.0
    %2468 = vmatprep.subr.mxu0 0.0
    %2469 = vmatpush1.msra.mxu0 0.0
    %2470 = vmatprep.subr.mxu0 0.0
    %2471 = vmatpush1.msra.mxu0 0.0
    %2472 = vmatprep.subr.mxu0 0.0
    %2473 = vmatpush1.msra.mxu0 0.0
    %2474 = vmatprep.subr.mxu0 0.0
    %2475 = vmatpush1.msra.mxu0 0.0
    %2476 = vmatprep.subr.mxu0 0.0
    %2477 = vmatpush1.msra.mxu0 0.0
    %2478 = vmatprep.subr.mxu0 0.0
    %2479 = vmatpush1.msra.mxu0 0.0
    %2480 = vmatprep.subr.mxu0 0.0
    %2481 = vmatpush1.msra.mxu0 0.0
    %2482 = vmatprep.subr.mxu0 0.0
    %2483 = vmatpush1.msra.mxu0 0.0
    %2484 = vmatprep.subr.mxu0 0.0
    %2485 = vmatpush1.msra.mxu0 0.0
    %2486 = vmatprep.subr.mxu0 0.0
    %2487 = vmatpush1.msra.mxu0 0.0
    %2488 = vmatprep.subr.mxu0 0.0
    %2489 = vmatpush1.msra.mxu0 0.0
    %2490 = vmatprep.subr.mxu0 0.0
    %2491 = vmatpush1.msra.mxu0 0.0
    %2492 = vmatprep.subr.mxu0 0.0
    %2493 = vmatpush1.msra.mxu0 0.0
    %2494 = vmatprep.subr.mxu0 0.0
    %2495 = vmatpush1.msra.mxu0 0.0
    %2496 = vmatprep.mubr.f32.mxu0 0.0
    %2497 = vmatmul.mubr.f32.gmra.mrb[0].mxu0 %v2430
    %v2498 = vpop.f32.mrb[0].mxu0
    %v2499 = vadd.f32 0.0, %v2498
    %v2500 = vpop.f32.mrb[0].mxu0
    %2501 = vdwg.mxu0
    %v2503 = vrot.slane %v2499, 4
    %v2505 = vadd.f32 %v2109, %v2503
    %v2506 = vxor.u32 %v2505, 2147483648
    %v2507 = vmul.f32 %v2506, 1.442695
    %v2508 = vpow.pop %v2507
    %v2509 = vadd.f32 %v2508, 1.0
    %v2510 = vrcp.pop %v2509
    %v2511 = vmul.f32 1.0, %v2510
    %v2512 = vtanh.pop %v2505
    %v2514 = vrot.slane %v2420, 4
    %v2516 = vmul.f32 %v2511, %v2514
    %2518 = vrot.lane.b32.xlu0 %v2512, 64
    %v2519 = vpop.permute.xlu0 %2518
    %v2521 = vmul.f32 %v2511, %v2519
    %2523 = vrot.lane.b32.xlu0 %v2521, 32
    %v2524 = vpop.permute.xlu0 %2523
    %v2526 = vadd.f32 %v2516, %v2524
    %v2527 = vtanh.pop %v2526
    %2529 = vrot.lane.b32.xlu0 %v2527, 64
    %v2530 = vpop.permute.xlu0 %2529
    %v2532 = vmul.f32 %v2511, %v2530
    %v2534 = vrot.slane %v2532, 4
    %2535 = vrot.lane.b32.xlu0 %v2534, 32
    %v2536 = vpop.permute.xlu0 %2535
    %v2537 = vsel %vm105, %v2536, 0
    %2539 = vmatprep.subr.mxu0 0.0
    %2540 = vmatpush1.msra.mxu0 %v2001
    %2541 = vmatprep.subr.mxu0 0.0
    %2542 = vmatpush1.msra.mxu0 %v2002
    %2543 = vmatprep.subr.mxu0 0.0
    %2544 = vmatpush1.msra.mxu0 %v2003
    %2545 = vmatprep.subr.mxu0 0.0
    %2546 = vmatpush1.msra.mxu0 %v2004
    %2547 = vmatprep.subr.mxu0 0.0
    %2548 = vmatpush1.msra.mxu0 0.0
    %2549 = vmatprep.subr.mxu0 0.0
    %2550 = vmatpush1.msra.mxu0 0.0
    %2551 = vmatprep.subr.mxu0 0.0
    %2552 = vmatpush1.msra.mxu0 0.0
    %2553 = vmatprep.subr.mxu0 0.0
    %2554 = vmatpush1.msra.mxu0 0.0
    %2555 = vmatprep.subr.mxu0 0.0
    %2556 = vmatpush1.msra.mxu0 0.0
    %2557 = vmatprep.subr.mxu0 0.0
    %2558 = vmatpush1.msra.mxu0 0.0
    %2559 = vmatprep.subr.mxu0 0.0
    %2560 = vmatpush1.msra.mxu0 0.0
    %2561 = vmatprep.subr.mxu0 0.0
    %2562 = vmatpush1.msra.mxu0 0.0
    %2563 = vmatprep.subr.mxu0 0.0
    %2564 = vmatpush1.msra.mxu0 0.0
    %2565 = vmatprep.subr.mxu0 0.0
    %2566 = vmatpush1.msra.mxu0 0.0
    %2567 = vmatprep.subr.mxu0 0.0
    %2568 = vmatpush1.msra.mxu0 0.0
    %2569 = vmatprep.subr.mxu0 0.0
    %2570 = vmatpush1.msra.mxu0 0.0
    %2571 = vmatprep.subr.mxu0 0.0
    %2572 = vmatpush1.msra.mxu0 0.0
    %2573 = vmatprep.subr.mxu0 0.0
    %2574 = vmatpush1.msra.mxu0 0.0
    %2575 = vmatprep.subr.mxu0 0.0
    %2576 = vmatpush1.msra.mxu0 0.0
    %2577 = vmatprep.subr.mxu0 0.0
    %2578 = vmatpush1.msra.mxu0 0.0
    %2579 = vmatprep.subr.mxu0 0.0
    %2580 = vmatpush1.msra.mxu0 0.0
    %2581 = vmatprep.subr.mxu0 0.0
    %2582 = vmatpush1.msra.mxu0 0.0
    %2583 = vmatprep.subr.mxu0 0.0
    %2584 = vmatpush1.msra.mxu0 0.0
    %2585 = vmatprep.subr.mxu0 0.0
    %2586 = vmatpush1.msra.mxu0 0.0
    %2587 = vmatprep.subr.mxu0 0.0
    %2588 = vmatpush1.msra.mxu0 0.0
    %2589 = vmatprep.subr.mxu0 0.0
    %2590 = vmatpush1.msra.mxu0 0.0
    %2591 = vmatprep.subr.mxu0 0.0
    %2592 = vmatpush1.msra.mxu0 0.0
    %2593 = vmatprep.subr.mxu0 0.0
    %2594 = vmatpush1.msra.mxu0 0.0
    %2595 = vmatprep.subr.mxu0 0.0
    %2596 = vmatpush1.msra.mxu0 0.0
    %2597 = vmatprep.subr.mxu0 0.0
    %2598 = vmatpush1.msra.mxu0 0.0
    %2599 = vmatprep.subr.mxu0 0.0
    %2600 = vmatpush1.msra.mxu0 0.0
    %2601 = vmatprep.subr.mxu0 0.0
    %2602 = vmatpush1.msra.mxu0 0.0
    %2603 = vmatprep.mubr.f32.mxu0 0.0
    %2604 = vmatmul.mubr.f32.gmra.mrb[0].mxu0 %v2537
    %v2605 = vpop.f32.mrb[0].mxu0
    %v2606 = vadd.f32 0.0, %v2605
    %v2607 = vpop.f32.mrb[0].mxu0
    %2608 = vdwg.mxu0
    %v2609 = vadd.f32 %v2114, %v2606
    %v2610 = vxor.u32 %v2609, 2147483648
    %v2611 = vmul.f32 %v2610, 1.442695
    %v2612 = vpow.pop %v2611
    %v2613 = vadd.f32 %v2612, 1.0
    %v2614 = vrcp.pop %v2613
    %v2615 = vmul.f32 1.0, %v2614
    %v2616 = vtanh.pop %v2609
    %v2618 = vrot.slane %v2526, 4
    %v2620 = vmul.f32 %v2615, %v2618
    %2622 = vrot.lane.b32.xlu0 %v2616, 64
    %v2623 = vpop.permute.xlu0 %2622
    %v2625 = vmul.f32 %v2615, %v2623
    %2627 = vrot.lane.b32.xlu0 %v2625, 32
    %v2628 = vpop.permute.xlu0 %2627
    %v2630 = vadd.f32 %v2620, %v2628
    %v2631 = vtanh.pop %v2630
    %2633 = vrot.lane.b32.xlu0 %v2631, 64
    %v2634 = vpop.permute.xlu0 %2633
    %v2636 = vmul.f32 %v2615, %v2634
    %2638 = vrot.lane.b32.xlu0 %v2636, 32
    %v2639 = vpop.permute.xlu0 %2638
    %v2640 = vsel %vm105, %v2639, 0
    %2642 = vmatprep.subr.mxu0 0.0
    %2643 = vmatpush1.msra.mxu0 %v2001
    %2644 = vmatprep.subr.mxu0 0.0
    %2645 = vmatpush1.msra.mxu0 %v2002
    %2646 = vmatprep.subr.mxu0 0.0
    %2647 = vmatpush1.msra.mxu0 %v2003
    %2648 = vmatprep.subr.mxu0 0.0
    %2649 = vmatpush1.msra.mxu0 %v2004
    %2650 = vmatprep.subr.mxu0 0.0
    %2651 = vmatpush1.msra.mxu0 0.0
    %2652 = vmatprep.subr.mxu0 0.0
    %2653 = vmatpush1.msra.mxu0 0.0
    %2654 = vmatprep.subr.mxu0 0.0
    %2655 = vmatpush1.msra.mxu0 0.0
    %2656 = vmatprep.subr.mxu0 0.0
    %2657 = vmatpush1.msra.mxu0 0.0
    %2658 = vmatprep.subr.mxu0 0.0
    %2659 = vmatpush1.msra.mxu0 0.0
    %2660 = vmatprep.subr.mxu0 0.0
    %2661 = vmatpush1.msra.mxu0 0.0
    %2662 = vmatprep.subr.mxu0 0.0
    %2663 = vmatpush1.msra.mxu0 0.0
    %2664 = vmatprep.subr.mxu0 0.0
    %2665 = vmatpush1.msra.mxu0 0.0
    %2666 = vmatprep.subr.mxu0 0.0
    %2667 = vmatpush1.msra.mxu0 0.0
    %2668 = vmatprep.subr.mxu0 0.0
    %2669 = vmatpush1.msra.mxu0 0.0
    %2670 = vmatprep.subr.mxu0 0.0
    %2671 = vmatpush1.msra.mxu0 0.0
    %2672 = vmatprep.subr.mxu0 0.0
    %2673 = vmatpush1.msra.mxu0 0.0
    %2674 = vmatprep.subr.mxu0 0.0
    %2675 = vmatpush1.msra.mxu0 0.0
    %2676 = vmatprep.subr.mxu0 0.0
    %2677 = vmatpush1.msra.mxu0 0.0
    %2678 = vmatprep.subr.mxu0 0.0
    %2679 = vmatpush1.msra.mxu0 0.0
    %2680 = vmatprep.subr.mxu0 0.0
    %2681 = vmatpush1.msra.mxu0 0.0
    %2682 = vmatprep.subr.mxu0 0.0
    %2683 = vmatpush1.msra.mxu0 0.0
    %2684 = vmatprep.subr.mxu0 0.0
    %2685 = vmatpush1.msra.mxu0 0.0
    %2686 = vmatprep.subr.mxu0 0.0
    %2687 = vmatpush1.msra.mxu0 0.0
    %2688 = vmatprep.subr.mxu0 0.0
    %2689 = vmatpush1.msra.mxu0 0.0
    %2690 = vmatprep.subr.mxu0 0.0
    %2691 = vmatpush1.msra.mxu0 0.0
    %2692 = vmatprep.subr.mxu0 0.0
    %2693 = vmatpush1.msra.mxu0 0.0
    %2694 = vmatprep.subr.mxu0 0.0
    %2695 = vmatpush1.msra.mxu0 0.0
    %2696 = vmatprep.subr.mxu0 0.0
    %2697 = vmatpush1.msra.mxu0 0.0
    %2698 = vmatprep.subr.mxu0 0.0
    %2699 = vmatpush1.msra.mxu0 0.0
    %2700 = vmatprep.subr.mxu0 0.0
    %2701 = vmatpush1.msra.mxu0 0.0
    %2702 = vmatprep.subr.mxu0 0.0
    %2703 = vmatpush1.msra.mxu0 0.0
    %2704 = vmatprep.subr.mxu0 0.0
    %2705 = vmatpush1.msra.mxu0 0.0
    %2706 = vmatprep.mubr.f32.mxu0 0.0
    %2707 = vmatmul.mubr.f32.gmra.mrb[0].mxu0 %v2640
    %v2708 = vpop.f32.mrb[0].mxu0
    %v2709 = vadd.f32 0.0, %v2708
    %v2710 = vpop.f32.mrb[0].mxu0
    %2711 = vdwg.mxu0
    %v2713 = vrot.slane %v2709, 4
    %v2715 = vadd.f32 %v2114, %v2713
    %v2716 = vxor.u32 %v2715, 2147483648
    %v2717 = vmul.f32 %v2716, 1.442695
    %v2718 = vpow.pop %v2717
    %v2719 = vadd.f32 %v2718, 1.0
    %v2720 = vrcp.pop %v2719
    %v2721 = vmul.f32 1.0, %v2720
    %v2722 = vtanh.pop %v2715
    %v2724 = vrot.slane %v2630, 4
    %v2726 = vmul.f32 %v2721, %v2724
    %2728 = vrot.lane.b32.xlu0 %v2722, 64
    %v2729 = vpop.permute.xlu0 %2728
    %v2731 = vmul.f32 %v2721, %v2729
    %2733 = vrot.lane.b32.xlu0 %v2731, 32
    %v2734 = vpop.permute.xlu0 %2733
    %v2736 = vadd.f32 %v2726, %v2734
    %v2737 = vtanh.pop %v2736
    %2739 = vrot.lane.b32.xlu0 %v2737, 64
    %v2740 = vpop.permute.xlu0 %2739
    %v2742 = vmul.f32 %v2721, %v2740
    %v2744 = vrot.slane %v2742, 4
    %2745 = vrot.lane.b32.xlu0 %v2744, 32
    %v2746 = vpop.permute.xlu0 %2745
    %v2747 = vsel %vm105, %v2746, 0
    %2749 = vmatprep.subr.mxu0 0.0
    %2750 = vmatpush1.msra.mxu0 %v2001
    %2751 = vmatprep.subr.mxu0 0.0
    %2752 = vmatpush1.msra.mxu0 %v2002
    %2753 = vmatprep.subr.mxu0 0.0
    %2754 = vmatpush1.msra.mxu0 %v2003
    %2755 = vmatprep.subr.mxu0 0.0
    %2756 = vmatpush1.msra.mxu0 %v2004
    %2757 = vmatprep.subr.mxu0 0.0
    %2758 = vmatpush1.msra.mxu0 0.0
    %2759 = vmatprep.subr.mxu0 0.0
    %2760 = vmatpush1.msra.mxu0 0.0
    %2761 = vmatprep.subr.mxu0 0.0
    %2762 = vmatpush1.msra.mxu0 0.0
    %2763 = vmatprep.subr.mxu0 0.0
    %2764 = vmatpush1.msra.mxu0 0.0
    %2765 = vmatprep.subr.mxu0 0.0
    %2766 = vmatpush1.msra.mxu0 0.0
    %2767 = vmatprep.subr.mxu0 0.0
    %2768 = vmatpush1.msra.mxu0 0.0
    %2769 = vmatprep.subr.mxu0 0.0
    %2770 = vmatpush1.msra.mxu0 0.0
    %2771 = vmatprep.subr.mxu0 0.0
    %2772 = vmatpush1.msra.mxu0 0.0
    %2773 = vmatprep.subr.mxu0 0.0
    %2774 = vmatpush1.msra.mxu0 0.0
    %2775 = vmatprep.subr.mxu0 0.0
    %2776 = vmatpush1.msra.mxu0 0.0
    %2777 = vmatprep.subr.mxu0 0.0
    %2778 = vmatpush1.msra.mxu0 0.0
    %2779 = vmatprep.subr.mxu0 0.0
    %2780 = vmatpush1.msra.mxu0 0.0
    %2781 = vmatprep.subr.mxu0 0.0
    %2782 = vmatpush1.msra.mxu0 0.0
    %2783 = vmatprep.subr.mxu0 0.0
    %2784 = vmatpush1.msra.mxu0 0.0
    %2785 = vmatprep.subr.mxu0 0.0
    %2786 = vmatpush1.msra.mxu0 0.0
    %2787 = vmatprep.subr.mxu0 0.0
    %2788 = vmatpush1.msra.mxu0 0.0
    %2789 = vmatprep.subr.mxu0 0.0
    %2790 = vmatpush1.msra.mxu0 0.0
    %2791 = vmatprep.subr.mxu0 0.0
    %2792 = vmatpush1.msra.mxu0 0.0
    %2793 = vmatprep.subr.mxu0 0.0
    %2794 = vmatpush1.msra.mxu0 0.0
    %2795 = vmatprep.subr.mxu0 0.0
    %2796 = vmatpush1.msra.mxu0 0.0
    %2797 = vmatprep.subr.mxu0 0.0
    %2798 = vmatpush1.msra.mxu0 0.0
    %2799 = vmatprep.subr.mxu0 0.0
    %2800 = vmatpush1.msra.mxu0 0.0
    %2801 = vmatprep.subr.mxu0 0.0
    %2802 = vmatpush1.msra.mxu0 0.0
    %2803 = vmatprep.subr.mxu0 0.0
    %2804 = vmatpush1.msra.mxu0 0.0
    %2805 = vmatprep.subr.mxu0 0.0
    %2806 = vmatpush1.msra.mxu0 0.0
    %2807 = vmatprep.subr.mxu0 0.0
    %2808 = vmatpush1.msra.mxu0 0.0
    %2809 = vmatprep.subr.mxu0 0.0
    %2810 = vmatpush1.msra.mxu0 0.0
    %2811 = vmatprep.subr.mxu0 0.0
    %2812 = vmatpush1.msra.mxu0 0.0
    %2813 = vmatprep.mubr.f32.mxu0 0.0
    %2814 = vmatmul.mubr.f32.gmra.mrb[0].mxu0 %v2747
    %v2815 = vpop.f32.mrb[0].mxu0
    %v2816 = vadd.f32 0.0, %v2815
    %v2817 = vpop.f32.mrb[0].mxu0
    %2818 = vdwg.mxu0
    %v2819 = vadd.f32 %v2119, %v2816
    %v2820 = vxor.u32 %v2819, 2147483648
    %v2821 = vmul.f32 %v2820, 1.442695
    %v2822 = vpow.pop %v2821
    %v2823 = vadd.f32 %v2822, 1.0
    %v2824 = vrcp.pop %v2823
    %v2825 = vmul.f32 1.0, %v2824
    %v2826 = vtanh.pop %v2819
    %v2828 = vrot.slane %v2736, 4
    %v2830 = vmul.f32 %v2825, %v2828
    %2832 = vrot.lane.b32.xlu0 %v2826, 64
    %v2833 = vpop.permute.xlu0 %2832
    %v2835 = vmul.f32 %v2825, %v2833
    %2837 = vrot.lane.b32.xlu0 %v2835, 32
    %v2838 = vpop.permute.xlu0 %2837
    %v2840 = vadd.f32 %v2830, %v2838
    %v2841 = vtanh.pop %v2840
    %2843 = vrot.lane.b32.xlu0 %v2841, 64
    %v2844 = vpop.permute.xlu0 %2843
    %v2846 = vmul.f32 %v2825, %v2844
    %2848 = vrot.lane.b32.xlu0 %v2846, 32
    %v2849 = vpop.permute.xlu0 %2848
    %v2850 = vsel %vm105, %v2849, 0
    %2852 = vmatprep.subr.mxu0 0.0
    %2853 = vmatpush1.msra.mxu0 %v2001
    %2854 = vmatprep.subr.mxu0 0.0
    %2855 = vmatpush1.msra.mxu0 %v2002
    %2856 = vmatprep.subr.mxu0 0.0
    %2857 = vmatpush1.msra.mxu0 %v2003
    %2858 = vmatprep.subr.mxu0 0.0
    %2859 = vmatpush1.msra.mxu0 %v2004
    %2860 = vmatprep.subr.mxu0 0.0
    %2861 = vmatpush1.msra.mxu0 0.0
    %2862 = vmatprep.subr.mxu0 0.0
    %2863 = vmatpush1.msra.mxu0 0.0
    %2864 = vmatprep.subr.mxu0 0.0
    %2865 = vmatpush1.msra.mxu0 0.0
    %2866 = vmatprep.subr.mxu0 0.0
    %2867 = vmatpush1.msra.mxu0 0.0
    %2868 = vmatprep.subr.mxu0 0.0
    %2869 = vmatpush1.msra.mxu0 0.0
    %2870 = vmatprep.subr.mxu0 0.0
    %2871 = vmatpush1.msra.mxu0 0.0
    %2872 = vmatprep.subr.mxu0 0.0
    %2873 = vmatpush1.msra.mxu0 0.0
    %2874 = vmatprep.subr.mxu0 0.0
    %2875 = vmatpush1.msra.mxu0 0.0
    %2876 = vmatprep.subr.mxu0 0.0
    %2877 = vmatpush1.msra.mxu0 0.0
    %2878 = vmatprep.subr.mxu0 0.0
    %2879 = vmatpush1.msra.mxu0 0.0
    %2880 = vmatprep.subr.mxu0 0.0
    %2881 = vmatpush1.msra.mxu0 0.0
    %2882 = vmatprep.subr.mxu0 0.0
    %2883 = vmatpush1.msra.mxu0 0.0
    %2884 = vmatprep.subr.mxu0 0.0
    %2885 = vmatpush1.msra.mxu0 0.0
    %2886 = vmatprep.subr.mxu0 0.0
    %2887 = vmatpush1.msra.mxu0 0.0
    %2888 = vmatprep.subr.mxu0 0.0
    %2889 = vmatpush1.msra.mxu0 0.0
    %2890 = vmatprep.subr.mxu0 0.0
    %2891 = vmatpush1.msra.mxu0 0.0
    %2892 = vmatprep.subr.mxu0 0.0
    %2893 = vmatpush1.msra.mxu0 0.0
    %2894 = vmatprep.subr.mxu0 0.0
    %2895 = vmatpush1.msra.mxu0 0.0
    %2896 = vmatprep.subr.mxu0 0.0
    %2897 = vmatpush1.msra.mxu0 0.0
    %2898 = vmatprep.subr.mxu0 0.0
    %2899 = vmatpush1.msra.mxu0 0.0
    %2900 = vmatprep.subr.mxu0 0.0
    %2901 = vmatpush1.msra.mxu0 0.0
    %2902 = vmatprep.subr.mxu0 0.0
    %2903 = vmatpush1.msra.mxu0 0.0
    %2904 = vmatprep.subr.mxu0 0.0
    %2905 = vmatpush1.msra.mxu0 0.0
    %2906 = vmatprep.subr.mxu0 0.0
    %2907 = vmatpush1.msra.mxu0 0.0
    %2908 = vmatprep.subr.mxu0 0.0
    %2909 = vmatpush1.msra.mxu0 0.0
    %2910 = vmatprep.subr.mxu0 0.0
    %2911 = vmatpush1.msra.mxu0 0.0
    %2912 = vmatprep.subr.mxu0 0.0
    %2913 = vmatpush1.msra.mxu0 0.0
    %2914 = vmatprep.subr.mxu0 0.0
    %2915 = vmatpush1.msra.mxu0 0.0
    %2916 = vmatprep.mubr.f32.mxu0 0.0
    %2917 = vmatmul.mubr.f32.gmra.mrb[0].mxu0 %v2850
    %v2918 = vpop.f32.mrb[0].mxu0
    %v2919 = vadd.f32 0.0, %v2918
    %v2920 = vpop.f32.mrb[0].mxu0
    %2921 = vdwg.mxu0
    %v2923 = vrot.slane %v2919, 4
    %v2925 = vadd.f32 %v2119, %v2923
    %v2926 = vxor.u32 %v2925, 2147483648
    %v2927 = vmul.f32 %v2926, 1.442695
    %v2928 = vpow.pop %v2927
    %v2929 = vadd.f32 %v2928, 1.0
    %v2930 = vrcp.pop %v2929
    %v2931 = vmul.f32 1.0, %v2930
    %v2932 = vtanh.pop %v2925
    %v2934 = vrot.slane %v2840, 4
    %v2936 = vmul.f32 %v2931, %v2934
    %2938 = vrot.lane.b32.xlu0 %v2932, 64
    %v2939 = vpop.permute.xlu0 %2938
    %v2941 = vmul.f32 %v2931, %v2939
    %2943 = vrot.lane.b32.xlu0 %v2941, 32
    %v2944 = vpop.permute.xlu0 %2943
    %v2946 = vadd.f32 %v2936, %v2944
    %v2947 = vtanh.pop %v2946
    %2949 = vrot.lane.b32.xlu0 %v2947, 64
    %v2950 = vpop.permute.xlu0 %2949
    %v2952 = vmul.f32 %v2931, %v2950
    %v2954 = vadd.f32 %v2216, %v2324
    %v2955 = vadd.f32 %v2954, %v2426
    %v2957 = vadd.f32 %v2955, %v2534
    %v2958 = vadd.f32 %v2957, %v2636
    %v2960 = vadd.f32 %v2958, %v2744
    %v2961 = vadd.f32 %v2960, %v2846
    %v2963 = vrot.slane %v2952, 4
    %v2965 = vadd.f32 %v2961, %v2963
    %v2966 = vmul.f32 %v2965, 0.125
    %v2967 = vld [vmem:[%s1] sm:$0xf]
    %v2968 = vld [vmem:[%s1 + $0x4] sm:$0xf]
    %v2969 = vld [vmem:[%s1 + $0x8] sm:$0xf]
    %v2970 = vld [vmem:[%s1 + $0xc] sm:$0xf]
    %v2971 = vld [vmem:[%s1 + $0x10] sm:$0xf]
    %v2972 = vld [vmem:[%s1 + $0x14] sm:$0xf]
    %v2973 = vld [vmem:[%s1 + $0x18] sm:$0xf]
    %v2974 = vld [vmem:[%s1 + $0x1c] sm:$0xf]
    %vm2975 = vcmask 257024
    %v2976 = vsel %vm2975, %v2967, 0.0
    %v2977 = vsel %vm2975, %v2968, 0.0
    %v2978 = vadd.f32 %v2976, %v2977
    %v2979 = vsel %vm2975, %v2969, 0.0
    %v2980 = vadd.f32 %v2978, %v2979
    %v2981 = vsel %vm2975, %v2970, 0.0
    %v2982 = vadd.f32 %v2980, %v2981
    %v2983 = vsel %vm2975, %v2971, 0.0
    %v2984 = vadd.f32 %v2982, %v2983
    %v2985 = vsel %vm2975, %v2972, 0.0
    %v2986 = vadd.f32 %v2984, %v2985
    %v2987 = vsel %vm2975, %v2973, 0.0
    %v2988 = vadd.f32 %v2986, %v2987
    %v2989 = vsel %vm2975, %v2974, 0.0
    %v2990 = vadd.f32 %v2988, %v2989
    %v2991 = vrcp.pop 8.0
    %v2992 = vmul.f32 %v2990, %v2991
    %2994 = vrot.lane.b32.xlu0 %v2966, 64
    %v2995 = vpop.permute.xlu0 %2994
    %v2997 = vsel %vm105, %v2992, %v2995
    %v2998 = vld [vmem:[%s5] sm:$0x1]
    %v2999 = vld [vmem:[%s5 + $0x1] sm:$0x1]
    %vm3000 = vcmask 519168
    %v3001 = vsel %vm3000, %v2997, 0.0
    %v3002 = vrot.slane %v3001, 4
    %v3003 = vadd.f32 %v3001, %v3002
    %v3004 = vrot.slane %v3003, 2
    %v3005 = vadd.f32 %v3003, %v3004
    %v3006 = vrot.slane %v3005, 1
    %v3007 = vadd.f32 %v3005, %v3006
    %v3008 = vrcp.pop 4.0
    %v3009 = vmul.f32 %v3007, %v3008
    %v3010 = vsub.f32 %v2997, %v3009
    %v3011 = vmul.f32 %v3010, %v3010
    %v3012 = vsel %vm3000, %v3011, 0.0
    %v3013 = vrot.slane %v3012, 4
    %v3014 = vadd.f32 %v3012, %v3013
    %v3015 = vrot.slane %v3014, 2
    %v3016 = vadd.f32 %v3014, %v3015
    %v3017 = vrot.slane %v3016, 1
    %v3018 = vadd.f32 %v3016, %v3017
    %v3019 = vmul.f32 %v3018, %v3008
    %v3020 = vadd.f32 %v3019, 1e-05
    %v3021 = vrsqrt.pop %v3020
    %v3022 = vmul.f32 %v3010, %v3021
    %v3023 = vlaneseq
    %v3024 = vshrl.u32 %v3023, 7
    %v3025 = vsub.s32 0, %v3024
    %v3026 = vrot.slane %v2998, %v3025
    %v3027 = vmul.f32 %v3022, %v3026
    %v3028 = vlaneseq
    %v3029 = vshrl.u32 %v3028, 7
    %v3030 = vsub.s32 0, %v3029
    %v3031 = vrot.slane %v2999, %v3030
    %v3032 = vadd.f32 %v3027, %v3031
    %vm3033 = vcmp.ge.f32.partialorder %v3032, 0.0
    %v3034 = vmul.f32 %v3032, 0.2
    %v3035 = vsel %vm3033, %v3032, %v3034
    %v3036 = vld [vmem:[%s6] sm:$0xff]
    %v3037 = vld [vmem:[%s6 + $0x8] sm:$0xff]
    %v3038 = vld [vmem:[%s6 + $0x10] sm:$0xff]
    %v3039 = vld [vmem:[%s6 + $0x18] sm:$0xff]
    %v3040 = vld [vmem:[%s6 + $0x20] sm:$0xff]
    %v3041 = vld [vmem:[%s6 + $0x28] sm:$0xff]
    %v3042 = vld [vmem:[%s6 + $0x30] sm:$0xff]
    %v3043 = vld [vmem:[%s6 + $0x38] sm:$0xff]
    %v3044 = vld [vmem:[%s7] sm:$0x1]
    %v3045 = vlaneseq
    %v3046 = vshrl.u32 %v3045, 7
    %v3047 = vsub.s32 0, %v3046
    %v3048 = vrot.slane %v3044, %v3047
    %vm3049 = vcmask 523264
    %v3051 = vsel %vm3049, %v3035, 0
    %3053 = vmatprep.subr.mxu0 0.0
    %3054 = vmatpush1.msra.mxu0 %v3036
    %3055 = vmatprep.subr.mxu0 0.0
    %3056 = vmatpush1.msra.mxu0 %v3037
    %3057 = vmatprep.subr.mxu0 0.0
    %3058 = vmatpush1.msra.mxu0 %v3038
    %3059 = vmatprep.subr.mxu0 0.0
    %3060 = vmatpush1.msra.mxu0 %v3039
    %3061 = vmatprep.subr.mxu0 0.0
    %3062 = vmatpush1.msra.mxu0 %v3040
    %3063 = vmatprep.subr.mxu0 0.0
    %3064 = vmatpush1.msra.mxu0 %v3041
    %3065 = vmatprep.subr.mxu0 0.0
    %3066 = vmatpush1.msra.mxu0 %v3042
    %3067 = vmatprep.subr.mxu0 0.0
    %3068 = vmatpush1.msra.mxu0 %v3043
    %3069 = vmatprep.subr.mxu0 0.0
    %3070 = vmatpush1.msra.mxu0 0.0
    %3071 = vmatprep.subr.mxu0 0.0
    %3072 = vmatpush1.msra.mxu0 0.0
    %3073 = vmatprep.subr.mxu0 0.0
    %3074 = vmatpush1.msra.mxu0 0.0
    %3075 = vmatprep.subr.mxu0 0.0
    %3076 = vmatpush1.msra.mxu0 0.0
    %3077 = vmatprep.subr.mxu0 0.0
    %3078 = vmatpush1.msra.mxu0 0.0
    %3079 = vmatprep.subr.mxu0 0.0
    %3080 = vmatpush1.msra.mxu0 0.0
    %3081 = vmatprep.subr.mxu0 0.0
    %3082 = vmatpush1.msra.mxu0 0.0
    %3083 = vmatprep.subr.mxu0 0.0
    %3084 = vmatpush1.msra.mxu0 0.0
    %3085 = vmatprep.subr.mxu0 0.0
    %3086 = vmatpush1.msra.mxu0 0.0
    %3087 = vmatprep.subr.mxu0 0.0
    %3088 = vmatpush1.msra.mxu0 0.0
    %3089 = vmatprep.subr.mxu0 0.0
    %3090 = vmatpush1.msra.mxu0 0.0
    %3091 = vmatprep.subr.mxu0 0.0
    %3092 = vmatpush1.msra.mxu0 0.0
    %3093 = vmatprep.subr.mxu0 0.0
    %3094 = vmatpush1.msra.mxu0 0.0
    %3095 = vmatprep.subr.mxu0 0.0
    %3096 = vmatpush1.msra.mxu0 0.0
    %3097 = vmatprep.subr.mxu0 0.0
    %3098 = vmatpush1.msra.mxu0 0.0
    %3099 = vmatprep.subr.mxu0 0.0
    %3100 = vmatpush1.msra.mxu0 0.0
    %3101 = vmatprep.subr.mxu0 0.0
    %3102 = vmatpush1.msra.mxu0 0.0
    %3103 = vmatprep.subr.mxu0 0.0
    %3104 = vmatpush1.msra.mxu0 0.0
    %3105 = vmatprep.subr.mxu0 0.0
    %3106 = vmatpush1.msra.mxu0 0.0
    %3107 = vmatprep.subr.mxu0 0.0
    %3108 = vmatpush1.msra.mxu0 0.0
    %3109 = vmatprep.subr.mxu0 0.0
    %3110 = vmatpush1.msra.mxu0 0.0
    %3111 = vmatprep.subr.mxu0 0.0
    %3112 = vmatpush1.msra.mxu0 0.0
    %3113 = vmatprep.subr.mxu0 0.0
    %3114 = vmatpush1.msra.mxu0 0.0
    %3115 = vmatprep.subr.mxu0 0.0
    %3116 = vmatpush1.msra.mxu0 0.0
    %3117 = vmatprep.mubr.f32.mxu0 0.0
    %3118 = vmatmul.mubr.f32.gmra.mrb[0].mxu0 %v3051
    %v3119 = vpop.f32.mrb[0].mxu0
    %v3120 = vadd.f32 %v3048, %v3119
    %v3121 = vpop.f32.mrb[0].mxu0
    %3122 = vdwg.mxu0
    %v3123 = vld [vmem:[%s7 + $0x1] sm:$0x1]
    %v3124 = vld [vmem:[%s7 + $0x2] sm:$0x1]
    %vm3125 = vcmask 125952
    %v3126 = vsel %vm3125, %v3120, 0.0
    %v3127 = vrot.slane %v3126, 4
    %v3128 = vadd.f32 %v3126, %v3127
    %v3129 = vrot.slane %v3128, 2
    %v3130 = vadd.f32 %v3128, %v3129
    %v3131 = vrot.slane %v3130, 1
    %v3132 = vadd.f32 %v3130, %v3131
    %v3133 = vmul.f32 %v3132, %v3008
    %v3134 = vsub.f32 %v3120, %v3133
    %v3135 = vmul.f32 %v3134, %v3134
    %v3136 = vsel %vm3125, %v3135, 0.0
    %v3137 = vrot.slane %v3136, 4
    %v3138 = vadd.f32 %v3136, %v3137
    %v3139 = vrot.slane %v3138, 2
    %v3140 = vadd.f32 %v3138, %v3139
    %v3141 = vrot.slane %v3140, 1
    %v3142 = vadd.f32 %v3140, %v3141
    %v3143 = vmul.f32 %v3142, %v3008
    %v3144 = vadd.f32 %v3143, 1e-05
    %v3145 = vrsqrt.pop %v3144
    %v3146 = vmul.f32 %v3134, %v3145
    %v3147 = vlaneseq
    %v3148 = vshrl.u32 %v3147, 7
    %v3149 = vsub.s32 0, %v3148
    %v3150 = vrot.slane %v3123, %v3149
    %v3151 = vmul.f32 %v3146, %v3150
    %v3152 = vlaneseq
    %v3153 = vshrl.u32 %v3152, 7
    %v3154 = vsub.s32 0, %v3153
    %v3155 = vrot.slane %v3124, %v3154
    %v3156 = vadd.f32 %v3151, %v3155
    %3158 = vrot.lane.b32.xlu0 %v3156, 64
    %v3159 = vpop.permute.xlu0 %3158
    %v3161 = vsel %vm3049, %v3035, %v3159
    %vm3162 = vcmask 654336
    %v3163 = vsel %vm3162, %v3161, 0.0
    %3164 = vst [vmem:[#allocation7] sm:$0xf] %v3163
    // Predicated region
    $region42: #{tpu_custom_call.1} parent=1 // pred_check
      _
    $region43: #{tpu_custom_call.1} parent=1 // pred_check_branch
      %3166 = sbr.rel (0) target = $region45
    $region44: #{tpu_custom_call.1} parent=1 // pred_region
      %s3168 = ssub.s32 64, 64
      %3169 = vsyncadd [#allocation4], %s3168
      %s3171 = sshll.u32 [#allocation7], 4
      %s3172 = int_to_ptr.vmem [resolvable:$true] %s3171
      %3174 = dma.vmem_to_hbm [thread:$0]  %s3172, 64, %s8, [#allocation4]
    $region45: #{tpu_custom_call.1} parent=1 // pred_fallthru
      _
    // Predicated region
    $region46: #{tpu_custom_call.1} parent=1 // pred_check
      _
    $region47: #{tpu_custom_call.1} parent=1 // pred_check_branch
      %3176 = sbr.rel (0) target = $region49
    $region48: #{tpu_custom_call.1} parent=1 // pred_region
      %3177 = dma.done [#allocation4], 64
    $region49: #{tpu_custom_call.1} parent=1 // pred_fallthru
      _
    %3178 = vsyncpa [#allocation3], 1
    %3179 = vsyncpa [#allocation6], 1
    %3180 = vsyncpa [#allocation4], 1

</llo_original>
